<compile_context>
chip_gen: v5e
topology: v5e:2x2
jax: 0.10.0
libtpu: 0.0.40
codegen_flags: <defaults>
</compile_context>

<pallas_src>
import functools

import jax
import jax.numpy as jnp
from jax.experimental import pallas as pl
from jax.experimental.pallas import tpu as pltpu

_BN_EPS = 1e-5


def _round_up(v, m):
    return (v + m - 1) // m * m


# ----------------------------------------------------------------------------
# Fused BasicBlock kernel (NB images per grid step)
# ----------------------------------------------------------------------------
def _basic_block_kernel(x_ref, w1_ref, b1_ref, w2_ref, b2_ref, *rest,
                        stride, Ho, Wo, NB, has_sc):
    """relu( bn2(conv2( relu(bn1(conv1(x))) )) + shortcut(x) ) for NB images.

    x_ref  : (s*s, NB, Hph, Wph, Cin_p)  bf16  space-to-depth phases of padded x
    w1_ref : (9, Cin_p, Cout_p)          bf16  conv1 weights, bn1 scale folded in
    b1_ref : (1, Cout_p)                 f32   folded bn1 bias
    w2_ref : (9, Cout_p, Cout_p)         bf16  conv2 weights, bn2 scale folded in
    b2_ref : (1, Cout_p)                 f32   folded bn2 bias
    [wsc_ref (Cin_p, Cout_p) bf16, bsc_ref (1, Cout_p) f32]  -- conv shortcut only
    o_ref  : (NB, Ho, Wo, Cout_p)        bf16
    hpad   : (NB, Ho+2, Wo+2, Cout_p)    bf16  VMEM scratch: conv1 out + zero halo
    """
    if has_sc:
        wsc_ref, bsc_ref, o_ref, hpad_ref = rest
    else:
        o_ref, hpad_ref = rest

    s = stride
    cin = x_ref.shape[-1]
    cout = o_ref.shape[-1]
    m2 = NB * Ho * Wo

    # Zero the halo scratch once; the interior is fully rewritten every step
    # and only the 1-wide ring needs to be zero.
    @pl.when(pl.program_id(0) == 0)
    def _():
        hpad_ref[...] = jnp.zeros_like(hpad_ref)

    # ---- conv1 (3x3, stride s) + folded bn1 + relu : 9 shifted MXU matmuls ----
    acc = None
    for di in range(3):
        for dj in range(3):
            ph = (di % s) * s + (dj % s)
            r0, c0 = di // s, dj // s
            xs = x_ref[ph, :, r0:r0 + Ho, c0:c0 + Wo, :].reshape(m2, cin)
            d = jnp.dot(xs, w1_ref[di * 3 + dj],
                        preferred_element_type=jnp.float32)
            acc = d if acc is None else acc + d
    h = jnp.maximum(acc + b1_ref[...], 0.0)

    # Store h (bf16) into the zero-haloed VMEM scratch -> conv2 padding is implicit.
    hpad_ref[:, 1:1 + Ho, 1:1 + Wo, :] = (
        h.reshape(NB, Ho, Wo, cout).astype(hpad_ref.dtype))

    # ---- shortcut branch ----
    if has_sc:
        phs = (1 % s) * s + (1 % s)
        o0 = 1 // s
        xs = x_ref[phs, :, o0:o0 + Ho, o0:o0 + Wo, :].reshape(m2, cin)
        res = jnp.dot(xs, wsc_ref[...], preferred_element_type=jnp.float32)
        res = res + bsc_ref[...]
    else:
        # identity shortcut (stride == 1, Cin_p == Cout_p): x at output resolution
        res = x_ref[0, :, 1:1 + Ho, 1:1 + Wo, :].reshape(m2, cin).astype(jnp.float32)

    # ---- conv2 (3x3, stride 1) + folded bn2 + residual + relu ----
    acc2 = res
    for di in range(3):
        for dj in range(3):
            hs = hpad_ref[:, di:di + Ho, dj:dj + Wo, :].reshape(m2, cout)
            acc2 = acc2 + jnp.dot(hs, w2_ref[di * 3 + dj],
                                  preferred_element_type=jnp.float32)
    out = jnp.maximum(acc2 + b2_ref[...], 0.0)
    o_ref[...] = out.reshape(NB, Ho, Wo, cout).astype(o_ref.dtype)


# ----------------------------------------------------------------------------
# Host-side glue: phase repack, BN folding, weight padding
# ----------------------------------------------------------------------------
def _make_phase_stack(x_nhwc, stride, ho, wo, cin_p):
    """Pad (spatial pad=1, channels -> cin_p), cast bf16, and (stride>1 only)
    repack into stride*stride space-to-depth phases so every in-kernel tap
    slice is contiguous.  Element count equals the padded input (no im2col).
    Layout: (s*s, N, Hph, Wph, Cin_p)."""
    n, _, _, c = x_nhwc.shape
    s = stride
    xp = jnp.pad(x_nhwc, ((0, 0), (1, 1), (1, 1), (0, cin_p - c))
                 ).astype(jnp.bfloat16)
    if s == 1:
        return xp[None]                                     # (1, N, H+2, W+2, Cin_p)
    ext = -(-2 // s)                                        # ceil(2 / s)
    hph, wph = ho + ext, wo + ext
    phases = []
    for a in range(s):
        for b in range(s):
            phv = xp[:, a::s, b::s, :][:, :hph, :wph, :]
            phv = jnp.pad(phv, ((0, 0), (0, hph - phv.shape[1]),
                                (0, wph - phv.shape[2]), (0, 0)))
            phases.append(phv)
    return jnp.stack(phases, axis=0)                        # (s*s, N, hph, wph, Cin_p)


def _fold_bn(bn):
    gamma, beta, mean, var = bn
    scale = gamma / jnp.sqrt(var + _BN_EPS)
    return scale, beta - mean * scale


def _prep_conv(w, scale, cin_p, cout_p):
    """HWIO (kh, kw, cin, cout) -> (kh*kw, cin_p, cout_p) bf16 with the BN
    scale folded into output channels and zero padding to the padded sizes."""
    kh, kw, cin, cout = w.shape
    wf = w * scale[None, None, None, :]
    wf = jnp.pad(wf, ((0, 0), (0, 0), (0, cin_p - cin), (0, cout_p - cout)))
    return wf.reshape(kh * kw, cin_p, cout_p).astype(jnp.bfloat16)


def _prep_bias(b, cout_p):
    return jnp.pad(b, (0, cout_p - b.shape[0])).reshape(1, cout_p).astype(jnp.float32)


def _vmem_limit_bytes():
    """Generation-gated scoped-VMEM budget: 3/4 of physical VMEM (96 MiB on
    v5e/v6e, 48 MiB on v7x).  Falls back to the compiler default if the query
    is unavailable."""
    try:
        cap = pltpu.get_tpu_info().vmem_capacity_bytes
        return int(cap * 3 // 4)
    except Exception:
        return None


def _pick_nb(n, s, hph, wph, cin_p, ho, wo, cout_p):
    """Images per grid step: grow M = NB*Ho*Wo toward >=512 MXU rows while
    keeping the per-step activation VMEM footprint bounded."""
    nb = max(1, -(-512 // max(ho * wo, 1)))
    per_img = (2 * s * s * hph * wph * cin_p * 2          # double-buffered input
               + 2 * ho * wo * cout_p * 2                 # double-buffered output
               + (ho + 2) * (wo + 2) * cout_p * 2         # hpad scratch
               + 2 * ho * wo * cout_p * 4)                # f32 accumulator temps
    nb = min(nb, max(1, (24 * 1024 * 1024) // max(per_img, 1)))
    nb = min(nb, n, 16)
    while n % nb:
        nb -= 1
    return nb


# ----------------------------------------------------------------------------
# BasicBlock forward (NCHW in / NCHW out, like the torch module)
# ----------------------------------------------------------------------------
def basic_block_forward(params, x_nchw):
    n, cin, h, w = x_nchw.shape
    planes = params['planes']
    s = params['stride']
    has_sc = 'sc_w' in params
    assert has_sc or (s == 1 and cin == planes)

    ho = (h + 2 - 3) // s + 1
    wo = (w + 2 - 3) // s + 1
    cout_p = _round_up(planes, 128)                       # lane-dense output stores
    cin_p = cout_p if not has_sc else _round_up(cin, 8)   # identity needs cin_p==cout_p

    x = jnp.transpose(x_nchw, (0, 2, 3, 1))               # NHWC internally
    xph = _make_phase_stack(x, s, ho, wo, cin_p)
    _, _, hph, wph, _ = xph.shape

    nb = _pick_nb(n, s, hph, wph, cin_p, ho, wo, cout_p)

    sc1, bi1 = _fold_bn(params['bn1'])
    sc2, bi2 = _fold_bn(params['bn2'])
    w1 = _prep_conv(params['conv1_w'], sc1, cin_p, cout_p)
    w2 = _prep_conv(params['conv2_w'], sc2, cout_p, cout_p)
    b1 = _prep_bias(bi1, cout_p)
    b2 = _prep_bias(bi2, cout_p)

    args = [xph, w1, b1, w2, b2]
    in_specs = [
        pl.BlockSpec((s * s, nb, hph, wph, cin_p), lambda i: (0, i, 0, 0, 0)),
        pl.BlockSpec((9, cin_p, cout_p), lambda i: (0, 0, 0)),
        pl.BlockSpec((1, cout_p), lambda i: (0, 0)),
        pl.BlockSpec((9, cout_p, cout_p), lambda i: (0, 0, 0)),
        pl.BlockSpec((1, cout_p), lambda i: (0, 0)),
    ]
    if has_sc:
        scs, bisc = _fold_bn(params['bn_sc'])
        wsc = params['sc_w'][0, 0] * scs[None, :]
        wsc = jnp.pad(wsc, ((0, cin_p - cin), (0, cout_p - planes))).astype(jnp.bfloat16)
        args += [wsc, _prep_bias(bisc, cout_p)]
        in_specs += [pl.BlockSpec((cin_p, cout_p), lambda i: (0, 0)),
                     pl.BlockSpec((1, cout_p), lambda i: (0, 0))]

    cp_kwargs = dict(dimension_semantics=("parallel",))
    vl = _vmem_limit_bytes()
    if vl is not None:
        cp_kwargs["vmem_limit_bytes"] = vl

    kernel = functools.partial(_basic_block_kernel, stride=s, Ho=ho, Wo=wo,
                               NB=nb, has_sc=has_sc)
    out = pl.pallas_call(
        kernel,
        out_shape=jax.ShapeDtypeStruct((n, ho, wo, cout_p), jnp.bfloat16),
        grid=(n // nb,),
        in_specs=in_specs,
        out_specs=pl.BlockSpec((nb, ho, wo, cout_p), lambda i: (i, 0, 0, 0)),
        scratch_shapes=[pltpu.VMEM((nb, ho + 2, wo + 2, cout_p), jnp.bfloat16)],
        compiler_params=pltpu.CompilerParams(**cp_kwargs),
    )(*args)

    out = out[..., :planes]                                # drop lane padding
    return jnp.transpose(out, (0, 3, 1, 2)).astype(jnp.float32)   # NCHW f32


# ----------------------------------------------------------------------------
# Deterministic parameter init (shapes match the torch module; weights in HWIO)
# ----------------------------------------------------------------------------
def _init_conv(key, kh, kw, cin, cout):
    std = (2.0 / (kh * kw * cin)) ** 0.5
    return std * jax.random.normal(key, (kh, kw, cin, cout), jnp.float32)


def _init_bn(key, c):
    k1, k2 = jax.random.split(key)
    gamma = 1.0 + 0.1 * jax.random.normal(k1, (c,), jnp.float32)
    beta = 0.1 * jax.random.normal(k2, (c,), jnp.float32)
    return gamma, beta, jnp.zeros((c,), jnp.float32), jnp.ones((c,), jnp.float32)


def init_basic_block_params(key, in_planes, planes, stride):
    ks = jax.random.split(key, 6)
    p = {'stride': stride, 'in_planes': in_planes, 'planes': planes,
         'conv1_w': _init_conv(ks[0], 3, 3, in_planes, planes),
         'conv2_w': _init_conv(ks[1], 3, 3, planes, planes),
         'bn1': _init_bn(ks[2], planes),
         'bn2': _init_bn(ks[3], planes)}
    if stride != 1 or in_planes != planes:
        p['sc_w'] = _init_conv(ks[4], 1, 1, in_planes, planes)
        p['bn_sc'] = _init_bn(ks[5], planes)
    return p


# ----------------------------------------------------------------------------
# Plain-JAX reference (same bf16 operand precision as the kernel)
# ----------------------------------------------------------------------------
def basic_block_reference(params, x_nchw):
    bf = lambda a: a.astype(jnp.bfloat16).astype(jnp.float32)

    def conv(x, w, stride, pad):
        return jax.lax.conv_general_dilated(
            x, w, window_strides=(stride, stride),
            padding=[(pad, pad), (pad, pad)],
            dimension_numbers=('NHWC', 'HWIO', 'NHWC'))

    def folded(w, bn):
        scale, bias = _fold_bn(bn)
        return bf(w * scale[None, None, None, :]), bias

    s = params['stride']
    x = bf(jnp.transpose(x_nchw, (0, 2, 3, 1)))
    w1, b1 = folded(params['conv1_w'], params['bn1'])
    w2, b2 = folded(params['conv2_w'], params['bn2'])
    h = bf(jax.nn.relu(conv(x, w1, s, 1) + b1))
    out = conv(h, w2, 1, 1) + b2
    if 'sc_w' in params:
        wsc, bsc = folded(params['sc_w'], params['bn_sc'])
        res = conv(x, wsc, s, 0) + bsc
    else:
        res = x
    out = jax.nn.relu(out + res)
    return jnp.transpose(out, (0, 3, 1, 2))


if __name__ == "__main__":
    key = jax.random.PRNGKey(0)
    k1, k2, k3, k4 = jax.random.split(key, 4)

    # Config A: downsampling block (conv shortcut): in_planes=32, planes=64, stride=2.
    pA = init_basic_block_params(k1, in_planes=32, planes=64, stride=2)
    xA = jax.random.normal(k2, (2, 32, 16, 16), jnp.float32)   # NCHW, like torch
    yA = basic_block_forward(pA, xA)
    jax.block_until_ready(yA)
    assert yA.shape == (2, 64, 8, 8), yA.shape
    rA = basic_block_reference(pA, xA)
    assert bool(jnp.allclose(yA, rA, rtol=5e-2, atol=5e-2)), \
        float(jnp.max(jnp.abs(yA - rA)))

    # Config B: identity-shortcut block: in_planes=planes=64, stride=1.
    pB = init_basic_block_params(k3, in_planes=64, planes=64, stride=1)
    xB = jax.random.normal(k4, (2, 64, 16, 16), jnp.float32)
    yB = basic_block_forward(pB, xB)
    jax.block_until_ready(yB)
    assert yB.shape == (2, 64, 16, 16), yB.shape
    rB = basic_block_reference(pB, xB)
    assert bool(jnp.allclose(yB, rB, rtol=5e-2, atol=5e-2)), \
        float(jnp.max(jnp.abs(yB - rB)))

    assert bool(jnp.all(jnp.isfinite(yA))) and bool(jnp.all(jnp.isfinite(yB)))
    print("KERNEL_OK")
</pallas_src>

<mosaic_0001>
module attributes {stable_mosaic.version = 11 : i64} {
  func.func @_basic_block_kernel(%arg0: i32, %arg1: memref<4x2x9x9x32xbf16, #tpu.memory_space<vmem>>, %arg2: memref<9x32x128xbf16, #tpu.memory_space<vmem>>, %arg3: memref<1x128xf32, #tpu.memory_space<vmem>>, %arg4: memref<9x128x128xbf16, #tpu.memory_space<vmem>>, %arg5: memref<1x128xf32, #tpu.memory_space<vmem>>, %arg6: memref<32x128xbf16, #tpu.memory_space<vmem>>, %arg7: memref<1x128xf32, #tpu.memory_space<vmem>>, %arg8: memref<2x8x8x128xbf16, #tpu.memory_space<vmem>>, %arg9: memref<2x10x10x128xbf16, #tpu.memory_space<vmem>>) attributes {dimension_semantics = [#tpu.dimension_semantics<parallel>], iteration_bounds = array<i64: 1>, scalar_prefetch = 0 : i64, scratch_operands = 1 : i64, tpu.core_type = #tpu.core_type<tc>, window_params = [{transform_indices = @transform_0, window_bounds = array<i64: 4, 2, 9, 9, 32>}, {pipeline_mode = #tpu.pipeline_mode<synchronous>, transform_indices = @transform_1, window_bounds = array<i64: 9, 32, 128>}, {pipeline_mode = #tpu.pipeline_mode<synchronous>, transform_indices = @transform_2, window_bounds = array<i64: 1, 128>}, {pipeline_mode = #tpu.pipeline_mode<synchronous>, transform_indices = @transform_3, window_bounds = array<i64: 9, 128, 128>}, {pipeline_mode = #tpu.pipeline_mode<synchronous>, transform_indices = @transform_4, window_bounds = array<i64: 1, 128>}, {pipeline_mode = #tpu.pipeline_mode<synchronous>, transform_indices = @transform_5, window_bounds = array<i64: 32, 128>}, {pipeline_mode = #tpu.pipeline_mode<synchronous>, transform_indices = @transform_6, window_bounds = array<i64: 1, 128>}, {transform_indices = @transform_7, window_bounds = array<i64: 2, 8, 8, 128>}]} {
    %c0_i32 = arith.constant 0 : i32
    %0 = arith.cmpi eq, %arg0, %c0_i32 : i32
    %1 = arith.extui %0 : i1 to i32
    %c0_i32_0 = arith.constant 0 : i32
    %2 = arith.cmpi ne, %1, %c0_i32_0 : i32
    scf.if %2 {
      %cst_168 = arith.constant 0.000000e+00 : bf16
      %143 = vector.broadcast %cst_168 : bf16 to vector<2x10x10x128xbf16>
      %c0_169 = arith.constant 0 : index
      %c0_170 = arith.constant 0 : index
      %c0_171 = arith.constant 0 : index
      %c0_172 = arith.constant 0 : index
      %144 = vector.load %arg9[%c0_169, %c0_170, %c0_171, %c0_172] : memref<2x10x10x128xbf16, #tpu.memory_space<vmem>>, vector<2x10x10x128xbf16>
      tpu.vector_store %arg9[%c0_169, %c0_170, %c0_171, %c0_172], %143 {strides = array<i32>} : memref<2x10x10x128xbf16, #tpu.memory_space<vmem>>, vector<2x10x10x128xbf16>,
    } else {
    }
    %c0 = arith.constant 0 : index
    %c0_1 = arith.constant 0 : index
    %c0_2 = arith.constant 0 : index
    %c0_3 = arith.constant 0 : index
    %c0_4 = arith.constant 0 : index
    %3 = vector.load %arg1[%c0, %c0_1, %c0_2, %c0_3, %c0_4] : memref<4x2x9x9x32xbf16, #tpu.memory_space<vmem>>, vector<1x2x8x8x32xbf16>
    %4 = vector.shape_cast %3 : vector<1x2x8x8x32xbf16> to vector<2x8x8x32xbf16>
    %5 = vector.shape_cast %4 : vector<2x8x8x32xbf16> to vector<128x32xbf16>
    %c0_5 = arith.constant 0 : index
    %c0_6 = arith.constant 0 : index
    %c0_7 = arith.constant 0 : index
    %6 = vector.load %arg2[%c0_5, %c0_6, %c0_7] : memref<9x32x128xbf16, #tpu.memory_space<vmem>>, vector<1x32x128xbf16>
    %7 = vector.shape_cast %6 : vector<1x32x128xbf16> to vector<32x128xbf16>
    %cst = arith.constant dense<0.000000e+00> : vector<128x128xf32>
    %8 = tpu.matmul %5, %7, %cst {dimension_numbers = #tpu.dot_dimension_numbers<[1], [0], [0], [1], [0, 0, 1, 1], [], []>} : vector<128x32xbf16>, vector<32x128xbf16>, vector<128x128xf32> -> vector<128x128xf32>
    %c1 = arith.constant 1 : index
    %c0_8 = arith.constant 0 : index
    %c0_9 = arith.constant 0 : index
    %c0_10 = arith.constant 0 : index
    %c0_11 = arith.constant 0 : index
    %9 = vector.load %arg1[%c1, %c0_8, %c0_9, %c0_10, %c0_11] : memref<4x2x9x9x32xbf16, #tpu.memory_space<vmem>>, vector<1x2x8x8x32xbf16>
    %10 = vector.shape_cast %9 : vector<1x2x8x8x32xbf16> to vector<2x8x8x32xbf16>
    %11 = vector.shape_cast %10 : vector<2x8x8x32xbf16> to vector<128x32xbf16>
    %c1_12 = arith.constant 1 : index
    %c0_13 = arith.constant 0 : index
    %c0_14 = arith.constant 0 : index
    %12 = vector.load %arg2[%c1_12, %c0_13, %c0_14] : memref<9x32x128xbf16, #tpu.memory_space<vmem>>, vector<1x32x128xbf16>
    %13 = vector.shape_cast %12 : vector<1x32x128xbf16> to vector<32x128xbf16>
    %cst_15 = arith.constant dense<0.000000e+00> : vector<128x128xf32>
    %14 = tpu.matmul %11, %13, %cst_15 {dimension_numbers = #tpu.dot_dimension_numbers<[1], [0], [0], [1], [0, 0, 1, 1], [], []>} : vector<128x32xbf16>, vector<32x128xbf16>, vector<128x128xf32> -> vector<128x128xf32>
    %15 = arith.addf %8, %14 : vector<128x128xf32>
    %c0_16 = arith.constant 0 : index
    %c0_17 = arith.constant 0 : index
    %c0_18 = arith.constant 0 : index
    %c1_19 = arith.constant 1 : index
    %c0_20 = arith.constant 0 : index
    %16 = vector.load %arg1[%c0_16, %c0_17, %c0_18, %c1_19, %c0_20] : memref<4x2x9x9x32xbf16, #tpu.memory_space<vmem>>, vector<1x2x8x8x32xbf16>
    %17 = vector.shape_cast %16 : vector<1x2x8x8x32xbf16> to vector<2x8x8x32xbf16>
    %18 = vector.shape_cast %17 : vector<2x8x8x32xbf16> to vector<128x32xbf16>
    %c2 = arith.constant 2 : index
    %c0_21 = arith.constant 0 : index
    %c0_22 = arith.constant 0 : index
    %19 = vector.load %arg2[%c2, %c0_21, %c0_22] : memref<9x32x128xbf16, #tpu.memory_space<vmem>>, vector<1x32x128xbf16>
    %20 = vector.shape_cast %19 : vector<1x32x128xbf16> to vector<32x128xbf16>
    %cst_23 = arith.constant dense<0.000000e+00> : vector<128x128xf32>
    %21 = tpu.matmul %18, %20, %cst_23 {dimension_numbers = #tpu.dot_dimension_numbers<[1], [0], [0], [1], [0, 0, 1, 1], [], []>} : vector<128x32xbf16>, vector<32x128xbf16>, vector<128x128xf32> -> vector<128x128xf32>
    %22 = arith.addf %15, %21 : vector<128x128xf32>
    %c2_24 = arith.constant 2 : index
    %c0_25 = arith.constant 0 : index
    %c0_26 = arith.constant 0 : index
    %c0_27 = arith.constant 0 : index
    %c0_28 = arith.constant 0 : index
    %23 = vector.load %arg1[%c2_24, %c0_25, %c0_26, %c0_27, %c0_28] : memref<4x2x9x9x32xbf16, #tpu.memory_space<vmem>>, vector<1x2x8x8x32xbf16>
    %24 = vector.shape_cast %23 : vector<1x2x8x8x32xbf16> to vector<2x8x8x32xbf16>
    %25 = vector.shape_cast %24 : vector<2x8x8x32xbf16> to vector<128x32xbf16>
    %c3 = arith.constant 3 : index
    %c0_29 = arith.constant 0 : index
    %c0_30 = arith.constant 0 : index
    %26 = vector.load %arg2[%c3, %c0_29, %c0_30] : memref<9x32x128xbf16, #tpu.memory_space<vmem>>, vector<1x32x128xbf16>
    %27 = vector.shape_cast %26 : vector<1x32x128xbf16> to vector<32x128xbf16>
    %cst_31 = arith.constant dense<0.000000e+00> : vector<128x128xf32>
    %28 = tpu.matmul %25, %27, %cst_31 {dimension_numbers = #tpu.dot_dimension_numbers<[1], [0], [0], [1], [0, 0, 1, 1], [], []>} : vector<128x32xbf16>, vector<32x128xbf16>, vector<128x128xf32> -> vector<128x128xf32>
    %29 = arith.addf %22, %28 : vector<128x128xf32>
    %c3_32 = arith.constant 3 : index
    %c0_33 = arith.constant 0 : index
    %c0_34 = arith.constant 0 : index
    %c0_35 = arith.constant 0 : index
    %c0_36 = arith.constant 0 : index
    %30 = vector.load %arg1[%c3_32, %c0_33, %c0_34, %c0_35, %c0_36] : memref<4x2x9x9x32xbf16, #tpu.memory_space<vmem>>, vector<1x2x8x8x32xbf16>
    %31 = vector.shape_cast %30 : vector<1x2x8x8x32xbf16> to vector<2x8x8x32xbf16>
    %32 = vector.shape_cast %31 : vector<2x8x8x32xbf16> to vector<128x32xbf16>
    %c4 = arith.constant 4 : index
    %c0_37 = arith.constant 0 : index
    %c0_38 = arith.constant 0 : index
    %33 = vector.load %arg2[%c4, %c0_37, %c0_38] : memref<9x32x128xbf16, #tpu.memory_space<vmem>>, vector<1x32x128xbf16>
    %34 = vector.shape_cast %33 : vector<1x32x128xbf16> to vector<32x128xbf16>
    %cst_39 = arith.constant dense<0.000000e+00> : vector<128x128xf32>
    %35 = tpu.matmul %32, %34, %cst_39 {dimension_numbers = #tpu.dot_dimension_numbers<[1], [0], [0], [1], [0, 0, 1, 1], [], []>} : vector<128x32xbf16>, vector<32x128xbf16>, vector<128x128xf32> -> vector<128x128xf32>
    %36 = arith.addf %29, %35 : vector<128x128xf32>
    %c2_40 = arith.constant 2 : index
    %c0_41 = arith.constant 0 : index
    %c0_42 = arith.constant 0 : index
    %c1_43 = arith.constant 1 : index
    %c0_44 = arith.constant 0 : index
    %37 = vector.load %arg1[%c2_40, %c0_41, %c0_42, %c1_43, %c0_44] : memref<4x2x9x9x32xbf16, #tpu.memory_space<vmem>>, vector<1x2x8x8x32xbf16>
    %38 = vector.shape_cast %37 : vector<1x2x8x8x32xbf16> to vector<2x8x8x32xbf16>
    %39 = vector.shape_cast %38 : vector<2x8x8x32xbf16> to vector<128x32xbf16>
    %c5 = arith.constant 5 : index
    %c0_45 = arith.constant 0 : index
    %c0_46 = arith.constant 0 : index
    %40 = vector.load %arg2[%c5, %c0_45, %c0_46] : memref<9x32x128xbf16, #tpu.memory_space<vmem>>, vector<1x32x128xbf16>
    %41 = vector.shape_cast %40 : vector<1x32x128xbf16> to vector<32x128xbf16>
    %cst_47 = arith.constant dense<0.000000e+00> : vector<128x128xf32>
    %42 = tpu.matmul %39, %41, %cst_47 {dimension_numbers = #tpu.dot_dimension_numbers<[1], [0], [0], [1], [0, 0, 1, 1], [], []>} : vector<128x32xbf16>, vector<32x128xbf16>, vector<128x128xf32> -> vector<128x128xf32>
    %43 = arith.addf %36, %42 : vector<128x128xf32>
    %c0_48 = arith.constant 0 : index
    %c0_49 = arith.constant 0 : index
    %c1_50 = arith.constant 1 : index
    %c0_51 = arith.constant 0 : index
    %c0_52 = arith.constant 0 : index
    %44 = vector.load %arg1[%c0_48, %c0_49, %c1_50, %c0_51, %c0_52] : memref<4x2x9x9x32xbf16, #tpu.memory_space<vmem>>, vector<1x2x8x8x32xbf16>
    %45 = vector.shape_cast %44 : vector<1x2x8x8x32xbf16> to vector<2x8x8x32xbf16>
    %46 = vector.shape_cast %45 : vector<2x8x8x32xbf16> to vector<128x32xbf16>
    %c6 = arith.constant 6 : index
    %c0_53 = arith.constant 0 : index
    %c0_54 = arith.constant 0 : index
    %47 = vector.load %arg2[%c6, %c0_53, %c0_54] : memref<9x32x128xbf16, #tpu.memory_space<vmem>>, vector<1x32x128xbf16>
    %48 = vector.shape_cast %47 : vector<1x32x128xbf16> to vector<32x128xbf16>
    %cst_55 = arith.constant dense<0.000000e+00> : vector<128x128xf32>
    %49 = tpu.matmul %46, %48, %cst_55 {dimension_numbers = #tpu.dot_dimension_numbers<[1], [0], [0], [1], [0, 0, 1, 1], [], []>} : vector<128x32xbf16>, vector<32x128xbf16>, vector<128x128xf32> -> vector<128x128xf32>
    %50 = arith.addf %43, %49 : vector<128x128xf32>
    %c1_56 = arith.constant 1 : index
    %c0_57 = arith.constant 0 : index
    %c1_58 = arith.constant 1 : index
    %c0_59 = arith.constant 0 : index
    %c0_60 = arith.constant 0 : index
    %51 = vector.load %arg1[%c1_56, %c0_57, %c1_58, %c0_59, %c0_60] : memref<4x2x9x9x32xbf16, #tpu.memory_space<vmem>>, vector<1x2x8x8x32xbf16>
    %52 = vector.shape_cast %51 : vector<1x2x8x8x32xbf16> to vector<2x8x8x32xbf16>
    %53 = vector.shape_cast %52 : vector<2x8x8x32xbf16> to vector<128x32xbf16>
    %c7 = arith.constant 7 : index
    %c0_61 = arith.constant 0 : index
    %c0_62 = arith.constant 0 : index
    %54 = vector.load %arg2[%c7, %c0_61, %c0_62] : memref<9x32x128xbf16, #tpu.memory_space<vmem>>, vector<1x32x128xbf16>
    %55 = vector.shape_cast %54 : vector<1x32x128xbf16> to vector<32x128xbf16>
    %cst_63 = arith.constant dense<0.000000e+00> : vector<128x128xf32>
    %56 = tpu.matmul %53, %55, %cst_63 {dimension_numbers = #tpu.dot_dimension_numbers<[1], [0], [0], [1], [0, 0, 1, 1], [], []>} : vector<128x32xbf16>, vector<32x128xbf16>, vector<128x128xf32> -> vector<128x128xf32>
    %57 = arith.addf %50, %56 : vector<128x128xf32>
    %c0_64 = arith.constant 0 : index
    %c0_65 = arith.constant 0 : index
    %c1_66 = arith.constant 1 : index
    %c1_67 = arith.constant 1 : index
    %c0_68 = arith.constant 0 : index
    %58 = vector.load %arg1[%c0_64, %c0_65, %c1_66, %c1_67, %c0_68] : memref<4x2x9x9x32xbf16, #tpu.memory_space<vmem>>, vector<1x2x8x8x32xbf16>
    %59 = vector.shape_cast %58 : vector<1x2x8x8x32xbf16> to vector<2x8x8x32xbf16>
    %60 = vector.shape_cast %59 : vector<2x8x8x32xbf16> to vector<128x32xbf16>
    %c8 = arith.constant 8 : index
    %c0_69 = arith.constant 0 : index
    %c0_70 = arith.constant 0 : index
    %61 = vector.load %arg2[%c8, %c0_69, %c0_70] : memref<9x32x128xbf16, #tpu.memory_space<vmem>>, vector<1x32x128xbf16>
    %62 = vector.shape_cast %61 : vector<1x32x128xbf16> to vector<32x128xbf16>
    %cst_71 = arith.constant dense<0.000000e+00> : vector<128x128xf32>
    %63 = tpu.matmul %60, %62, %cst_71 {dimension_numbers = #tpu.dot_dimension_numbers<[1], [0], [0], [1], [0, 0, 1, 1], [], []>} : vector<128x32xbf16>, vector<32x128xbf16>, vector<128x128xf32> -> vector<128x128xf32>
    %64 = arith.addf %57, %63 : vector<128x128xf32>
    %c0_72 = arith.constant 0 : index
    %c0_73 = arith.constant 0 : index
    %65 = vector.load %arg3[%c0_72, %c0_73] : memref<1x128xf32, #tpu.memory_space<vmem>>, vector<1x128xf32>
    %66 = vector.broadcast %65 : vector<1x128xf32> to vector<128x128xf32>
    %67 = arith.addf %64, %66 : vector<128x128xf32>
    %cst_74 = arith.constant 0.000000e+00 : f32
    %68 = vector.broadcast %cst_74 : f32 to vector<128x128xf32>
    %69 = arith.maximumf %67, %68 : vector<128x128xf32>
    %70 = vector.shape_cast %69 : vector<128x128xf32> to vector<2x8x8x128xf32>
    %71 = arith.truncf %70 : vector<2x8x8x128xf32> to vector<2x8x8x128xbf16>
    %c0_75 = arith.constant 0 : index
    %c1_76 = arith.constant 1 : index
    %c1_77 = arith.constant 1 : index
    %c0_78 = arith.constant 0 : index
    %72 = vector.load %arg9[%c0_75, %c1_76, %c1_77, %c0_78] : memref<2x10x10x128xbf16, #tpu.memory_space<vmem>>, vector<2x8x8x128xbf16>
    tpu.vector_store %arg9[%c0_75, %c1_76, %c1_77, %c0_78], %71 {strides = array<i32>} : memref<2x10x10x128xbf16, #tpu.memory_space<vmem>>, vector<2x8x8x128xbf16>,
    %c3_79 = arith.constant 3 : index
    %c0_80 = arith.constant 0 : index
    %c0_81 = arith.constant 0 : index
    %c0_82 = arith.constant 0 : index
    %c0_83 = arith.constant 0 : index
    %73 = vector.load %arg1[%c3_79, %c0_80, %c0_81, %c0_82, %c0_83] : memref<4x2x9x9x32xbf16, #tpu.memory_space<vmem>>, vector<1x2x8x8x32xbf16>
    %74 = vector.shape_cast %73 : vector<1x2x8x8x32xbf16> to vector<2x8x8x32xbf16>
    %75 = vector.shape_cast %74 : vector<2x8x8x32xbf16> to vector<128x32xbf16>
    %c0_84 = arith.constant 0 : index
    %c0_85 = arith.constant 0 : index
    %76 = vector.load %arg6[%c0_84, %c0_85] : memref<32x128xbf16, #tpu.memory_space<vmem>>, vector<32x128xbf16>
    %cst_86 = arith.constant dense<0.000000e+00> : vector<128x128xf32>
    %77 = tpu.matmul %75, %76, %cst_86 {dimension_numbers = #tpu.dot_dimension_numbers<[1], [0], [0], [1], [0, 0, 1, 1], [], []>} : vector<128x32xbf16>, vector<32x128xbf16>, vector<128x128xf32> -> vector<128x128xf32>
    %c0_87 = arith.constant 0 : index
    %c0_88 = arith.constant 0 : index
    %78 = vector.load %arg7[%c0_87, %c0_88] : memref<1x128xf32, #tpu.memory_space<vmem>>, vector<1x128xf32>
    %79 = vector.broadcast %78 : vector<1x128xf32> to vector<128x128xf32>
    %80 = arith.addf %77, %79 : vector<128x128xf32>
    %c0_89 = arith.constant 0 : index
    %c0_90 = arith.constant 0 : index
    %c0_91 = arith.constant 0 : index
    %c0_92 = arith.constant 0 : index
    %81 = vector.load %arg9[%c0_89, %c0_90, %c0_91, %c0_92] : memref<2x10x10x128xbf16, #tpu.memory_space<vmem>>, vector<2x8x8x128xbf16>
    %82 = vector.shape_cast %81 : vector<2x8x8x128xbf16> to vector<128x128xbf16>
    %c0_93 = arith.constant 0 : index
    %c0_94 = arith.constant 0 : index
    %c0_95 = arith.constant 0 : index
    %83 = vector.load %arg4[%c0_93, %c0_94, %c0_95] : memref<9x128x128xbf16, #tpu.memory_space<vmem>>, vector<1x128x128xbf16>
    %84 = vector.shape_cast %83 : vector<1x128x128xbf16> to vector<128x128xbf16>
    %cst_96 = arith.constant dense<0.000000e+00> : vector<128x128xf32>
    %85 = tpu.matmul %82, %84, %cst_96 {dimension_numbers = #tpu.dot_dimension_numbers<[1], [0], [0], [1], [0, 0, 1, 1], [], []>} : vector<128x128xbf16>, vector<128x128xbf16>, vector<128x128xf32> -> vector<128x128xf32>
    %86 = arith.addf %80, %85 : vector<128x128xf32>
    %c0_97 = arith.constant 0 : index
    %c0_98 = arith.constant 0 : index
    %c1_99 = arith.constant 1 : index
    %c0_100 = arith.constant 0 : index
    %87 = vector.load %arg9[%c0_97, %c0_98, %c1_99, %c0_100] : memref<2x10x10x128xbf16, #tpu.memory_space<vmem>>, vector<2x8x8x128xbf16>
    %88 = vector.shape_cast %87 : vector<2x8x8x128xbf16> to vector<128x128xbf16>
    %c1_101 = arith.constant 1 : index
    %c0_102 = arith.constant 0 : index
    %c0_103 = arith.constant 0 : index
    %89 = vector.load %arg4[%c1_101, %c0_102, %c0_103] : memref<9x128x128xbf16, #tpu.memory_space<vmem>>, vector<1x128x128xbf16>
    %90 = vector.shape_cast %89 : vector<1x128x128xbf16> to vector<128x128xbf16>
    %cst_104 = arith.constant dense<0.000000e+00> : vector<128x128xf32>
    %91 = tpu.matmul %88, %90, %cst_104 {dimension_numbers = #tpu.dot_dimension_numbers<[1], [0], [0], [1], [0, 0, 1, 1], [], []>} : vector<128x128xbf16>, vector<128x128xbf16>, vector<128x128xf32> -> vector<128x128xf32>
    %92 = arith.addf %86, %91 : vector<128x128xf32>
    %c0_105 = arith.constant 0 : index
    %c0_106 = arith.constant 0 : index
    %c2_107 = arith.constant 2 : index
    %c0_108 = arith.constant 0 : index
    %93 = vector.load %arg9[%c0_105, %c0_106, %c2_107, %c0_108] : memref<2x10x10x128xbf16, #tpu.memory_space<vmem>>, vector<2x8x8x128xbf16>
    %94 = vector.shape_cast %93 : vector<2x8x8x128xbf16> to vector<128x128xbf16>
    %c2_109 = arith.constant 2 : index
    %c0_110 = arith.constant 0 : index
    %c0_111 = arith.constant 0 : index
    %95 = vector.load %arg4[%c2_109, %c0_110, %c0_111] : memref<9x128x128xbf16, #tpu.memory_space<vmem>>, vector<1x128x128xbf16>
    %96 = vector.shape_cast %95 : vector<1x128x128xbf16> to vector<128x128xbf16>
    %cst_112 = arith.constant dense<0.000000e+00> : vector<128x128xf32>
    %97 = tpu.matmul %94, %96, %cst_112 {dimension_numbers = #tpu.dot_dimension_numbers<[1], [0], [0], [1], [0, 0, 1, 1], [], []>} : vector<128x128xbf16>, vector<128x128xbf16>, vector<128x128xf32> -> vector<128x128xf32>
    %98 = arith.addf %92, %97 : vector<128x128xf32>
    %c0_113 = arith.constant 0 : index
    %c1_114 = arith.constant 1 : index
    %c0_115 = arith.constant 0 : index
    %c0_116 = arith.constant 0 : index
    %99 = vector.load %arg9[%c0_113, %c1_114, %c0_115, %c0_116] : memref<2x10x10x128xbf16, #tpu.memory_space<vmem>>, vector<2x8x8x128xbf16>
    %100 = vector.shape_cast %99 : vector<2x8x8x128xbf16> to vector<128x128xbf16>
    %c3_117 = arith.constant 3 : index
    %c0_118 = arith.constant 0 : index
    %c0_119 = arith.constant 0 : index
    %101 = vector.load %arg4[%c3_117, %c0_118, %c0_119] : memref<9x128x128xbf16, #tpu.memory_space<vmem>>, vector<1x128x128xbf16>
    %102 = vector.shape_cast %101 : vector<1x128x128xbf16> to vector<128x128xbf16>
    %cst_120 = arith.constant dense<0.000000e+00> : vector<128x128xf32>
    %103 = tpu.matmul %100, %102, %cst_120 {dimension_numbers = #tpu.dot_dimension_numbers<[1], [0], [0], [1], [0, 0, 1, 1], [], []>} : vector<128x128xbf16>, vector<128x128xbf16>, vector<128x128xf32> -> vector<128x128xf32>
    %104 = arith.addf %98, %103 : vector<128x128xf32>
    %c0_121 = arith.constant 0 : index
    %c1_122 = arith.constant 1 : index
    %c1_123 = arith.constant 1 : index
    %c0_124 = arith.constant 0 : index
    %105 = vector.load %arg9[%c0_121, %c1_122, %c1_123, %c0_124] : memref<2x10x10x128xbf16, #tpu.memory_space<vmem>>, vector<2x8x8x128xbf16>
    %106 = vector.shape_cast %105 : vector<2x8x8x128xbf16> to vector<128x128xbf16>
    %c4_125 = arith.constant 4 : index
    %c0_126 = arith.constant 0 : index
    %c0_127 = arith.constant 0 : index
    %107 = vector.load %arg4[%c4_125, %c0_126, %c0_127] : memref<9x128x128xbf16, #tpu.memory_space<vmem>>, vector<1x128x128xbf16>
    %108 = vector.shape_cast %107 : vector<1x128x128xbf16> to vector<128x128xbf16>
    %cst_128 = arith.constant dense<0.000000e+00> : vector<128x128xf32>
    %109 = tpu.matmul %106, %108, %cst_128 {dimension_numbers = #tpu.dot_dimension_numbers<[1], [0], [0], [1], [0, 0, 1, 1], [], []>} : vector<128x128xbf16>, vector<128x128xbf16>, vector<128x128xf32> -> vector<128x128xf32>
    %110 = arith.addf %104, %109 : vector<128x128xf32>
    %c0_129 = arith.constant 0 : index
    %c1_130 = arith.constant 1 : index
    %c2_131 = arith.constant 2 : index
    %c0_132 = arith.constant 0 : index
    %111 = vector.load %arg9[%c0_129, %c1_130, %c2_131, %c0_132] : memref<2x10x10x128xbf16, #tpu.memory_space<vmem>>, vector<2x8x8x128xbf16>
    %112 = vector.shape_cast %111 : vector<2x8x8x128xbf16> to vector<128x128xbf16>
    %c5_133 = arith.constant 5 : index
    %c0_134 = arith.constant 0 : index
    %c0_135 = arith.constant 0 : index
    %113 = vector.load %arg4[%c5_133, %c0_134, %c0_135] : memref<9x128x128xbf16, #tpu.memory_space<vmem>>, vector<1x128x128xbf16>
    %114 = vector.shape_cast %113 : vector<1x128x128xbf16> to vector<128x128xbf16>
    %cst_136 = arith.constant dense<0.000000e+00> : vector<128x128xf32>
    %115 = tpu.matmul %112, %114, %cst_136 {dimension_numbers = #tpu.dot_dimension_numbers<[1], [0], [0], [1], [0, 0, 1, 1], [], []>} : vector<128x128xbf16>, vector<128x128xbf16>, vector<128x128xf32> -> vector<128x128xf32>
    %116 = arith.addf %110, %115 : vector<128x128xf32>
    %c0_137 = arith.constant 0 : index
    %c2_138 = arith.constant 2 : index
    %c0_139 = arith.constant 0 : index
    %c0_140 = arith.constant 0 : index
    %117 = vector.load %arg9[%c0_137, %c2_138, %c0_139, %c0_140] : memref<2x10x10x128xbf16, #tpu.memory_space<vmem>>, vector<2x8x8x128xbf16>
    %118 = vector.shape_cast %117 : vector<2x8x8x128xbf16> to vector<128x128xbf16>
    %c6_141 = arith.constant 6 : index
    %c0_142 = arith.constant 0 : index
    %c0_143 = arith.constant 0 : index
    %119 = vector.load %arg4[%c6_141, %c0_142, %c0_143] : memref<9x128x128xbf16, #tpu.memory_space<vmem>>, vector<1x128x128xbf16>
    %120 = vector.shape_cast %119 : vector<1x128x128xbf16> to vector<128x128xbf16>
    %cst_144 = arith.constant dense<0.000000e+00> : vector<128x128xf32>
    %121 = tpu.matmul %118, %120, %cst_144 {dimension_numbers = #tpu.dot_dimension_numbers<[1], [0], [0], [1], [0, 0, 1, 1], [], []>} : vector<128x128xbf16>, vector<128x128xbf16>, vector<128x128xf32> -> vector<128x128xf32>
    %122 = arith.addf %116, %121 : vector<128x128xf32>
    %c0_145 = arith.constant 0 : index
    %c2_146 = arith.constant 2 : index
    %c1_147 = arith.constant 1 : index
    %c0_148 = arith.constant 0 : index
    %123 = vector.load %arg9[%c0_145, %c2_146, %c1_147, %c0_148] : memref<2x10x10x128xbf16, #tpu.memory_space<vmem>>, vector<2x8x8x128xbf16>
    %124 = vector.shape_cast %123 : vector<2x8x8x128xbf16> to vector<128x128xbf16>
    %c7_149 = arith.constant 7 : index
    %c0_150 = arith.constant 0 : index
    %c0_151 = arith.constant 0 : index
    %125 = vector.load %arg4[%c7_149, %c0_150, %c0_151] : memref<9x128x128xbf16, #tpu.memory_space<vmem>>, vector<1x128x128xbf16>
    %126 = vector.shape_cast %125 : vector<1x128x128xbf16> to vector<128x128xbf16>
    %cst_152 = arith.constant dense<0.000000e+00> : vector<128x128xf32>
    %127 = tpu.matmul %124, %126, %cst_152 {dimension_numbers = #tpu.dot_dimension_numbers<[1], [0], [0], [1], [0, 0, 1, 1], [], []>} : vector<128x128xbf16>, vector<128x128xbf16>, vector<128x128xf32> -> vector<128x128xf32>
    %128 = arith.addf %122, %127 : vector<128x128xf32>
    %c0_153 = arith.constant 0 : index
    %c2_154 = arith.constant 2 : index
    %c2_155 = arith.constant 2 : index
    %c0_156 = arith.constant 0 : index
    %129 = vector.load %arg9[%c0_153, %c2_154, %c2_155, %c0_156] : memref<2x10x10x128xbf16, #tpu.memory_space<vmem>>, vector<2x8x8x128xbf16>
    %130 = vector.shape_cast %129 : vector<2x8x8x128xbf16> to vector<128x128xbf16>
    %c8_157 = arith.constant 8 : index
    %c0_158 = arith.constant 0 : index
    %c0_159 = arith.constant 0 : index
    %131 = vector.load %arg4[%c8_157, %c0_158, %c0_159] : memref<9x128x128xbf16, #tpu.memory_space<vmem>>, vector<1x128x128xbf16>
    %132 = vector.shape_cast %131 : vector<1x128x128xbf16> to vector<128x128xbf16>
    %cst_160 = arith.constant dense<0.000000e+00> : vector<128x128xf32>
    %133 = tpu.matmul %130, %132, %cst_160 {dimension_numbers = #tpu.dot_dimension_numbers<[1], [0], [0], [1], [0, 0, 1, 1], [], []>} : vector<128x128xbf16>, vector<128x128xbf16>, vector<128x128xf32> -> vector<128x128xf32>
    %134 = arith.addf %128, %133 : vector<128x128xf32>
    %c0_161 = arith.constant 0 : index
    %c0_162 = arith.constant 0 : index
    %135 = vector.load %arg5[%c0_161, %c0_162] : memref<1x128xf32, #tpu.memory_space<vmem>>, vector<1x128xf32>
    %136 = vector.broadcast %135 : vector<1x128xf32> to vector<128x128xf32>
    %137 = arith.addf %134, %136 : vector<128x128xf32>
    %cst_163 = arith.constant 0.000000e+00 : f32
    %138 = vector.broadcast %cst_163 : f32 to vector<128x128xf32>
    %139 = arith.maximumf %137, %138 : vector<128x128xf32>
    %140 = vector.shape_cast %139 : vector<128x128xf32> to vector<2x8x8x128xf32>
    %141 = arith.truncf %140 : vector<2x8x8x128xf32> to vector<2x8x8x128xbf16>
    %c0_164 = arith.constant 0 : index
    %c0_165 = arith.constant 0 : index
    %c0_166 = arith.constant 0 : index
    %c0_167 = arith.constant 0 : index
    %142 = vector.load %arg8[%c0_164, %c0_165, %c0_166, %c0_167] : memref<2x8x8x128xbf16, #tpu.memory_space<vmem>>, vector<2x8x8x128xbf16>
    tpu.vector_store %arg8[%c0_164, %c0_165, %c0_166, %c0_167], %141 {strides = array<i32>} : memref<2x8x8x128xbf16, #tpu.memory_space<vmem>>, vector<2x8x8x128xbf16>,
    return
  }
  func.func @transform_0(%arg0: i32) -> (i32, i32, i32, i32, i32) {
    %c0_i32 = arith.constant 0 : i32
    %c0_i32_0 = arith.constant 0 : i32
    %c0_i32_1 = arith.constant 0 : i32
    %c0_i32_2 = arith.constant 0 : i32
    %c0_i32_3 = arith.constant 0 : i32
    return %c0_i32, %arg0, %c0_i32_0, %c0_i32_1, %c0_i32_2 : i32, i32, i32, i32, i32
  }
  func.func @transform_1(%arg0: i32) -> (i32, i32, i32) {
    %c0_i32 = arith.constant 0 : i32
    %c0_i32_0 = arith.constant 0 : i32
    %c0_i32_1 = arith.constant 0 : i32
    %c0_i32_2 = arith.constant 0 : i32
    return %c0_i32, %c0_i32_0, %c0_i32_1 : i32, i32, i32
  }
  func.func @transform_2(%arg0: i32) -> (i32, i32) {
    %c0_i32 = arith.constant 0 : i32
    %c0_i32_0 = arith.constant 0 : i32
    %c0_i32_1 = arith.constant 0 : i32
    return %c0_i32, %c0_i32_0 : i32, i32
  }
  func.func @transform_3(%arg0: i32) -> (i32, i32, i32) {
    %c0_i32 = arith.constant 0 : i32
    %c0_i32_0 = arith.constant 0 : i32
    %c0_i32_1 = arith.constant 0 : i32
    %c0_i32_2 = arith.constant 0 : i32
    return %c0_i32, %c0_i32_0, %c0_i32_1 : i32, i32, i32
  }
  func.func @transform_4(%arg0: i32) -> (i32, i32) {
    %c0_i32 = arith.constant 0 : i32
    %c0_i32_0 = arith.constant 0 : i32
    %c0_i32_1 = arith.constant 0 : i32
    return %c0_i32, %c0_i32_0 : i32, i32
  }
  func.func @transform_5(%arg0: i32) -> (i32, i32) {
    %c0_i32 = arith.constant 0 : i32
    %c0_i32_0 = arith.constant 0 : i32
    %c0_i32_1 = arith.constant 0 : i32
    return %c0_i32, %c0_i32_0 : i32, i32
  }
  func.func @transform_6(%arg0: i32) -> (i32, i32) {
    %c0_i32 = arith.constant 0 : i32
    %c0_i32_0 = arith.constant 0 : i32
    %c0_i32_1 = arith.constant 0 : i32
    return %c0_i32, %c0_i32_0 : i32, i32
  }
  func.func @transform_7(%arg0: i32) -> (i32, i32, i32, i32) {
    %c0_i32 = arith.constant 0 : i32
    %c0_i32_0 = arith.constant 0 : i32
    %c0_i32_1 = arith.constant 0 : i32
    %c0_i32_2 = arith.constant 0 : i32
    return %arg0, %c0_i32, %c0_i32_0, %c0_i32_1 : i32, i32, i32, i32
  }
}

</mosaic_0001>

<llo_original>
// kernel: tpu_custom_call.1
$region0: #{tpu_custom_call.1}
  #allocation0 [shape = 'u32[]', space=smem, size = 0x4, offset = 0x4, fixed_abs, tag = 'smem constant byte address 0x4 - core index']
  #allocation1 [shape = 'u32[72,128]{1,0:T(1,128)}', space=vmem, size = 0x9000, scoped, tag = 'internal scratch']
  #allocation2 [shape = 'bf16[2,10,10,128]{3,2,1,0:T(8,128)(2,1)}', space=vmem, size = 0x14000, scoped, tag = 'scratch operand']
  %s0 = inlined_call_operand.vmem [shape: bf16[4,2,9,9,32], index: 0, kind: input, shape index: {}]
  %s1 = inlined_call_operand.vmem [shape: bf16[9,32,128], index: 1, kind: input, shape index: {}]
  %s2 = inlined_call_operand.vmem [shape: f32[1,128], index: 2, kind: input, shape index: {}]
  %s3 = inlined_call_operand.vmem [shape: bf16[9,128,128], index: 3, kind: input, shape index: {}]
  %s4 = inlined_call_operand.vmem [shape: f32[1,128], index: 4, kind: input, shape index: {}]
  %s5 = inlined_call_operand.vmem [shape: bf16[32,128], index: 5, kind: input, shape index: {}]
  %s6 = inlined_call_operand.vmem [shape: f32[1,128], index: 6, kind: input, shape index: {}]
  %s7 = inlined_call_operand.hbm [shape: bf16[2,8,8,128], index: 7, kind: output, shape index: {}]
  %s8 = sld [smem:[#allocation0]]
  $region42: #{tpu_custom_call.1} parent=0
    _
  %s10 = ssub.s32 1, %s8
  %s11 = scalar_select 0, %s10, %s8
  $region1: #{tpu_custom_call.1} parent=0
    #allocation3 [shape = 'u8[32768]{0}', space=vmem, size = 0x8000, scoped, tag = 'output window, operand 0, single buffered']
    #allocation4 [shape = 's32[1]{0}', space=sflag, size = 0x4, scoped, tag = 'scoped memory for tpu_custom_call.1']
    %12 = vsyncpa [#allocation4], 0
    // Predicated region
    $region2: #{tpu_custom_call.1} parent=1 // pred_check
      _
    $region3: #{tpu_custom_call.1} parent=1 // pred_check_branch
      %14 = sbr.rel (0) target = $region5
    $region4: #{tpu_custom_call.1} parent=1 // pred_region
      _
    $region5: #{tpu_custom_call.1} parent=1 // pred_fallthru
      _
    // Predicated region
    $region6: #{tpu_custom_call.1} parent=1 // pred_check
      _
    $region7: #{tpu_custom_call.1} parent=1 // pred_check_branch
      %16 = sbr.rel (0) target = $region9
    $region8: #{tpu_custom_call.1} parent=1 // pred_region
      _
    $region9: #{tpu_custom_call.1} parent=1 // pred_fallthru
      _
    // Predicated region
    $region10: #{tpu_custom_call.1} parent=1 // pred_check
      _
    $region11: #{tpu_custom_call.1} parent=1 // pred_check_branch
      %18 = sbr.rel (0) target = $region13
    $region12: #{tpu_custom_call.1} parent=1 // pred_region
      _
    $region13: #{tpu_custom_call.1} parent=1 // pred_fallthru
      _
    // Predicated region
    $region14: #{tpu_custom_call.1} parent=1 // pred_check
      _
    $region15: #{tpu_custom_call.1} parent=1 // pred_check_branch
      %20 = sbr.rel (0) target = $region17
    $region16: #{tpu_custom_call.1} parent=1 // pred_region
      _
    $region17: #{tpu_custom_call.1} parent=1 // pred_fallthru
      _
    // Predicated region
    $region18: #{tpu_custom_call.1} parent=1 // pred_check
      _
    $region19: #{tpu_custom_call.1} parent=1 // pred_check_branch
      %22 = sbr.rel (0) target = $region21
    $region20: #{tpu_custom_call.1} parent=1 // pred_region
      _
    $region21: #{tpu_custom_call.1} parent=1 // pred_fallthru
      _
    // Predicated region
    $region22: #{tpu_custom_call.1} parent=1 // pred_check
      _
    $region23: #{tpu_custom_call.1} parent=1 // pred_check_branch
      %24 = sbr.rel (0) target = $region25
    $region24: #{tpu_custom_call.1} parent=1 // pred_region
      _
    $region25: #{tpu_custom_call.1} parent=1 // pred_fallthru
      _
    // Predicated region
    $region26: #{tpu_custom_call.1} parent=1 // pred_check
      _
    $region27: #{tpu_custom_call.1} parent=1 // pred_check_branch
      %26 = sbr.rel (0) target = $region29
    $region28: #{tpu_custom_call.1} parent=1 // pred_region
      _
    $region29: #{tpu_custom_call.1} parent=1 // pred_fallthru
      _
    %p28 = scmp.eq.s32.totalorder 0, 0
    // Predicated region
    $region30: #{tpu_custom_call.1} parent=1 // pred_check
      %p29 = pneg %p28
    $region31: #{tpu_custom_call.1} parent=1 // pred_check_branch
      %31 = sbr.rel (%p29) target = $region33
    $region32: #{tpu_custom_call.1} parent=1 // pred_region
      %32 = vst [vmem:[#allocation2] sm:$0xf] 0
      %33 = vst [vmem:[#allocation2 + $0x4] sm:$0x1] 0
      %34 = vst [vmem:[#allocation2 + $0x8] sm:$0xf] 0
      %35 = vst [vmem:[#allocation2 + $0xc] sm:$0x1] 0
      %36 = vst [vmem:[#allocation2 + $0x10] sm:$0xf] 0
      %37 = vst [vmem:[#allocation2 + $0x14] sm:$0x1] 0
      %38 = vst [vmem:[#allocation2 + $0x18] sm:$0xf] 0
      %39 = vst [vmem:[#allocation2 + $0x1c] sm:$0x1] 0
      %40 = vst [vmem:[#allocation2 + $0x20] sm:$0xf] 0
      %41 = vst [vmem:[#allocation2 + $0x24] sm:$0x1] 0
      %42 = vst [vmem:[#allocation2 + $0x28] sm:$0xf] 0
      %43 = vst [vmem:[#allocation2 + $0x2c] sm:$0x1] 0
      %44 = vst [vmem:[#allocation2 + $0x30] sm:$0xf] 0
      %45 = vst [vmem:[#allocation2 + $0x34] sm:$0x1] 0
      %46 = vst [vmem:[#allocation2 + $0x38] sm:$0xf] 0
      %47 = vst [vmem:[#allocation2 + $0x3c] sm:$0x1] 0
      %48 = vst [vmem:[#allocation2 + $0x40] sm:$0xf] 0
      %49 = vst [vmem:[#allocation2 + $0x44] sm:$0x1] 0
      %50 = vst [vmem:[#allocation2 + $0x48] sm:$0xf] 0
      %51 = vst [vmem:[#allocation2 + $0x4c] sm:$0x1] 0
      %52 = vst [vmem:[#allocation2 + $0x50] sm:$0xf] 0
      %53 = vst [vmem:[#allocation2 + $0x54] sm:$0x1] 0
      %54 = vst [vmem:[#allocation2 + $0x58] sm:$0xf] 0
      %55 = vst [vmem:[#allocation2 + $0x5c] sm:$0x1] 0
      %56 = vst [vmem:[#allocation2 + $0x60] sm:$0xf] 0
      %57 = vst [vmem:[#allocation2 + $0x64] sm:$0x1] 0
      %58 = vst [vmem:[#allocation2 + $0x68] sm:$0xf] 0
      %59 = vst [vmem:[#allocation2 + $0x6c] sm:$0x1] 0
      %60 = vst [vmem:[#allocation2 + $0x70] sm:$0xf] 0
      %61 = vst [vmem:[#allocation2 + $0x74] sm:$0x1] 0
      %62 = vst [vmem:[#allocation2 + $0x78] sm:$0xf] 0
      %63 = vst [vmem:[#allocation2 + $0x7c] sm:$0x1] 0
      %64 = vst [vmem:[#allocation2 + $0x80] sm:$0xf] 0
      %65 = vst [vmem:[#allocation2 + $0x84] sm:$0x1] 0
      %66 = vst [vmem:[#allocation2 + $0x88] sm:$0xf] 0
      %67 = vst [vmem:[#allocation2 + $0x8c] sm:$0x1] 0
      %68 = vst [vmem:[#allocation2 + $0x90] sm:$0xf] 0
      %69 = vst [vmem:[#allocation2 + $0x94] sm:$0x1] 0
      %70 = vst [vmem:[#allocation2 + $0x98] sm:$0xf] 0
      %71 = vst [vmem:[#allocation2 + $0x9c] sm:$0x1] 0
    $region33: #{tpu_custom_call.1} parent=1 // pred_fallthru
      _
    %v72 = vld [vmem:[%s0] sm:$0xf]
    %v73 = vld [vmem:[%s0 + $0x8] sm:$0xf]
    %v74 = vld [vmem:[%s0 + $0x10] sm:$0xf]
    %v75 = vld [vmem:[%s0 + $0x18] sm:$0xf]
    %v76 = vld [vmem:[%s0 + $0x20] sm:$0xf]
    %v77 = vld [vmem:[%s0 + $0x28] sm:$0xf]
    %v78 = vld [vmem:[%s0 + $0x30] sm:$0xf]
    %v79 = vld [vmem:[%s0 + $0x38] sm:$0xf]
    %v80 = vld [vmem:[%s0 + $0x48] sm:$0xf]
    %v81 = vld [vmem:[%s0 + $0x50] sm:$0xf]
    %v82 = vld [vmem:[%s0 + $0x58] sm:$0xf]
    %v83 = vld [vmem:[%s0 + $0x60] sm:$0xf]
    %v84 = vld [vmem:[%s0 + $0x68] sm:$0xf]
    %v85 = vld [vmem:[%s0 + $0x70] sm:$0xf]
    %v86 = vld [vmem:[%s0 + $0x78] sm:$0xf]
    %v87 = vld [vmem:[%s0 + $0x80] sm:$0xf]
    %v88 = vld [vmem:[%s1] sm:$0xf]
    %v89 = vld [vmem:[%s1 + $0x4] sm:$0xf]
    %v90 = vld [vmem:[%s1 + $0x8] sm:$0xf]
    %v91 = vld [vmem:[%s1 + $0xc] sm:$0xf]
    %s92 = scalar_lea.vmem %s0, 144
    %v93 = vld [vmem:[%s92] sm:$0xf]
    %v94 = vld [vmem:[%s92 + $0x8] sm:$0xf]
    %v95 = vld [vmem:[%s92 + $0x10] sm:$0xf]
    %v96 = vld [vmem:[%s92 + $0x18] sm:$0xf]
    %v97 = vld [vmem:[%s92 + $0x20] sm:$0xf]
    %v98 = vld [vmem:[%s92 + $0x28] sm:$0xf]
    %v99 = vld [vmem:[%s92 + $0x30] sm:$0xf]
    %v100 = vld [vmem:[%s92 + $0x38] sm:$0xf]
    %v101 = vld [vmem:[%s92 + $0x48] sm:$0xf]
    %v102 = vld [vmem:[%s92 + $0x50] sm:$0xf]
    %v103 = vld [vmem:[%s92 + $0x58] sm:$0xf]
    %v104 = vld [vmem:[%s92 + $0x60] sm:$0xf]
    %v105 = vld [vmem:[%s92 + $0x68] sm:$0xf]
    %v106 = vld [vmem:[%s92 + $0x70] sm:$0xf]
    %v107 = vld [vmem:[%s92 + $0x78] sm:$0xf]
    %v108 = vld [vmem:[%s92 + $0x80] sm:$0xf]
    %s109 = scalar_lea.vmem %s1, 16
    %v110 = vld [vmem:[%s109] sm:$0xf]
    %v111 = vld [vmem:[%s109 + $0x4] sm:$0xf]
    %v112 = vld [vmem:[%s109 + $0x8] sm:$0xf]
    %v113 = vld [vmem:[%s109 + $0xc] sm:$0xf]
    %v130 = vunpack.c.l.b16 %v93
    %v131 = vunpack.c.l.b16 %v94
    %v132 = vunpack.c.l.b16 %v95
    %v133 = vunpack.c.l.b16 %v96
    %v134 = vunpack.c.l.b16 %v97
    %v135 = vunpack.c.l.b16 %v98
    %v136 = vunpack.c.l.b16 %v99
    %v137 = vunpack.c.l.b16 %v100
    %v138 = vunpack.c.l.b16 %v101
    %v139 = vunpack.c.l.b16 %v102
    %v140 = vunpack.c.l.b16 %v103
    %v141 = vunpack.c.l.b16 %v104
    %v142 = vunpack.c.l.b16 %v105
    %v143 = vunpack.c.l.b16 %v106
    %v144 = vunpack.c.l.b16 %v107
    %v145 = vunpack.c.l.b16 %v108
    %v146 = vpack.c.b16 %v131, %v130
    %v147 = vpack.c.b16 %v133, %v132
    %v148 = vpack.c.b16 %v135, %v134
    %v149 = vpack.c.b16 %v137, %v136
    %v150 = vpack.c.b16 %v139, %v138
    %v151 = vpack.c.b16 %v141, %v140
    %v152 = vpack.c.b16 %v143, %v142
    %v153 = vpack.c.b16 %v145, %v144
    %v158 = vunpack.c.l.b16 %v110
    %v159 = vunpack.c.l.b16 %v111
    %v160 = vunpack.c.l.b16 %v112
    %v161 = vunpack.c.l.b16 %v113
    %v162 = vpack.c.b16 %v159, %v158
    %v163 = vpack.c.b16 %v161, %v160
    %vm166 = vcmask 261120
    %v168 = vsel %vm166, %v146, 0
    %v171 = vsel %vm166, %v147, 0
    %v174 = vsel %vm166, %v148, 0
    %v177 = vsel %vm166, %v149, 0
    %v180 = vsel %vm166, %v150, 0
    %v183 = vsel %vm166, %v151, 0
    %v186 = vsel %vm166, %v152, 0
    %v189 = vsel %vm166, %v153, 0
    %191 = vmatpush.bf16.msra.mxu0 0
    %192 = vmatpush.bf16.msra.mxu0 0
    %193 = vmatpush.bf16.msra.mxu0 0
    %194 = vmatpush.bf16.msra.mxu0 0
    %195 = vmatpush.bf16.msra.mxu0 0
    %196 = vmatpush.bf16.msra.mxu0 0
    %197 = vmatpush.bf16.msra.mxu0 %v163
    %198 = vmatpush.bf16.msra.mxu0 %v162
    %199 = vmatmul.bf16.gmra.mxu0 %v168
    %v200 = vpop.f32.mrf.mxu0
    %v201 = vadd.f32 0.0, %v200
    %v202 = vpop.f32.mrf.mxu0
    %v203 = vadd.f32 0.0, %v202
    %204 = vmatmul.bf16.gmra.mxu0 %v171
    %v205 = vpop.f32.mrf.mxu0
    %v206 = vadd.f32 0.0, %v205
    %v207 = vpop.f32.mrf.mxu0
    %v208 = vadd.f32 0.0, %v207
    %209 = vmatmul.bf16.gmra.mxu0 %v174
    %v210 = vpop.f32.mrf.mxu0
    %v211 = vadd.f32 0.0, %v210
    %v212 = vpop.f32.mrf.mxu0
    %v213 = vadd.f32 0.0, %v212
    %214 = vmatmul.bf16.gmra.mxu0 %v177
    %v215 = vpop.f32.mrf.mxu0
    %v216 = vadd.f32 0.0, %v215
    %v217 = vpop.f32.mrf.mxu0
    %v218 = vadd.f32 0.0, %v217
    %219 = vmatmul.bf16.gmra.mxu0 %v180
    %v220 = vpop.f32.mrf.mxu0
    %v221 = vadd.f32 0.0, %v220
    %v222 = vpop.f32.mrf.mxu0
    %v223 = vadd.f32 0.0, %v222
    %224 = vmatmul.bf16.gmra.mxu0 %v183
    %v225 = vpop.f32.mrf.mxu0
    %v226 = vadd.f32 0.0, %v225
    %v227 = vpop.f32.mrf.mxu0
    %v228 = vadd.f32 0.0, %v227
    %229 = vmatmul.bf16.gmra.mxu0 %v186
    %v230 = vpop.f32.mrf.mxu0
    %v231 = vadd.f32 0.0, %v230
    %v232 = vpop.f32.mrf.mxu0
    %v233 = vadd.f32 0.0, %v232
    %234 = vmatmul.bf16.gmra.mxu0 %v189
    %v235 = vpop.f32.mrf.mxu0
    %v236 = vadd.f32 0.0, %v235
    %v237 = vpop.f32.mrf.mxu0
    %v238 = vadd.f32 0.0, %v237
    %239 = vdwg.mxu0
    %v256 = vunpack.c.l.b16 %v72
    %v257 = vunpack.c.l.b16 %v73
    %v258 = vunpack.c.l.b16 %v74
    %v259 = vunpack.c.l.b16 %v75
    %v260 = vunpack.c.l.b16 %v76
    %v261 = vunpack.c.l.b16 %v77
    %v262 = vunpack.c.l.b16 %v78
    %v263 = vunpack.c.l.b16 %v79
    %v264 = vunpack.c.l.b16 %v80
    %v265 = vunpack.c.l.b16 %v81
    %v266 = vunpack.c.l.b16 %v82
    %v267 = vunpack.c.l.b16 %v83
    %v268 = vunpack.c.l.b16 %v84
    %v269 = vunpack.c.l.b16 %v85
    %v270 = vunpack.c.l.b16 %v86
    %v271 = vunpack.c.l.b16 %v87
    %v272 = vpack.c.b16 %v257, %v256
    %v273 = vpack.c.b16 %v259, %v258
    %v274 = vpack.c.b16 %v261, %v260
    %v275 = vpack.c.b16 %v263, %v262
    %v276 = vpack.c.b16 %v265, %v264
    %v277 = vpack.c.b16 %v267, %v266
    %v278 = vpack.c.b16 %v269, %v268
    %v279 = vpack.c.b16 %v271, %v270
    %v284 = vunpack.c.l.b16 %v88
    %v285 = vunpack.c.l.b16 %v89
    %v286 = vunpack.c.l.b16 %v90
    %v287 = vunpack.c.l.b16 %v91
    %v288 = vpack.c.b16 %v285, %v284
    %v289 = vpack.c.b16 %v287, %v286
    %v293 = vsel %vm166, %v272, 0
    %v296 = vsel %vm166, %v273, 0
    %v299 = vsel %vm166, %v274, 0
    %v302 = vsel %vm166, %v275, 0
    %v305 = vsel %vm166, %v276, 0
    %v308 = vsel %vm166, %v277, 0
    %v311 = vsel %vm166, %v278, 0
    %v314 = vsel %vm166, %v279, 0
    %316 = vmatpush.bf16.msra.mxu0 0
    %317 = vmatpush.bf16.msra.mxu0 0
    %318 = vmatpush.bf16.msra.mxu0 0
    %319 = vmatpush.bf16.msra.mxu0 0
    %320 = vmatpush.bf16.msra.mxu0 0
    %321 = vmatpush.bf16.msra.mxu0 0
    %322 = vmatpush.bf16.msra.mxu0 %v289
    %323 = vmatpush.bf16.msra.mxu0 %v288
    %324 = vmatmul.bf16.gmra.mxu0 %v293
    %v325 = vpop.f32.mrf.mxu0
    %v326 = vadd.f32 %v201, %v325
    %v327 = vpop.f32.mrf.mxu0
    %v328 = vadd.f32 %v203, %v327
    %329 = vmatmul.bf16.gmra.mxu0 %v296
    %v330 = vpop.f32.mrf.mxu0
    %v331 = vadd.f32 %v206, %v330
    %v332 = vpop.f32.mrf.mxu0
    %v333 = vadd.f32 %v208, %v332
    %334 = vmatmul.bf16.gmra.mxu0 %v299
    %v335 = vpop.f32.mrf.mxu0
    %v336 = vadd.f32 %v211, %v335
    %v337 = vpop.f32.mrf.mxu0
    %v338 = vadd.f32 %v213, %v337
    %339 = vmatmul.bf16.gmra.mxu0 %v302
    %v340 = vpop.f32.mrf.mxu0
    %v341 = vadd.f32 %v216, %v340
    %v342 = vpop.f32.mrf.mxu0
    %v343 = vadd.f32 %v218, %v342
    %344 = vmatmul.bf16.gmra.mxu0 %v305
    %v345 = vpop.f32.mrf.mxu0
    %v346 = vadd.f32 %v221, %v345
    %v347 = vpop.f32.mrf.mxu0
    %v348 = vadd.f32 %v223, %v347
    %349 = vmatmul.bf16.gmra.mxu0 %v308
    %v350 = vpop.f32.mrf.mxu0
    %v351 = vadd.f32 %v226, %v350
    %v352 = vpop.f32.mrf.mxu0
    %v353 = vadd.f32 %v228, %v352
    %354 = vmatmul.bf16.gmra.mxu0 %v311
    %v355 = vpop.f32.mrf.mxu0
    %v356 = vadd.f32 %v231, %v355
    %v357 = vpop.f32.mrf.mxu0
    %v358 = vadd.f32 %v233, %v357
    %359 = vmatmul.bf16.gmra.mxu0 %v314
    %v360 = vpop.f32.mrf.mxu0
    %v361 = vadd.f32 %v236, %v360
    %v362 = vpop.f32.mrf.mxu0
    %v363 = vadd.f32 %v238, %v362
    %364 = vdwg.mxu0
    %v365 = vld [vmem:[%s0] sm:$0xf]
    %v366 = vld [vmem:[%s0 + $0x4] sm:$0x1]
    %v367 = vld [vmem:[%s0 + $0x8] sm:$0xf]
    %v368 = vld [vmem:[%s0 + $0xc] sm:$0x1]
    %v369 = vld [vmem:[%s0 + $0x10] sm:$0xf]
    %v370 = vld [vmem:[%s0 + $0x14] sm:$0x1]
    %v371 = vld [vmem:[%s0 + $0x18] sm:$0xf]
    %v372 = vld [vmem:[%s0 + $0x1c] sm:$0x1]
    %v373 = vld [vmem:[%s0 + $0x20] sm:$0xf]
    %v374 = vld [vmem:[%s0 + $0x24] sm:$0x1]
    %v375 = vld [vmem:[%s0 + $0x28] sm:$0xf]
    %v376 = vld [vmem:[%s0 + $0x2c] sm:$0x1]
    %v377 = vld [vmem:[%s0 + $0x30] sm:$0xf]
    %v378 = vld [vmem:[%s0 + $0x34] sm:$0x1]
    %v379 = vld [vmem:[%s0 + $0x38] sm:$0xf]
    %v380 = vld [vmem:[%s0 + $0x3c] sm:$0x1]
    %v381 = vld [vmem:[%s0 + $0x48] sm:$0xf]
    %v382 = vld [vmem:[%s0 + $0x4c] sm:$0x1]
    %v383 = vld [vmem:[%s0 + $0x50] sm:$0xf]
    %v384 = vld [vmem:[%s0 + $0x54] sm:$0x1]
    %v385 = vld [vmem:[%s0 + $0x58] sm:$0xf]
    %v386 = vld [vmem:[%s0 + $0x5c] sm:$0x1]
    %v387 = vld [vmem:[%s0 + $0x60] sm:$0xf]
    %v388 = vld [vmem:[%s0 + $0x64] sm:$0x1]
    %v389 = vld [vmem:[%s0 + $0x68] sm:$0xf]
    %v390 = vld [vmem:[%s0 + $0x6c] sm:$0x1]
    %v391 = vld [vmem:[%s0 + $0x70] sm:$0xf]
    %v392 = vld [vmem:[%s0 + $0x74] sm:$0x1]
    %v393 = vld [vmem:[%s0 + $0x78] sm:$0xf]
    %v394 = vld [vmem:[%s0 + $0x7c] sm:$0x1]
    %v395 = vld [vmem:[%s0 + $0x80] sm:$0xf]
    %v396 = vld [vmem:[%s0 + $0x84] sm:$0x1]
    %vm397 = vsmask.f32 3328
    %vm398 = vsmask.f32 7440
    %vm399 = vmor %vm397, %vm398
    %v401 = vshrl.u32 %v365, 16
    %v403 = vrot.slane %v401, 4
    %v404 = vshll.u32 %v365, 16
    %v406 = vrot.slane %v404, 5
    %v407 = vor.u32 %v403, %v406
    %v408 = vrot.slane %v407, 4
    %v410 = vshll.u32 %v366, 16
    %v412 = vrot.slane %v410, 5
    %v413 = vsel %vm399, %v408, %v412
    %v415 = vshrl.u32 %v367, 16
    %v417 = vrot.slane %v415, 4
    %v418 = vshll.u32 %v367, 16
    %v420 = vrot.slane %v418, 5
    %v421 = vor.u32 %v417, %v420
    %v422 = vrot.slane %v421, 4
    %v424 = vshll.u32 %v368, 16
    %v426 = vrot.slane %v424, 5
    %v427 = vsel %vm399, %v422, %v426
    %v429 = vshrl.u32 %v369, 16
    %v431 = vrot.slane %v429, 4
    %v432 = vshll.u32 %v369, 16
    %v434 = vrot.slane %v432, 5
    %v435 = vor.u32 %v431, %v434
    %v436 = vrot.slane %v435, 4
    %v438 = vshll.u32 %v370, 16
    %v440 = vrot.slane %v438, 5
    %v441 = vsel %vm399, %v436, %v440
    %v443 = vshrl.u32 %v371, 16
    %v445 = vrot.slane %v443, 4
    %v446 = vshll.u32 %v371, 16
    %v448 = vrot.slane %v446, 5
    %v449 = vor.u32 %v445, %v448
    %v450 = vrot.slane %v449, 4
    %v452 = vshll.u32 %v372, 16
    %v454 = vrot.slane %v452, 5
    %v455 = vsel %vm399, %v450, %v454
    %v457 = vshrl.u32 %v373, 16
    %v459 = vrot.slane %v457, 4
    %v460 = vshll.u32 %v373, 16
    %v462 = vrot.slane %v460, 5
    %v463 = vor.u32 %v459, %v462
    %v464 = vrot.slane %v463, 4
    %v466 = vshll.u32 %v374, 16
    %v468 = vrot.slane %v466, 5
    %v469 = vsel %vm399, %v464, %v468
    %v471 = vshrl.u32 %v375, 16
    %v473 = vrot.slane %v471, 4
    %v474 = vshll.u32 %v375, 16
    %v476 = vrot.slane %v474, 5
    %v477 = vor.u32 %v473, %v476
    %v478 = vrot.slane %v477, 4
    %v480 = vshll.u32 %v376, 16
    %v482 = vrot.slane %v480, 5
    %v483 = vsel %vm399, %v478, %v482
    %v485 = vshrl.u32 %v377, 16
    %v487 = vrot.slane %v485, 4
    %v488 = vshll.u32 %v377, 16
    %v490 = vrot.slane %v488, 5
    %v491 = vor.u32 %v487, %v490
    %v492 = vrot.slane %v491, 4
    %v494 = vshll.u32 %v378, 16
    %v496 = vrot.slane %v494, 5
    %v497 = vsel %vm399, %v492, %v496
    %v499 = vshrl.u32 %v379, 16
    %v501 = vrot.slane %v499, 4
    %v502 = vshll.u32 %v379, 16
    %v504 = vrot.slane %v502, 5
    %v505 = vor.u32 %v501, %v504
    %v506 = vrot.slane %v505, 4
    %v508 = vshll.u32 %v380, 16
    %v510 = vrot.slane %v508, 5
    %v511 = vsel %vm399, %v506, %v510
    %v513 = vshrl.u32 %v381, 16
    %v515 = vrot.slane %v513, 4
    %v516 = vshll.u32 %v381, 16
    %v518 = vrot.slane %v516, 5
    %v519 = vor.u32 %v515, %v518
    %v520 = vrot.slane %v519, 4
    %v522 = vshll.u32 %v382, 16
    %v524 = vrot.slane %v522, 5
    %v525 = vsel %vm399, %v520, %v524
    %v527 = vshrl.u32 %v383, 16
    %v529 = vrot.slane %v527, 4
    %v530 = vshll.u32 %v383, 16
    %v532 = vrot.slane %v530, 5
    %v533 = vor.u32 %v529, %v532
    %v534 = vrot.slane %v533, 4
    %v536 = vshll.u32 %v384, 16
    %v538 = vrot.slane %v536, 5
    %v539 = vsel %vm399, %v534, %v538
    %v541 = vshrl.u32 %v385, 16
    %v543 = vrot.slane %v541, 4
    %v544 = vshll.u32 %v385, 16
    %v546 = vrot.slane %v544, 5
    %v547 = vor.u32 %v543, %v546
    %v548 = vrot.slane %v547, 4
    %v550 = vshll.u32 %v386, 16
    %v552 = vrot.slane %v550, 5
    %v553 = vsel %vm399, %v548, %v552
    %v555 = vshrl.u32 %v387, 16
    %v557 = vrot.slane %v555, 4
    %v558 = vshll.u32 %v387, 16
    %v560 = vrot.slane %v558, 5
    %v561 = vor.u32 %v557, %v560
    %v562 = vrot.slane %v561, 4
    %v564 = vshll.u32 %v388, 16
    %v566 = vrot.slane %v564, 5
    %v567 = vsel %vm399, %v562, %v566
    %v569 = vshrl.u32 %v389, 16
    %v571 = vrot.slane %v569, 4
    %v572 = vshll.u32 %v389, 16
    %v574 = vrot.slane %v572, 5
    %v575 = vor.u32 %v571, %v574
    %v576 = vrot.slane %v575, 4
    %v578 = vshll.u32 %v390, 16
    %v580 = vrot.slane %v578, 5
    %v581 = vsel %vm399, %v576, %v580
    %v583 = vshrl.u32 %v391, 16
    %v585 = vrot.slane %v583, 4
    %v586 = vshll.u32 %v391, 16
    %v588 = vrot.slane %v586, 5
    %v589 = vor.u32 %v585, %v588
    %v590 = vrot.slane %v589, 4
    %v592 = vshll.u32 %v392, 16
    %v594 = vrot.slane %v592, 5
    %v595 = vsel %vm399, %v590, %v594
    %v597 = vshrl.u32 %v393, 16
    %v599 = vrot.slane %v597, 4
    %v600 = vshll.u32 %v393, 16
    %v602 = vrot.slane %v600, 5
    %v603 = vor.u32 %v599, %v602
    %v604 = vrot.slane %v603, 4
    %v606 = vshll.u32 %v394, 16
    %v608 = vrot.slane %v606, 5
    %v609 = vsel %vm399, %v604, %v608
    %v611 = vshrl.u32 %v395, 16
    %v613 = vrot.slane %v611, 4
    %v614 = vshll.u32 %v395, 16
    %v616 = vrot.slane %v614, 5
    %v617 = vor.u32 %v613, %v616
    %v618 = vrot.slane %v617, 4
    %v620 = vshll.u32 %v396, 16
    %v622 = vrot.slane %v620, 5
    %v623 = vsel %vm399, %v618, %v622
    %s624 = scalar_lea.vmem %s1, 32
    %v625 = vld [vmem:[%s624] sm:$0xf]
    %v626 = vld [vmem:[%s624 + $0x4] sm:$0xf]
    %v627 = vld [vmem:[%s624 + $0x8] sm:$0xf]
    %v628 = vld [vmem:[%s624 + $0xc] sm:$0xf]
    %v629 = vunpack.c.l.b16 %v413
    %v630 = vunpack.c.l.b16 %v427
    %v631 = vunpack.c.l.b16 %v441
    %v632 = vunpack.c.l.b16 %v455
    %v633 = vunpack.c.l.b16 %v469
    %v634 = vunpack.c.l.b16 %v483
    %v635 = vunpack.c.l.b16 %v497
    %v636 = vunpack.c.l.b16 %v511
    %v637 = vunpack.c.l.b16 %v525
    %v638 = vunpack.c.l.b16 %v539
    %v639 = vunpack.c.l.b16 %v553
    %v640 = vunpack.c.l.b16 %v567
    %v641 = vunpack.c.l.b16 %v581
    %v642 = vunpack.c.l.b16 %v595
    %v643 = vunpack.c.l.b16 %v609
    %v644 = vunpack.c.l.b16 %v623
    %v645 = vpack.c.b16 %v630, %v629
    %v646 = vpack.c.b16 %v632, %v631
    %v647 = vpack.c.b16 %v634, %v633
    %v648 = vpack.c.b16 %v636, %v635
    %v649 = vpack.c.b16 %v638, %v637
    %v650 = vpack.c.b16 %v640, %v639
    %v651 = vpack.c.b16 %v642, %v641
    %v652 = vpack.c.b16 %v644, %v643
    %v657 = vunpack.c.l.b16 %v625
    %v658 = vunpack.c.l.b16 %v626
    %v659 = vunpack.c.l.b16 %v627
    %v660 = vunpack.c.l.b16 %v628
    %v661 = vpack.c.b16 %v658, %v657
    %v662 = vpack.c.b16 %v660, %v659
    %v666 = vsel %vm166, %v645, 0
    %v669 = vsel %vm166, %v646, 0
    %v672 = vsel %vm166, %v647, 0
    %v675 = vsel %vm166, %v648, 0
    %v678 = vsel %vm166, %v649, 0
    %v681 = vsel %vm166, %v650, 0
    %v684 = vsel %vm166, %v651, 0
    %v687 = vsel %vm166, %v652, 0
    %689 = vmatpush.bf16.msra.mxu0 0
    %690 = vmatpush.bf16.msra.mxu0 0
    %691 = vmatpush.bf16.msra.mxu0 0
    %692 = vmatpush.bf16.msra.mxu0 0
    %693 = vmatpush.bf16.msra.mxu0 0
    %694 = vmatpush.bf16.msra.mxu0 0
    %695 = vmatpush.bf16.msra.mxu0 %v662
    %696 = vmatpush.bf16.msra.mxu0 %v661
    %697 = vmatmul.bf16.gmra.mxu0 %v666
    %v698 = vpop.f32.mrf.mxu0
    %v699 = vadd.f32 0.0, %v698
    %v700 = vpop.f32.mrf.mxu0
    %v701 = vadd.f32 0.0, %v700
    %702 = vmatmul.bf16.gmra.mxu0 %v669
    %v703 = vpop.f32.mrf.mxu0
    %v704 = vadd.f32 0.0, %v703
    %v705 = vpop.f32.mrf.mxu0
    %v706 = vadd.f32 0.0, %v705
    %707 = vmatmul.bf16.gmra.mxu0 %v672
    %v708 = vpop.f32.mrf.mxu0
    %v709 = vadd.f32 0.0, %v708
    %v710 = vpop.f32.mrf.mxu0
    %v711 = vadd.f32 0.0, %v710
    %712 = vmatmul.bf16.gmra.mxu0 %v675
    %v713 = vpop.f32.mrf.mxu0
    %v714 = vadd.f32 0.0, %v713
    %v715 = vpop.f32.mrf.mxu0
    %v716 = vadd.f32 0.0, %v715
    %717 = vmatmul.bf16.gmra.mxu0 %v678
    %v718 = vpop.f32.mrf.mxu0
    %v719 = vadd.f32 0.0, %v718
    %v720 = vpop.f32.mrf.mxu0
    %v721 = vadd.f32 0.0, %v720
    %722 = vmatmul.bf16.gmra.mxu0 %v681
    %v723 = vpop.f32.mrf.mxu0
    %v724 = vadd.f32 0.0, %v723
    %v725 = vpop.f32.mrf.mxu0
    %v726 = vadd.f32 0.0, %v725
    %727 = vmatmul.bf16.gmra.mxu0 %v684
    %v728 = vpop.f32.mrf.mxu0
    %v729 = vadd.f32 0.0, %v728
    %v730 = vpop.f32.mrf.mxu0
    %v731 = vadd.f32 0.0, %v730
    %732 = vmatmul.bf16.gmra.mxu0 %v687
    %v733 = vpop.f32.mrf.mxu0
    %v734 = vadd.f32 0.0, %v733
    %v735 = vpop.f32.mrf.mxu0
    %v736 = vadd.f32 0.0, %v735
    %737 = vdwg.mxu0
    %v738 = vadd.f32 %v326, %v699
    %v739 = vadd.f32 %v328, %v701
    %v740 = vadd.f32 %v331, %v704
    %v741 = vadd.f32 %v333, %v706
    %v742 = vadd.f32 %v336, %v709
    %v743 = vadd.f32 %v338, %v711
    %v744 = vadd.f32 %v341, %v714
    %v745 = vadd.f32 %v343, %v716
    %v746 = vadd.f32 %v346, %v719
    %v747 = vadd.f32 %v348, %v721
    %v748 = vadd.f32 %v351, %v724
    %v749 = vadd.f32 %v353, %v726
    %v750 = vadd.f32 %v356, %v729
    %v751 = vadd.f32 %v358, %v731
    %v752 = vadd.f32 %v361, %v734
    %v753 = vadd.f32 %v363, %v736
    %s754 = scalar_lea.vmem %s0, 288
    %v755 = vld [vmem:[%s754] sm:$0xf]
    %v756 = vld [vmem:[%s754 + $0x8] sm:$0xf]
    %v757 = vld [vmem:[%s754 + $0x10] sm:$0xf]
    %v758 = vld [vmem:[%s754 + $0x18] sm:$0xf]
    %v759 = vld [vmem:[%s754 + $0x20] sm:$0xf]
    %v760 = vld [vmem:[%s754 + $0x28] sm:$0xf]
    %v761 = vld [vmem:[%s754 + $0x30] sm:$0xf]
    %v762 = vld [vmem:[%s754 + $0x38] sm:$0xf]
    %v763 = vld [vmem:[%s754 + $0x48] sm:$0xf]
    %v764 = vld [vmem:[%s754 + $0x50] sm:$0xf]
    %v765 = vld [vmem:[%s754 + $0x58] sm:$0xf]
    %v766 = vld [vmem:[%s754 + $0x60] sm:$0xf]
    %v767 = vld [vmem:[%s754 + $0x68] sm:$0xf]
    %v768 = vld [vmem:[%s754 + $0x70] sm:$0xf]
    %v769 = vld [vmem:[%s754 + $0x78] sm:$0xf]
    %v770 = vld [vmem:[%s754 + $0x80] sm:$0xf]
    %s771 = scalar_lea.vmem %s1, 48
    %v772 = vld [vmem:[%s771] sm:$0xf]
    %v773 = vld [vmem:[%s771 + $0x4] sm:$0xf]
    %v774 = vld [vmem:[%s771 + $0x8] sm:$0xf]
    %v775 = vld [vmem:[%s771 + $0xc] sm:$0xf]
    %v792 = vunpack.c.l.b16 %v755
    %v793 = vunpack.c.l.b16 %v756
    %v794 = vunpack.c.l.b16 %v757
    %v795 = vunpack.c.l.b16 %v758
    %v796 = vunpack.c.l.b16 %v759
    %v797 = vunpack.c.l.b16 %v760
    %v798 = vunpack.c.l.b16 %v761
    %v799 = vunpack.c.l.b16 %v762
    %v800 = vunpack.c.l.b16 %v763
    %v801 = vunpack.c.l.b16 %v764
    %v802 = vunpack.c.l.b16 %v765
    %v803 = vunpack.c.l.b16 %v766
    %v804 = vunpack.c.l.b16 %v767
    %v805 = vunpack.c.l.b16 %v768
    %v806 = vunpack.c.l.b16 %v769
    %v807 = vunpack.c.l.b16 %v770
    %v808 = vpack.c.b16 %v793, %v792
    %v809 = vpack.c.b16 %v795, %v794
    %v810 = vpack.c.b16 %v797, %v796
    %v811 = vpack.c.b16 %v799, %v798
    %v812 = vpack.c.b16 %v801, %v800
    %v813 = vpack.c.b16 %v803, %v802
    %v814 = vpack.c.b16 %v805, %v804
    %v815 = vpack.c.b16 %v807, %v806
    %v820 = vunpack.c.l.b16 %v772
    %v821 = vunpack.c.l.b16 %v773
    %v822 = vunpack.c.l.b16 %v774
    %v823 = vunpack.c.l.b16 %v775
    %v824 = vpack.c.b16 %v821, %v820
    %v825 = vpack.c.b16 %v823, %v822
    %v829 = vsel %vm166, %v808, 0
    %v832 = vsel %vm166, %v809, 0
    %v835 = vsel %vm166, %v810, 0
    %v838 = vsel %vm166, %v811, 0
    %v841 = vsel %vm166, %v812, 0
    %v844 = vsel %vm166, %v813, 0
    %v847 = vsel %vm166, %v814, 0
    %v850 = vsel %vm166, %v815, 0
    %852 = vmatpush.bf16.msra.mxu0 0
    %853 = vmatpush.bf16.msra.mxu0 0
    %854 = vmatpush.bf16.msra.mxu0 0
    %855 = vmatpush.bf16.msra.mxu0 0
    %856 = vmatpush.bf16.msra.mxu0 0
    %857 = vmatpush.bf16.msra.mxu0 0
    %858 = vmatpush.bf16.msra.mxu0 %v825
    %859 = vmatpush.bf16.msra.mxu0 %v824
    %860 = vmatmul.bf16.gmra.mxu0 %v829
    %v861 = vpop.f32.mrf.mxu0
    %v862 = vadd.f32 0.0, %v861
    %v863 = vpop.f32.mrf.mxu0
    %v864 = vadd.f32 0.0, %v863
    %865 = vmatmul.bf16.gmra.mxu0 %v832
    %v866 = vpop.f32.mrf.mxu0
    %v867 = vadd.f32 0.0, %v866
    %v868 = vpop.f32.mrf.mxu0
    %v869 = vadd.f32 0.0, %v868
    %870 = vmatmul.bf16.gmra.mxu0 %v835
    %v871 = vpop.f32.mrf.mxu0
    %v872 = vadd.f32 0.0, %v871
    %v873 = vpop.f32.mrf.mxu0
    %v874 = vadd.f32 0.0, %v873
    %875 = vmatmul.bf16.gmra.mxu0 %v838
    %v876 = vpop.f32.mrf.mxu0
    %v877 = vadd.f32 0.0, %v876
    %v878 = vpop.f32.mrf.mxu0
    %v879 = vadd.f32 0.0, %v878
    %880 = vmatmul.bf16.gmra.mxu0 %v841
    %v881 = vpop.f32.mrf.mxu0
    %v882 = vadd.f32 0.0, %v881
    %v883 = vpop.f32.mrf.mxu0
    %v884 = vadd.f32 0.0, %v883
    %885 = vmatmul.bf16.gmra.mxu0 %v844
    %v886 = vpop.f32.mrf.mxu0
    %v887 = vadd.f32 0.0, %v886
    %v888 = vpop.f32.mrf.mxu0
    %v889 = vadd.f32 0.0, %v888
    %890 = vmatmul.bf16.gmra.mxu0 %v847
    %v891 = vpop.f32.mrf.mxu0
    %v892 = vadd.f32 0.0, %v891
    %v893 = vpop.f32.mrf.mxu0
    %v894 = vadd.f32 0.0, %v893
    %895 = vmatmul.bf16.gmra.mxu0 %v850
    %v896 = vpop.f32.mrf.mxu0
    %v897 = vadd.f32 0.0, %v896
    %v898 = vpop.f32.mrf.mxu0
    %v899 = vadd.f32 0.0, %v898
    %900 = vdwg.mxu0
    %v901 = vadd.f32 %v738, %v862
    %v902 = vadd.f32 %v739, %v864
    %v903 = vadd.f32 %v740, %v867
    %v904 = vadd.f32 %v741, %v869
    %v905 = vadd.f32 %v742, %v872
    %v906 = vadd.f32 %v743, %v874
    %v907 = vadd.f32 %v744, %v877
    %v908 = vadd.f32 %v745, %v879
    %v909 = vadd.f32 %v746, %v882
    %v910 = vadd.f32 %v747, %v884
    %v911 = vadd.f32 %v748, %v887
    %v912 = vadd.f32 %v749, %v889
    %v913 = vadd.f32 %v750, %v892
    %v914 = vadd.f32 %v751, %v894
    %v915 = vadd.f32 %v752, %v897
    %v916 = vadd.f32 %v753, %v899
    %s917 = scalar_lea.vmem %s0, 432
    %v918 = vld [vmem:[%s917] sm:$0xf]
    %v919 = vld [vmem:[%s917 + $0x8] sm:$0xf]
    %v920 = vld [vmem:[%s917 + $0x10] sm:$0xf]
    %v921 = vld [vmem:[%s917 + $0x18] sm:$0xf]
    %v922 = vld [vmem:[%s917 + $0x20] sm:$0xf]
    %v923 = vld [vmem:[%s917 + $0x28] sm:$0xf]
    %v924 = vld [vmem:[%s917 + $0x30] sm:$0xf]
    %v925 = vld [vmem:[%s917 + $0x38] sm:$0xf]
    %v926 = vld [vmem:[%s917 + $0x48] sm:$0xf]
    %v927 = vld [vmem:[%s917 + $0x50] sm:$0xf]
    %v928 = vld [vmem:[%s917 + $0x58] sm:$0xf]
    %v929 = vld [vmem:[%s917 + $0x60] sm:$0xf]
    %v930 = vld [vmem:[%s917 + $0x68] sm:$0xf]
    %v931 = vld [vmem:[%s917 + $0x70] sm:$0xf]
    %v932 = vld [vmem:[%s917 + $0x78] sm:$0xf]
    %v933 = vld [vmem:[%s917 + $0x80] sm:$0xf]
    %s934 = scalar_lea.vmem %s1, 64
    %v935 = vld [vmem:[%s934] sm:$0xf]
    %v936 = vld [vmem:[%s934 + $0x4] sm:$0xf]
    %v937 = vld [vmem:[%s934 + $0x8] sm:$0xf]
    %v938 = vld [vmem:[%s934 + $0xc] sm:$0xf]
    %v955 = vunpack.c.l.b16 %v918
    %v956 = vunpack.c.l.b16 %v919
    %v957 = vunpack.c.l.b16 %v920
    %v958 = vunpack.c.l.b16 %v921
    %v959 = vunpack.c.l.b16 %v922
    %v960 = vunpack.c.l.b16 %v923
    %v961 = vunpack.c.l.b16 %v924
    %v962 = vunpack.c.l.b16 %v925
    %v963 = vunpack.c.l.b16 %v926
    %v964 = vunpack.c.l.b16 %v927
    %v965 = vunpack.c.l.b16 %v928
    %v966 = vunpack.c.l.b16 %v929
    %v967 = vunpack.c.l.b16 %v930
    %v968 = vunpack.c.l.b16 %v931
    %v969 = vunpack.c.l.b16 %v932
    %v970 = vunpack.c.l.b16 %v933
    %v971 = vpack.c.b16 %v956, %v955
    %v972 = vpack.c.b16 %v958, %v957
    %v973 = vpack.c.b16 %v960, %v959
    %v974 = vpack.c.b16 %v962, %v961
    %v975 = vpack.c.b16 %v964, %v963
    %v976 = vpack.c.b16 %v966, %v965
    %v977 = vpack.c.b16 %v968, %v967
    %v978 = vpack.c.b16 %v970, %v969
    %v983 = vunpack.c.l.b16 %v935
    %v984 = vunpack.c.l.b16 %v936
    %v985 = vunpack.c.l.b16 %v937
    %v986 = vunpack.c.l.b16 %v938
    %v987 = vpack.c.b16 %v984, %v983
    %v988 = vpack.c.b16 %v986, %v985
    %v992 = vsel %vm166, %v971, 0
    %v995 = vsel %vm166, %v972, 0
    %v998 = vsel %vm166, %v973, 0
    %v1001 = vsel %vm166, %v974, 0
    %v1004 = vsel %vm166, %v975, 0
    %v1007 = vsel %vm166, %v976, 0
    %v1010 = vsel %vm166, %v977, 0
    %v1013 = vsel %vm166, %v978, 0
    %1015 = vmatpush.bf16.msra.mxu0 0
    %1016 = vmatpush.bf16.msra.mxu0 0
    %1017 = vmatpush.bf16.msra.mxu0 0
    %1018 = vmatpush.bf16.msra.mxu0 0
    %1019 = vmatpush.bf16.msra.mxu0 0
    %1020 = vmatpush.bf16.msra.mxu0 0
    %1021 = vmatpush.bf16.msra.mxu0 %v988
    %1022 = vmatpush.bf16.msra.mxu0 %v987
    %1023 = vmatmul.bf16.gmra.mxu0 %v992
    %v1024 = vpop.f32.mrf.mxu0
    %v1025 = vadd.f32 0.0, %v1024
    %v1026 = vpop.f32.mrf.mxu0
    %v1027 = vadd.f32 0.0, %v1026
    %1028 = vmatmul.bf16.gmra.mxu0 %v995
    %v1029 = vpop.f32.mrf.mxu0
    %v1030 = vadd.f32 0.0, %v1029
    %v1031 = vpop.f32.mrf.mxu0
    %v1032 = vadd.f32 0.0, %v1031
    %1033 = vmatmul.bf16.gmra.mxu0 %v998
    %v1034 = vpop.f32.mrf.mxu0
    %v1035 = vadd.f32 0.0, %v1034
    %v1036 = vpop.f32.mrf.mxu0
    %v1037 = vadd.f32 0.0, %v1036
    %1038 = vmatmul.bf16.gmra.mxu0 %v1001
    %v1039 = vpop.f32.mrf.mxu0
    %v1040 = vadd.f32 0.0, %v1039
    %v1041 = vpop.f32.mrf.mxu0
    %v1042 = vadd.f32 0.0, %v1041
    %1043 = vmatmul.bf16.gmra.mxu0 %v1004
    %v1044 = vpop.f32.mrf.mxu0
    %v1045 = vadd.f32 0.0, %v1044
    %v1046 = vpop.f32.mrf.mxu0
    %v1047 = vadd.f32 0.0, %v1046
    %1048 = vmatmul.bf16.gmra.mxu0 %v1007
    %v1049 = vpop.f32.mrf.mxu0
    %v1050 = vadd.f32 0.0, %v1049
    %v1051 = vpop.f32.mrf.mxu0
    %v1052 = vadd.f32 0.0, %v1051
    %1053 = vmatmul.bf16.gmra.mxu0 %v1010
    %v1054 = vpop.f32.mrf.mxu0
    %v1055 = vadd.f32 0.0, %v1054
    %v1056 = vpop.f32.mrf.mxu0
    %v1057 = vadd.f32 0.0, %v1056
    %1058 = vmatmul.bf16.gmra.mxu0 %v1013
    %v1059 = vpop.f32.mrf.mxu0
    %v1060 = vadd.f32 0.0, %v1059
    %v1061 = vpop.f32.mrf.mxu0
    %v1062 = vadd.f32 0.0, %v1061
    %1063 = vdwg.mxu0
    %v1064 = vadd.f32 %v901, %v1025
    %v1065 = vadd.f32 %v902, %v1027
    %v1066 = vadd.f32 %v903, %v1030
    %v1067 = vadd.f32 %v904, %v1032
    %v1068 = vadd.f32 %v905, %v1035
    %v1069 = vadd.f32 %v906, %v1037
    %v1070 = vadd.f32 %v907, %v1040
    %v1071 = vadd.f32 %v908, %v1042
    %v1072 = vadd.f32 %v909, %v1045
    %v1073 = vadd.f32 %v910, %v1047
    %v1074 = vadd.f32 %v911, %v1050
    %v1075 = vadd.f32 %v912, %v1052
    %v1076 = vadd.f32 %v913, %v1055
    %v1077 = vadd.f32 %v914, %v1057
    %v1078 = vadd.f32 %v915, %v1060
    %v1079 = vadd.f32 %v916, %v1062
    %v1080 = vld [vmem:[%s754] sm:$0xf]
    %v1081 = vld [vmem:[%s754 + $0x4] sm:$0x1]
    %v1082 = vld [vmem:[%s754 + $0x8] sm:$0xf]
    %v1083 = vld [vmem:[%s754 + $0xc] sm:$0x1]
    %v1084 = vld [vmem:[%s754 + $0x10] sm:$0xf]
    %v1085 = vld [vmem:[%s754 + $0x14] sm:$0x1]
    %v1086 = vld [vmem:[%s754 + $0x18] sm:$0xf]
    %v1087 = vld [vmem:[%s754 + $0x1c] sm:$0x1]
    %v1088 = vld [vmem:[%s754 + $0x20] sm:$0xf]
    %v1089 = vld [vmem:[%s754 + $0x24] sm:$0x1]
    %v1090 = vld [vmem:[%s754 + $0x28] sm:$0xf]
    %v1091 = vld [vmem:[%s754 + $0x2c] sm:$0x1]
    %v1092 = vld [vmem:[%s754 + $0x30] sm:$0xf]
    %v1093 = vld [vmem:[%s754 + $0x34] sm:$0x1]
    %v1094 = vld [vmem:[%s754 + $0x38] sm:$0xf]
    %v1095 = vld [vmem:[%s754 + $0x3c] sm:$0x1]
    %v1096 = vld [vmem:[%s754 + $0x48] sm:$0xf]
    %v1097 = vld [vmem:[%s754 + $0x4c] sm:$0x1]
    %v1098 = vld [vmem:[%s754 + $0x50] sm:$0xf]
    %v1099 = vld [vmem:[%s754 + $0x54] sm:$0x1]
    %v1100 = vld [vmem:[%s754 + $0x58] sm:$0xf]
    %v1101 = vld [vmem:[%s754 + $0x5c] sm:$0x1]
    %v1102 = vld [vmem:[%s754 + $0x60] sm:$0xf]
    %v1103 = vld [vmem:[%s754 + $0x64] sm:$0x1]
    %v1104 = vld [vmem:[%s754 + $0x68] sm:$0xf]
    %v1105 = vld [vmem:[%s754 + $0x6c] sm:$0x1]
    %v1106 = vld [vmem:[%s754 + $0x70] sm:$0xf]
    %v1107 = vld [vmem:[%s754 + $0x74] sm:$0x1]
    %v1108 = vld [vmem:[%s754 + $0x78] sm:$0xf]
    %v1109 = vld [vmem:[%s754 + $0x7c] sm:$0x1]
    %v1110 = vld [vmem:[%s754 + $0x80] sm:$0xf]
    %v1111 = vld [vmem:[%s754 + $0x84] sm:$0x1]
    %v1113 = vshrl.u32 %v1080, 16
    %v1115 = vrot.slane %v1113, 4
    %v1116 = vshll.u32 %v1080, 16
    %v1118 = vrot.slane %v1116, 5
    %v1119 = vor.u32 %v1115, %v1118
    %v1120 = vrot.slane %v1119, 4
    %v1122 = vshll.u32 %v1081, 16
    %v1124 = vrot.slane %v1122, 5
    %v1125 = vsel %vm399, %v1120, %v1124
    %v1127 = vshrl.u32 %v1082, 16
    %v1129 = vrot.slane %v1127, 4
    %v1130 = vshll.u32 %v1082, 16
    %v1132 = vrot.slane %v1130, 5
    %v1133 = vor.u32 %v1129, %v1132
    %v1134 = vrot.slane %v1133, 4
    %v1136 = vshll.u32 %v1083, 16
    %v1138 = vrot.slane %v1136, 5
    %v1139 = vsel %vm399, %v1134, %v1138
    %v1141 = vshrl.u32 %v1084, 16
    %v1143 = vrot.slane %v1141, 4
    %v1144 = vshll.u32 %v1084, 16
    %v1146 = vrot.slane %v1144, 5
    %v1147 = vor.u32 %v1143, %v1146
    %v1148 = vrot.slane %v1147, 4
    %v1150 = vshll.u32 %v1085, 16
    %v1152 = vrot.slane %v1150, 5
    %v1153 = vsel %vm399, %v1148, %v1152
    %v1155 = vshrl.u32 %v1086, 16
    %v1157 = vrot.slane %v1155, 4
    %v1158 = vshll.u32 %v1086, 16
    %v1160 = vrot.slane %v1158, 5
    %v1161 = vor.u32 %v1157, %v1160
    %v1162 = vrot.slane %v1161, 4
    %v1164 = vshll.u32 %v1087, 16
    %v1166 = vrot.slane %v1164, 5
    %v1167 = vsel %vm399, %v1162, %v1166
    %v1169 = vshrl.u32 %v1088, 16
    %v1171 = vrot.slane %v1169, 4
    %v1172 = vshll.u32 %v1088, 16
    %v1174 = vrot.slane %v1172, 5
    %v1175 = vor.u32 %v1171, %v1174
    %v1176 = vrot.slane %v1175, 4
    %v1178 = vshll.u32 %v1089, 16
    %v1180 = vrot.slane %v1178, 5
    %v1181 = vsel %vm399, %v1176, %v1180
    %v1183 = vshrl.u32 %v1090, 16
    %v1185 = vrot.slane %v1183, 4
    %v1186 = vshll.u32 %v1090, 16
    %v1188 = vrot.slane %v1186, 5
    %v1189 = vor.u32 %v1185, %v1188
    %v1190 = vrot.slane %v1189, 4
    %v1192 = vshll.u32 %v1091, 16
    %v1194 = vrot.slane %v1192, 5
    %v1195 = vsel %vm399, %v1190, %v1194
    %v1197 = vshrl.u32 %v1092, 16
    %v1199 = vrot.slane %v1197, 4
    %v1200 = vshll.u32 %v1092, 16
    %v1202 = vrot.slane %v1200, 5
    %v1203 = vor.u32 %v1199, %v1202
    %v1204 = vrot.slane %v1203, 4
    %v1206 = vshll.u32 %v1093, 16
    %v1208 = vrot.slane %v1206, 5
    %v1209 = vsel %vm399, %v1204, %v1208
    %v1211 = vshrl.u32 %v1094, 16
    %v1213 = vrot.slane %v1211, 4
    %v1214 = vshll.u32 %v1094, 16
    %v1216 = vrot.slane %v1214, 5
    %v1217 = vor.u32 %v1213, %v1216
    %v1218 = vrot.slane %v1217, 4
    %v1220 = vshll.u32 %v1095, 16
    %v1222 = vrot.slane %v1220, 5
    %v1223 = vsel %vm399, %v1218, %v1222
    %v1225 = vshrl.u32 %v1096, 16
    %v1227 = vrot.slane %v1225, 4
    %v1228 = vshll.u32 %v1096, 16
    %v1230 = vrot.slane %v1228, 5
    %v1231 = vor.u32 %v1227, %v1230
    %v1232 = vrot.slane %v1231, 4
    %v1234 = vshll.u32 %v1097, 16
    %v1236 = vrot.slane %v1234, 5
    %v1237 = vsel %vm399, %v1232, %v1236
    %v1239 = vshrl.u32 %v1098, 16
    %v1241 = vrot.slane %v1239, 4
    %v1242 = vshll.u32 %v1098, 16
    %v1244 = vrot.slane %v1242, 5
    %v1245 = vor.u32 %v1241, %v1244
    %v1246 = vrot.slane %v1245, 4
    %v1248 = vshll.u32 %v1099, 16
    %v1250 = vrot.slane %v1248, 5
    %v1251 = vsel %vm399, %v1246, %v1250
    %v1253 = vshrl.u32 %v1100, 16
    %v1255 = vrot.slane %v1253, 4
    %v1256 = vshll.u32 %v1100, 16
    %v1258 = vrot.slane %v1256, 5
    %v1259 = vor.u32 %v1255, %v1258
    %v1260 = vrot.slane %v1259, 4
    %v1262 = vshll.u32 %v1101, 16
    %v1264 = vrot.slane %v1262, 5
    %v1265 = vsel %vm399, %v1260, %v1264
    %v1267 = vshrl.u32 %v1102, 16
    %v1269 = vrot.slane %v1267, 4
    %v1270 = vshll.u32 %v1102, 16
    %v1272 = vrot.slane %v1270, 5
    %v1273 = vor.u32 %v1269, %v1272
    %v1274 = vrot.slane %v1273, 4
    %v1276 = vshll.u32 %v1103, 16
    %v1278 = vrot.slane %v1276, 5
    %v1279 = vsel %vm399, %v1274, %v1278
    %v1281 = vshrl.u32 %v1104, 16
    %v1283 = vrot.slane %v1281, 4
    %v1284 = vshll.u32 %v1104, 16
    %v1286 = vrot.slane %v1284, 5
    %v1287 = vor.u32 %v1283, %v1286
    %v1288 = vrot.slane %v1287, 4
    %v1290 = vshll.u32 %v1105, 16
    %v1292 = vrot.slane %v1290, 5
    %v1293 = vsel %vm399, %v1288, %v1292
    %v1295 = vshrl.u32 %v1106, 16
    %v1297 = vrot.slane %v1295, 4
    %v1298 = vshll.u32 %v1106, 16
    %v1300 = vrot.slane %v1298, 5
    %v1301 = vor.u32 %v1297, %v1300
    %v1302 = vrot.slane %v1301, 4
    %v1304 = vshll.u32 %v1107, 16
    %v1306 = vrot.slane %v1304, 5
    %v1307 = vsel %vm399, %v1302, %v1306
    %v1309 = vshrl.u32 %v1108, 16
    %v1311 = vrot.slane %v1309, 4
    %v1312 = vshll.u32 %v1108, 16
    %v1314 = vrot.slane %v1312, 5
    %v1315 = vor.u32 %v1311, %v1314
    %v1316 = vrot.slane %v1315, 4
    %v1318 = vshll.u32 %v1109, 16
    %v1320 = vrot.slane %v1318, 5
    %v1321 = vsel %vm399, %v1316, %v1320
    %v1323 = vshrl.u32 %v1110, 16
    %v1325 = vrot.slane %v1323, 4
    %v1326 = vshll.u32 %v1110, 16
    %v1328 = vrot.slane %v1326, 5
    %v1329 = vor.u32 %v1325, %v1328
    %v1330 = vrot.slane %v1329, 4
    %v1332 = vshll.u32 %v1111, 16
    %v1334 = vrot.slane %v1332, 5
    %v1335 = vsel %vm399, %v1330, %v1334
    %s1336 = scalar_lea.vmem %s1, 80
    %v1337 = vld [vmem:[%s1336] sm:$0xf]
    %v1338 = vld [vmem:[%s1336 + $0x4] sm:$0xf]
    %v1339 = vld [vmem:[%s1336 + $0x8] sm:$0xf]
    %v1340 = vld [vmem:[%s1336 + $0xc] sm:$0xf]
    %v1341 = vunpack.c.l.b16 %v1125
    %v1342 = vunpack.c.l.b16 %v1139
    %v1343 = vunpack.c.l.b16 %v1153
    %v1344 = vunpack.c.l.b16 %v1167
    %v1345 = vunpack.c.l.b16 %v1181
    %v1346 = vunpack.c.l.b16 %v1195
    %v1347 = vunpack.c.l.b16 %v1209
    %v1348 = vunpack.c.l.b16 %v1223
    %v1349 = vunpack.c.l.b16 %v1237
    %v1350 = vunpack.c.l.b16 %v1251
    %v1351 = vunpack.c.l.b16 %v1265
    %v1352 = vunpack.c.l.b16 %v1279
    %v1353 = vunpack.c.l.b16 %v1293
    %v1354 = vunpack.c.l.b16 %v1307
    %v1355 = vunpack.c.l.b16 %v1321
    %v1356 = vunpack.c.l.b16 %v1335
    %v1357 = vpack.c.b16 %v1342, %v1341
    %v1358 = vpack.c.b16 %v1344, %v1343
    %v1359 = vpack.c.b16 %v1346, %v1345
    %v1360 = vpack.c.b16 %v1348, %v1347
    %v1361 = vpack.c.b16 %v1350, %v1349
    %v1362 = vpack.c.b16 %v1352, %v1351
    %v1363 = vpack.c.b16 %v1354, %v1353
    %v1364 = vpack.c.b16 %v1356, %v1355
    %v1369 = vunpack.c.l.b16 %v1337
    %v1370 = vunpack.c.l.b16 %v1338
    %v1371 = vunpack.c.l.b16 %v1339
    %v1372 = vunpack.c.l.b16 %v1340
    %v1373 = vpack.c.b16 %v1370, %v1369
    %v1374 = vpack.c.b16 %v1372, %v1371
    %v1378 = vsel %vm166, %v1357, 0
    %v1381 = vsel %vm166, %v1358, 0
    %v1384 = vsel %vm166, %v1359, 0
    %v1387 = vsel %vm166, %v1360, 0
    %v1390 = vsel %vm166, %v1361, 0
    %v1393 = vsel %vm166, %v1362, 0
    %v1396 = vsel %vm166, %v1363, 0
    %v1399 = vsel %vm166, %v1364, 0
    %1401 = vmatpush.bf16.msra.mxu0 0
    %1402 = vmatpush.bf16.msra.mxu0 0
    %1403 = vmatpush.bf16.msra.mxu0 0
    %1404 = vmatpush.bf16.msra.mxu0 0
    %1405 = vmatpush.bf16.msra.mxu0 0
    %1406 = vmatpush.bf16.msra.mxu0 0
    %1407 = vmatpush.bf16.msra.mxu0 %v1374
    %1408 = vmatpush.bf16.msra.mxu0 %v1373
    %1409 = vmatmul.bf16.gmra.mxu0 %v1378
    %v1410 = vpop.f32.mrf.mxu0
    %v1411 = vadd.f32 0.0, %v1410
    %v1412 = vpop.f32.mrf.mxu0
    %v1413 = vadd.f32 0.0, %v1412
    %1414 = vmatmul.bf16.gmra.mxu0 %v1381
    %v1415 = vpop.f32.mrf.mxu0
    %v1416 = vadd.f32 0.0, %v1415
    %v1417 = vpop.f32.mrf.mxu0
    %v1418 = vadd.f32 0.0, %v1417
    %1419 = vmatmul.bf16.gmra.mxu0 %v1384
    %v1420 = vpop.f32.mrf.mxu0
    %v1421 = vadd.f32 0.0, %v1420
    %v1422 = vpop.f32.mrf.mxu0
    %v1423 = vadd.f32 0.0, %v1422
    %1424 = vmatmul.bf16.gmra.mxu0 %v1387
    %v1425 = vpop.f32.mrf.mxu0
    %v1426 = vadd.f32 0.0, %v1425
    %v1427 = vpop.f32.mrf.mxu0
    %v1428 = vadd.f32 0.0, %v1427
    %1429 = vmatmul.bf16.gmra.mxu0 %v1390
    %v1430 = vpop.f32.mrf.mxu0
    %v1431 = vadd.f32 0.0, %v1430
    %v1432 = vpop.f32.mrf.mxu0
    %v1433 = vadd.f32 0.0, %v1432
    %1434 = vmatmul.bf16.gmra.mxu0 %v1393
    %v1435 = vpop.f32.mrf.mxu0
    %v1436 = vadd.f32 0.0, %v1435
    %v1437 = vpop.f32.mrf.mxu0
    %v1438 = vadd.f32 0.0, %v1437
    %1439 = vmatmul.bf16.gmra.mxu0 %v1396
    %v1440 = vpop.f32.mrf.mxu0
    %v1441 = vadd.f32 0.0, %v1440
    %v1442 = vpop.f32.mrf.mxu0
    %v1443 = vadd.f32 0.0, %v1442
    %1444 = vmatmul.bf16.gmra.mxu0 %v1399
    %v1445 = vpop.f32.mrf.mxu0
    %v1446 = vadd.f32 0.0, %v1445
    %v1447 = vpop.f32.mrf.mxu0
    %v1448 = vadd.f32 0.0, %v1447
    %1449 = vdwg.mxu0
    %v1450 = vadd.f32 %v1064, %v1411
    %v1451 = vadd.f32 %v1065, %v1413
    %v1452 = vadd.f32 %v1066, %v1416
    %v1453 = vadd.f32 %v1067, %v1418
    %v1454 = vadd.f32 %v1068, %v1421
    %v1455 = vadd.f32 %v1069, %v1423
    %v1456 = vadd.f32 %v1070, %v1426
    %v1457 = vadd.f32 %v1071, %v1428
    %v1458 = vadd.f32 %v1072, %v1431
    %v1459 = vadd.f32 %v1073, %v1433
    %v1460 = vadd.f32 %v1074, %v1436
    %v1461 = vadd.f32 %v1075, %v1438
    %v1462 = vadd.f32 %v1076, %v1441
    %v1463 = vadd.f32 %v1077, %v1443
    %v1464 = vadd.f32 %v1078, %v1446
    %v1465 = vadd.f32 %v1079, %v1448
    %s1466 = scalar_lea.vmem %s0, 8
    %v1467 = vld [vmem:[%s1466] sm:$0xf]
    %v1468 = vld [vmem:[%s1466 + $0x8] sm:$0xf]
    %v1469 = vld [vmem:[%s1466 + $0x10] sm:$0xf]
    %v1470 = vld [vmem:[%s1466 + $0x18] sm:$0xf]
    %v1471 = vld [vmem:[%s1466 + $0x20] sm:$0xf]
    %v1472 = vld [vmem:[%s1466 + $0x28] sm:$0xf]
    %v1473 = vld [vmem:[%s1466 + $0x30] sm:$0xf]
    %v1474 = vld [vmem:[%s1466 + $0x38] sm:$0xf]
    %v1475 = vld [vmem:[%s1466 + $0x48] sm:$0xf]
    %v1476 = vld [vmem:[%s1466 + $0x50] sm:$0xf]
    %v1477 = vld [vmem:[%s1466 + $0x58] sm:$0xf]
    %v1478 = vld [vmem:[%s1466 + $0x60] sm:$0xf]
    %v1479 = vld [vmem:[%s1466 + $0x68] sm:$0xf]
    %v1480 = vld [vmem:[%s1466 + $0x70] sm:$0xf]
    %v1481 = vld [vmem:[%s1466 + $0x78] sm:$0xf]
    %v1482 = vld [vmem:[%s1466 + $0x80] sm:$0xf]
    %s1483 = scalar_lea.vmem %s1, 96
    %v1484 = vld [vmem:[%s1483] sm:$0xf]
    %v1485 = vld [vmem:[%s1483 + $0x4] sm:$0xf]
    %v1486 = vld [vmem:[%s1483 + $0x8] sm:$0xf]
    %v1487 = vld [vmem:[%s1483 + $0xc] sm:$0xf]
    %v1504 = vunpack.c.l.b16 %v1467
    %v1505 = vunpack.c.l.b16 %v1468
    %v1506 = vunpack.c.l.b16 %v1469
    %v1507 = vunpack.c.l.b16 %v1470
    %v1508 = vunpack.c.l.b16 %v1471
    %v1509 = vunpack.c.l.b16 %v1472
    %v1510 = vunpack.c.l.b16 %v1473
    %v1511 = vunpack.c.l.b16 %v1474
    %v1512 = vunpack.c.l.b16 %v1475
    %v1513 = vunpack.c.l.b16 %v1476
    %v1514 = vunpack.c.l.b16 %v1477
    %v1515 = vunpack.c.l.b16 %v1478
    %v1516 = vunpack.c.l.b16 %v1479
    %v1517 = vunpack.c.l.b16 %v1480
    %v1518 = vunpack.c.l.b16 %v1481
    %v1519 = vunpack.c.l.b16 %v1482
    %v1520 = vpack.c.b16 %v1505, %v1504
    %v1521 = vpack.c.b16 %v1507, %v1506
    %v1522 = vpack.c.b16 %v1509, %v1508
    %v1523 = vpack.c.b16 %v1511, %v1510
    %v1524 = vpack.c.b16 %v1513, %v1512
    %v1525 = vpack.c.b16 %v1515, %v1514
    %v1526 = vpack.c.b16 %v1517, %v1516
    %v1527 = vpack.c.b16 %v1519, %v1518
    %v1532 = vunpack.c.l.b16 %v1484
    %v1533 = vunpack.c.l.b16 %v1485
    %v1534 = vunpack.c.l.b16 %v1486
    %v1535 = vunpack.c.l.b16 %v1487
    %v1536 = vpack.c.b16 %v1533, %v1532
    %v1537 = vpack.c.b16 %v1535, %v1534
    %v1541 = vsel %vm166, %v1520, 0
    %v1544 = vsel %vm166, %v1521, 0
    %v1547 = vsel %vm166, %v1522, 0
    %v1550 = vsel %vm166, %v1523, 0
    %v1553 = vsel %vm166, %v1524, 0
    %v1556 = vsel %vm166, %v1525, 0
    %v1559 = vsel %vm166, %v1526, 0
    %v1562 = vsel %vm166, %v1527, 0
    %1564 = vmatpush.bf16.msra.mxu0 0
    %1565 = vmatpush.bf16.msra.mxu0 0
    %1566 = vmatpush.bf16.msra.mxu0 0
    %1567 = vmatpush.bf16.msra.mxu0 0
    %1568 = vmatpush.bf16.msra.mxu0 0
    %1569 = vmatpush.bf16.msra.mxu0 0
    %1570 = vmatpush.bf16.msra.mxu0 %v1537
    %1571 = vmatpush.bf16.msra.mxu0 %v1536
    %1572 = vmatmul.bf16.gmra.mxu0 %v1541
    %v1573 = vpop.f32.mrf.mxu0
    %v1574 = vadd.f32 0.0, %v1573
    %v1575 = vpop.f32.mrf.mxu0
    %v1576 = vadd.f32 0.0, %v1575
    %1577 = vmatmul.bf16.gmra.mxu0 %v1544
    %v1578 = vpop.f32.mrf.mxu0
    %v1579 = vadd.f32 0.0, %v1578
    %v1580 = vpop.f32.mrf.mxu0
    %v1581 = vadd.f32 0.0, %v1580
    %1582 = vmatmul.bf16.gmra.mxu0 %v1547
    %v1583 = vpop.f32.mrf.mxu0
    %v1584 = vadd.f32 0.0, %v1583
    %v1585 = vpop.f32.mrf.mxu0
    %v1586 = vadd.f32 0.0, %v1585
    %1587 = vmatmul.bf16.gmra.mxu0 %v1550
    %v1588 = vpop.f32.mrf.mxu0
    %v1589 = vadd.f32 0.0, %v1588
    %v1590 = vpop.f32.mrf.mxu0
    %v1591 = vadd.f32 0.0, %v1590
    %1592 = vmatmul.bf16.gmra.mxu0 %v1553
    %v1593 = vpop.f32.mrf.mxu0
    %v1594 = vadd.f32 0.0, %v1593
    %v1595 = vpop.f32.mrf.mxu0
    %v1596 = vadd.f32 0.0, %v1595
    %1597 = vmatmul.bf16.gmra.mxu0 %v1556
    %v1598 = vpop.f32.mrf.mxu0
    %v1599 = vadd.f32 0.0, %v1598
    %v1600 = vpop.f32.mrf.mxu0
    %v1601 = vadd.f32 0.0, %v1600
    %1602 = vmatmul.bf16.gmra.mxu0 %v1559
    %v1603 = vpop.f32.mrf.mxu0
    %v1604 = vadd.f32 0.0, %v1603
    %v1605 = vpop.f32.mrf.mxu0
    %v1606 = vadd.f32 0.0, %v1605
    %1607 = vmatmul.bf16.gmra.mxu0 %v1562
    %v1608 = vpop.f32.mrf.mxu0
    %v1609 = vadd.f32 0.0, %v1608
    %v1610 = vpop.f32.mrf.mxu0
    %v1611 = vadd.f32 0.0, %v1610
    %1612 = vdwg.mxu0
    %v1613 = vadd.f32 %v1450, %v1574
    %v1614 = vadd.f32 %v1451, %v1576
    %v1615 = vadd.f32 %v1452, %v1579
    %v1616 = vadd.f32 %v1453, %v1581
    %v1617 = vadd.f32 %v1454, %v1584
    %v1618 = vadd.f32 %v1455, %v1586
    %v1619 = vadd.f32 %v1456, %v1589
    %v1620 = vadd.f32 %v1457, %v1591
    %v1621 = vadd.f32 %v1458, %v1594
    %v1622 = vadd.f32 %v1459, %v1596
    %v1623 = vadd.f32 %v1460, %v1599
    %v1624 = vadd.f32 %v1461, %v1601
    %v1625 = vadd.f32 %v1462, %v1604
    %v1626 = vadd.f32 %v1463, %v1606
    %v1627 = vadd.f32 %v1464, %v1609
    %v1628 = vadd.f32 %v1465, %v1611
    %s1629 = scalar_lea.vmem %s0, 152
    %v1630 = vld [vmem:[%s1629] sm:$0xf]
    %v1631 = vld [vmem:[%s1629 + $0x8] sm:$0xf]
    %v1632 = vld [vmem:[%s1629 + $0x10] sm:$0xf]
    %v1633 = vld [vmem:[%s1629 + $0x18] sm:$0xf]
    %v1634 = vld [vmem:[%s1629 + $0x20] sm:$0xf]
    %v1635 = vld [vmem:[%s1629 + $0x28] sm:$0xf]
    %v1636 = vld [vmem:[%s1629 + $0x30] sm:$0xf]
    %v1637 = vld [vmem:[%s1629 + $0x38] sm:$0xf]
    %v1638 = vld [vmem:[%s1629 + $0x48] sm:$0xf]
    %v1639 = vld [vmem:[%s1629 + $0x50] sm:$0xf]
    %v1640 = vld [vmem:[%s1629 + $0x58] sm:$0xf]
    %v1641 = vld [vmem:[%s1629 + $0x60] sm:$0xf]
    %v1642 = vld [vmem:[%s1629 + $0x68] sm:$0xf]
    %v1643 = vld [vmem:[%s1629 + $0x70] sm:$0xf]
    %v1644 = vld [vmem:[%s1629 + $0x78] sm:$0xf]
    %v1645 = vld [vmem:[%s1629 + $0x80] sm:$0xf]
    %s1646 = scalar_lea.vmem %s1, 112
    %v1647 = vld [vmem:[%s1646] sm:$0xf]
    %v1648 = vld [vmem:[%s1646 + $0x4] sm:$0xf]
    %v1649 = vld [vmem:[%s1646 + $0x8] sm:$0xf]
    %v1650 = vld [vmem:[%s1646 + $0xc] sm:$0xf]
    %v1667 = vunpack.c.l.b16 %v1630
    %v1668 = vunpack.c.l.b16 %v1631
    %v1669 = vunpack.c.l.b16 %v1632
    %v1670 = vunpack.c.l.b16 %v1633
    %v1671 = vunpack.c.l.b16 %v1634
    %v1672 = vunpack.c.l.b16 %v1635
    %v1673 = vunpack.c.l.b16 %v1636
    %v1674 = vunpack.c.l.b16 %v1637
    %v1675 = vunpack.c.l.b16 %v1638
    %v1676 = vunpack.c.l.b16 %v1639
    %v1677 = vunpack.c.l.b16 %v1640
    %v1678 = vunpack.c.l.b16 %v1641
    %v1679 = vunpack.c.l.b16 %v1642
    %v1680 = vunpack.c.l.b16 %v1643
    %v1681 = vunpack.c.l.b16 %v1644
    %v1682 = vunpack.c.l.b16 %v1645
    %v1683 = vpack.c.b16 %v1668, %v1667
    %v1684 = vpack.c.b16 %v1670, %v1669
    %v1685 = vpack.c.b16 %v1672, %v1671
    %v1686 = vpack.c.b16 %v1674, %v1673
    %v1687 = vpack.c.b16 %v1676, %v1675
    %v1688 = vpack.c.b16 %v1678, %v1677
    %v1689 = vpack.c.b16 %v1680, %v1679
    %v1690 = vpack.c.b16 %v1682, %v1681
    %v1695 = vunpack.c.l.b16 %v1647
    %v1696 = vunpack.c.l.b16 %v1648
    %v1697 = vunpack.c.l.b16 %v1649
    %v1698 = vunpack.c.l.b16 %v1650
    %v1699 = vpack.c.b16 %v1696, %v1695
    %v1700 = vpack.c.b16 %v1698, %v1697
    %v1704 = vsel %vm166, %v1683, 0
    %v1707 = vsel %vm166, %v1684, 0
    %v1710 = vsel %vm166, %v1685, 0
    %v1713 = vsel %vm166, %v1686, 0
    %v1716 = vsel %vm166, %v1687, 0
    %v1719 = vsel %vm166, %v1688, 0
    %v1722 = vsel %vm166, %v1689, 0
    %v1725 = vsel %vm166, %v1690, 0
    %1727 = vmatpush.bf16.msra.mxu0 0
    %1728 = vmatpush.bf16.msra.mxu0 0
    %1729 = vmatpush.bf16.msra.mxu0 0
    %1730 = vmatpush.bf16.msra.mxu0 0
    %1731 = vmatpush.bf16.msra.mxu0 0
    %1732 = vmatpush.bf16.msra.mxu0 0
    %1733 = vmatpush.bf16.msra.mxu0 %v1700
    %1734 = vmatpush.bf16.msra.mxu0 %v1699
    %1735 = vmatmul.bf16.gmra.mxu0 %v1704
    %v1736 = vpop.f32.mrf.mxu0
    %v1737 = vadd.f32 0.0, %v1736
    %v1738 = vpop.f32.mrf.mxu0
    %v1739 = vadd.f32 0.0, %v1738
    %1740 = vmatmul.bf16.gmra.mxu0 %v1707
    %v1741 = vpop.f32.mrf.mxu0
    %v1742 = vadd.f32 0.0, %v1741
    %v1743 = vpop.f32.mrf.mxu0
    %v1744 = vadd.f32 0.0, %v1743
    %1745 = vmatmul.bf16.gmra.mxu0 %v1710
    %v1746 = vpop.f32.mrf.mxu0
    %v1747 = vadd.f32 0.0, %v1746
    %v1748 = vpop.f32.mrf.mxu0
    %v1749 = vadd.f32 0.0, %v1748
    %1750 = vmatmul.bf16.gmra.mxu0 %v1713
    %v1751 = vpop.f32.mrf.mxu0
    %v1752 = vadd.f32 0.0, %v1751
    %v1753 = vpop.f32.mrf.mxu0
    %v1754 = vadd.f32 0.0, %v1753
    %1755 = vmatmul.bf16.gmra.mxu0 %v1716
    %v1756 = vpop.f32.mrf.mxu0
    %v1757 = vadd.f32 0.0, %v1756
    %v1758 = vpop.f32.mrf.mxu0
    %v1759 = vadd.f32 0.0, %v1758
    %1760 = vmatmul.bf16.gmra.mxu0 %v1719
    %v1761 = vpop.f32.mrf.mxu0
    %v1762 = vadd.f32 0.0, %v1761
    %v1763 = vpop.f32.mrf.mxu0
    %v1764 = vadd.f32 0.0, %v1763
    %1765 = vmatmul.bf16.gmra.mxu0 %v1722
    %v1766 = vpop.f32.mrf.mxu0
    %v1767 = vadd.f32 0.0, %v1766
    %v1768 = vpop.f32.mrf.mxu0
    %v1769 = vadd.f32 0.0, %v1768
    %1770 = vmatmul.bf16.gmra.mxu0 %v1725
    %v1771 = vpop.f32.mrf.mxu0
    %v1772 = vadd.f32 0.0, %v1771
    %v1773 = vpop.f32.mrf.mxu0
    %v1774 = vadd.f32 0.0, %v1773
    %1775 = vdwg.mxu0
    %v1776 = vadd.f32 %v1613, %v1737
    %v1777 = vadd.f32 %v1614, %v1739
    %v1778 = vadd.f32 %v1615, %v1742
    %v1779 = vadd.f32 %v1616, %v1744
    %v1780 = vadd.f32 %v1617, %v1747
    %v1781 = vadd.f32 %v1618, %v1749
    %v1782 = vadd.f32 %v1619, %v1752
    %v1783 = vadd.f32 %v1620, %v1754
    %v1784 = vadd.f32 %v1621, %v1757
    %v1785 = vadd.f32 %v1622, %v1759
    %v1786 = vadd.f32 %v1623, %v1762
    %v1787 = vadd.f32 %v1624, %v1764
    %v1788 = vadd.f32 %v1625, %v1767
    %v1789 = vadd.f32 %v1626, %v1769
    %v1790 = vadd.f32 %v1627, %v1772
    %v1791 = vadd.f32 %v1628, %v1774
    %v1792 = vld [vmem:[%s1466] sm:$0xf]
    %v1793 = vld [vmem:[%s1466 + $0x4] sm:$0x1]
    %v1794 = vld [vmem:[%s1466 + $0x8] sm:$0xf]
    %v1795 = vld [vmem:[%s1466 + $0xc] sm:$0x1]
    %v1796 = vld [vmem:[%s1466 + $0x10] sm:$0xf]
    %v1797 = vld [vmem:[%s1466 + $0x14] sm:$0x1]
    %v1798 = vld [vmem:[%s1466 + $0x18] sm:$0xf]
    %v1799 = vld [vmem:[%s1466 + $0x1c] sm:$0x1]
    %v1800 = vld [vmem:[%s1466 + $0x20] sm:$0xf]
    %v1801 = vld [vmem:[%s1466 + $0x24] sm:$0x1]
    %v1802 = vld [vmem:[%s1466 + $0x28] sm:$0xf]
    %v1803 = vld [vmem:[%s1466 + $0x2c] sm:$0x1]
    %v1804 = vld [vmem:[%s1466 + $0x30] sm:$0xf]
    %v1805 = vld [vmem:[%s1466 + $0x34] sm:$0x1]
    %v1806 = vld [vmem:[%s1466 + $0x38] sm:$0xf]
    %v1807 = vld [vmem:[%s1466 + $0x3c] sm:$0x1]
    %v1808 = vld [vmem:[%s1466 + $0x48] sm:$0xf]
    %v1809 = vld [vmem:[%s1466 + $0x4c] sm:$0x1]
    %v1810 = vld [vmem:[%s1466 + $0x50] sm:$0xf]
    %v1811 = vld [vmem:[%s1466 + $0x54] sm:$0x1]
    %v1812 = vld [vmem:[%s1466 + $0x58] sm:$0xf]
    %v1813 = vld [vmem:[%s1466 + $0x5c] sm:$0x1]
    %v1814 = vld [vmem:[%s1466 + $0x60] sm:$0xf]
    %v1815 = vld [vmem:[%s1466 + $0x64] sm:$0x1]
    %v1816 = vld [vmem:[%s1466 + $0x68] sm:$0xf]
    %v1817 = vld [vmem:[%s1466 + $0x6c] sm:$0x1]
    %v1818 = vld [vmem:[%s1466 + $0x70] sm:$0xf]
    %v1819 = vld [vmem:[%s1466 + $0x74] sm:$0x1]
    %v1820 = vld [vmem:[%s1466 + $0x78] sm:$0xf]
    %v1821 = vld [vmem:[%s1466 + $0x7c] sm:$0x1]
    %v1822 = vld [vmem:[%s1466 + $0x80] sm:$0xf]
    %v1823 = vld [vmem:[%s1466 + $0x84] sm:$0x1]
    %v1825 = vshrl.u32 %v1792, 16
    %v1827 = vrot.slane %v1825, 4
    %v1828 = vshll.u32 %v1792, 16
    %v1830 = vrot.slane %v1828, 5
    %v1831 = vor.u32 %v1827, %v1830
    %v1832 = vrot.slane %v1831, 4
    %v1834 = vshll.u32 %v1793, 16
    %v1836 = vrot.slane %v1834, 5
    %v1837 = vsel %vm399, %v1832, %v1836
    %v1839 = vshrl.u32 %v1794, 16
    %v1841 = vrot.slane %v1839, 4
    %v1842 = vshll.u32 %v1794, 16
    %v1844 = vrot.slane %v1842, 5
    %v1845 = vor.u32 %v1841, %v1844
    %v1846 = vrot.slane %v1845, 4
    %v1848 = vshll.u32 %v1795, 16
    %v1850 = vrot.slane %v1848, 5
    %v1851 = vsel %vm399, %v1846, %v1850
    %v1853 = vshrl.u32 %v1796, 16
    %v1855 = vrot.slane %v1853, 4
    %v1856 = vshll.u32 %v1796, 16
    %v1858 = vrot.slane %v1856, 5
    %v1859 = vor.u32 %v1855, %v1858
    %v1860 = vrot.slane %v1859, 4
    %v1862 = vshll.u32 %v1797, 16
    %v1864 = vrot.slane %v1862, 5
    %v1865 = vsel %vm399, %v1860, %v1864
    %v1867 = vshrl.u32 %v1798, 16
    %v1869 = vrot.slane %v1867, 4
    %v1870 = vshll.u32 %v1798, 16
    %v1872 = vrot.slane %v1870, 5
    %v1873 = vor.u32 %v1869, %v1872
    %v1874 = vrot.slane %v1873, 4
    %v1876 = vshll.u32 %v1799, 16
    %v1878 = vrot.slane %v1876, 5
    %v1879 = vsel %vm399, %v1874, %v1878
    %v1881 = vshrl.u32 %v1800, 16
    %v1883 = vrot.slane %v1881, 4
    %v1884 = vshll.u32 %v1800, 16
    %v1886 = vrot.slane %v1884, 5
    %v1887 = vor.u32 %v1883, %v1886
    %v1888 = vrot.slane %v1887, 4
    %v1890 = vshll.u32 %v1801, 16
    %v1892 = vrot.slane %v1890, 5
    %v1893 = vsel %vm399, %v1888, %v1892
    %v1895 = vshrl.u32 %v1802, 16
    %v1897 = vrot.slane %v1895, 4
    %v1898 = vshll.u32 %v1802, 16
    %v1900 = vrot.slane %v1898, 5
    %v1901 = vor.u32 %v1897, %v1900
    %v1902 = vrot.slane %v1901, 4
    %v1904 = vshll.u32 %v1803, 16
    %v1906 = vrot.slane %v1904, 5
    %v1907 = vsel %vm399, %v1902, %v1906
    %v1909 = vshrl.u32 %v1804, 16
    %v1911 = vrot.slane %v1909, 4
    %v1912 = vshll.u32 %v1804, 16
    %v1914 = vrot.slane %v1912, 5
    %v1915 = vor.u32 %v1911, %v1914
    %v1916 = vrot.slane %v1915, 4
    %v1918 = vshll.u32 %v1805, 16
    %v1920 = vrot.slane %v1918, 5
    %v1921 = vsel %vm399, %v1916, %v1920
    %v1923 = vshrl.u32 %v1806, 16
    %v1925 = vrot.slane %v1923, 4
    %v1926 = vshll.u32 %v1806, 16
    %v1928 = vrot.slane %v1926, 5
    %v1929 = vor.u32 %v1925, %v1928
    %v1930 = vrot.slane %v1929, 4
    %v1932 = vshll.u32 %v1807, 16
    %v1934 = vrot.slane %v1932, 5
    %v1935 = vsel %vm399, %v1930, %v1934
    %v1937 = vshrl.u32 %v1808, 16
    %v1939 = vrot.slane %v1937, 4
    %v1940 = vshll.u32 %v1808, 16
    %v1942 = vrot.slane %v1940, 5
    %v1943 = vor.u32 %v1939, %v1942
    %v1944 = vrot.slane %v1943, 4
    %v1946 = vshll.u32 %v1809, 16
    %v1948 = vrot.slane %v1946, 5
    %v1949 = vsel %vm399, %v1944, %v1948
    %v1951 = vshrl.u32 %v1810, 16
    %v1953 = vrot.slane %v1951, 4
    %v1954 = vshll.u32 %v1810, 16
    %v1956 = vrot.slane %v1954, 5
    %v1957 = vor.u32 %v1953, %v1956
    %v1958 = vrot.slane %v1957, 4
    %v1960 = vshll.u32 %v1811, 16
    %v1962 = vrot.slane %v1960, 5
    %v1963 = vsel %vm399, %v1958, %v1962
    %v1965 = vshrl.u32 %v1812, 16
    %v1967 = vrot.slane %v1965, 4
    %v1968 = vshll.u32 %v1812, 16
    %v1970 = vrot.slane %v1968, 5
    %v1971 = vor.u32 %v1967, %v1970
    %v1972 = vrot.slane %v1971, 4
    %v1974 = vshll.u32 %v1813, 16
    %v1976 = vrot.slane %v1974, 5
    %v1977 = vsel %vm399, %v1972, %v1976
    %v1979 = vshrl.u32 %v1814, 16
    %v1981 = vrot.slane %v1979, 4
    %v1982 = vshll.u32 %v1814, 16
    %v1984 = vrot.slane %v1982, 5
    %v1985 = vor.u32 %v1981, %v1984
    %v1986 = vrot.slane %v1985, 4
    %v1988 = vshll.u32 %v1815, 16
    %v1990 = vrot.slane %v1988, 5
    %v1991 = vsel %vm399, %v1986, %v1990
    %v1993 = vshrl.u32 %v1816, 16
    %v1995 = vrot.slane %v1993, 4
    %v1996 = vshll.u32 %v1816, 16
    %v1998 = vrot.slane %v1996, 5
    %v1999 = vor.u32 %v1995, %v1998
    %v2000 = vrot.slane %v1999, 4
    %v2002 = vshll.u32 %v1817, 16
    %v2004 = vrot.slane %v2002, 5
    %v2005 = vsel %vm399, %v2000, %v2004
    %v2007 = vshrl.u32 %v1818, 16
    %v2009 = vrot.slane %v2007, 4
    %v2010 = vshll.u32 %v1818, 16
    %v2012 = vrot.slane %v2010, 5
    %v2013 = vor.u32 %v2009, %v2012
    %v2014 = vrot.slane %v2013, 4
    %v2016 = vshll.u32 %v1819, 16
    %v2018 = vrot.slane %v2016, 5
    %v2019 = vsel %vm399, %v2014, %v2018
    %v2021 = vshrl.u32 %v1820, 16
    %v2023 = vrot.slane %v2021, 4
    %v2024 = vshll.u32 %v1820, 16
    %v2026 = vrot.slane %v2024, 5
    %v2027 = vor.u32 %v2023, %v2026
    %v2028 = vrot.slane %v2027, 4
    %v2030 = vshll.u32 %v1821, 16
    %v2032 = vrot.slane %v2030, 5
    %v2033 = vsel %vm399, %v2028, %v2032
    %v2035 = vshrl.u32 %v1822, 16
    %v2037 = vrot.slane %v2035, 4
    %v2038 = vshll.u32 %v1822, 16
    %v2040 = vrot.slane %v2038, 5
    %v2041 = vor.u32 %v2037, %v2040
    %v2042 = vrot.slane %v2041, 4
    %v2044 = vshll.u32 %v1823, 16
    %v2046 = vrot.slane %v2044, 5
    %v2047 = vsel %vm399, %v2042, %v2046
    %s2048 = scalar_lea.vmem %s1, 128
    %v2049 = vld [vmem:[%s2048] sm:$0xf]
    %v2050 = vld [vmem:[%s2048 + $0x4] sm:$0xf]
    %v2051 = vld [vmem:[%s2048 + $0x8] sm:$0xf]
    %v2052 = vld [vmem:[%s2048 + $0xc] sm:$0xf]
    %v2053 = vunpack.c.l.b16 %v1837
    %v2054 = vunpack.c.l.b16 %v1851
    %v2055 = vunpack.c.l.b16 %v1865
    %v2056 = vunpack.c.l.b16 %v1879
    %v2057 = vunpack.c.l.b16 %v1893
    %v2058 = vunpack.c.l.b16 %v1907
    %v2059 = vunpack.c.l.b16 %v1921
    %v2060 = vunpack.c.l.b16 %v1935
    %v2061 = vunpack.c.l.b16 %v1949
    %v2062 = vunpack.c.l.b16 %v1963
    %v2063 = vunpack.c.l.b16 %v1977
    %v2064 = vunpack.c.l.b16 %v1991
    %v2065 = vunpack.c.l.b16 %v2005
    %v2066 = vunpack.c.l.b16 %v2019
    %v2067 = vunpack.c.l.b16 %v2033
    %v2068 = vunpack.c.l.b16 %v2047
    %v2069 = vpack.c.b16 %v2054, %v2053
    %v2070 = vpack.c.b16 %v2056, %v2055
    %v2071 = vpack.c.b16 %v2058, %v2057
    %v2072 = vpack.c.b16 %v2060, %v2059
    %v2073 = vpack.c.b16 %v2062, %v2061
    %v2074 = vpack.c.b16 %v2064, %v2063
    %v2075 = vpack.c.b16 %v2066, %v2065
    %v2076 = vpack.c.b16 %v2068, %v2067
    %v2081 = vunpack.c.l.b16 %v2049
    %v2082 = vunpack.c.l.b16 %v2050
    %v2083 = vunpack.c.l.b16 %v2051
    %v2084 = vunpack.c.l.b16 %v2052
    %v2085 = vpack.c.b16 %v2082, %v2081
    %v2086 = vpack.c.b16 %v2084, %v2083
    %v2090 = vsel %vm166, %v2069, 0
    %v2093 = vsel %vm166, %v2070, 0
    %v2096 = vsel %vm166, %v2071, 0
    %v2099 = vsel %vm166, %v2072, 0
    %v2102 = vsel %vm166, %v2073, 0
    %v2105 = vsel %vm166, %v2074, 0
    %v2108 = vsel %vm166, %v2075, 0
    %v2111 = vsel %vm166, %v2076, 0
    %2113 = vmatpush.bf16.msra.mxu0 0
    %2114 = vmatpush.bf16.msra.mxu0 0
    %2115 = vmatpush.bf16.msra.mxu0 0
    %2116 = vmatpush.bf16.msra.mxu0 0
    %2117 = vmatpush.bf16.msra.mxu0 0
    %2118 = vmatpush.bf16.msra.mxu0 0
    %2119 = vmatpush.bf16.msra.mxu0 %v2086
    %2120 = vmatpush.bf16.msra.mxu0 %v2085
    %2121 = vmatmul.bf16.gmra.mxu0 %v2090
    %v2122 = vpop.f32.mrf.mxu0
    %v2123 = vadd.f32 0.0, %v2122
    %v2124 = vpop.f32.mrf.mxu0
    %v2125 = vadd.f32 0.0, %v2124
    %2126 = vmatmul.bf16.gmra.mxu0 %v2093
    %v2127 = vpop.f32.mrf.mxu0
    %v2128 = vadd.f32 0.0, %v2127
    %v2129 = vpop.f32.mrf.mxu0
    %v2130 = vadd.f32 0.0, %v2129
    %2131 = vmatmul.bf16.gmra.mxu0 %v2096
    %v2132 = vpop.f32.mrf.mxu0
    %v2133 = vadd.f32 0.0, %v2132
    %v2134 = vpop.f32.mrf.mxu0
    %v2135 = vadd.f32 0.0, %v2134
    %2136 = vmatmul.bf16.gmra.mxu0 %v2099
    %v2137 = vpop.f32.mrf.mxu0
    %v2138 = vadd.f32 0.0, %v2137
    %v2139 = vpop.f32.mrf.mxu0
    %v2140 = vadd.f32 0.0, %v2139
    %2141 = vmatmul.bf16.gmra.mxu0 %v2102
    %v2142 = vpop.f32.mrf.mxu0
    %v2143 = vadd.f32 0.0, %v2142
    %v2144 = vpop.f32.mrf.mxu0
    %v2145 = vadd.f32 0.0, %v2144
    %2146 = vmatmul.bf16.gmra.mxu0 %v2105
    %v2147 = vpop.f32.mrf.mxu0
    %v2148 = vadd.f32 0.0, %v2147
    %v2149 = vpop.f32.mrf.mxu0
    %v2150 = vadd.f32 0.0, %v2149
    %2151 = vmatmul.bf16.gmra.mxu0 %v2108
    %v2152 = vpop.f32.mrf.mxu0
    %v2153 = vadd.f32 0.0, %v2152
    %v2154 = vpop.f32.mrf.mxu0
    %v2155 = vadd.f32 0.0, %v2154
    %2156 = vmatmul.bf16.gmra.mxu0 %v2111
    %v2157 = vpop.f32.mrf.mxu0
    %v2158 = vadd.f32 0.0, %v2157
    %v2159 = vpop.f32.mrf.mxu0
    %v2160 = vadd.f32 0.0, %v2159
    %2161 = vdwg.mxu0
    %v2162 = vadd.f32 %v1776, %v2123
    %v2163 = vadd.f32 %v1777, %v2125
    %v2164 = vadd.f32 %v1778, %v2128
    %v2165 = vadd.f32 %v1779, %v2130
    %v2166 = vadd.f32 %v1780, %v2133
    %v2167 = vadd.f32 %v1781, %v2135
    %v2168 = vadd.f32 %v1782, %v2138
    %v2169 = vadd.f32 %v1783, %v2140
    %v2170 = vadd.f32 %v1784, %v2143
    %v2171 = vadd.f32 %v1785, %v2145
    %v2172 = vadd.f32 %v1786, %v2148
    %v2173 = vadd.f32 %v1787, %v2150
    %v2174 = vadd.f32 %v1788, %v2153
    %v2175 = vadd.f32 %v1789, %v2155
    %v2176 = vadd.f32 %v1790, %v2158
    %v2177 = vadd.f32 %v1791, %v2160
    %v2178 = vld [vmem:[%s2] sm:$0x1]
    %v2180 = vperm.slane %v2178, 0
    %v2182 = vadd.f32 %v2162, %v2180
    %v2183 = vadd.f32 %v2163, %v2180
    %v2184 = vadd.f32 %v2164, %v2180
    %v2185 = vadd.f32 %v2165, %v2180
    %v2186 = vadd.f32 %v2166, %v2180
    %v2187 = vadd.f32 %v2167, %v2180
    %v2188 = vadd.f32 %v2168, %v2180
    %v2189 = vadd.f32 %v2169, %v2180
    %v2190 = vadd.f32 %v2170, %v2180
    %v2191 = vadd.f32 %v2171, %v2180
    %v2192 = vadd.f32 %v2172, %v2180
    %v2193 = vadd.f32 %v2173, %v2180
    %v2194 = vadd.f32 %v2174, %v2180
    %v2195 = vadd.f32 %v2175, %v2180
    %v2196 = vadd.f32 %v2176, %v2180
    %v2197 = vadd.f32 %v2177, %v2180
    %v2198 = vmax.f32 %v2182, 0.0
    %v2199 = vmax.f32 %v2183, 0.0
    %v2200 = vmax.f32 %v2184, 0.0
    %v2201 = vmax.f32 %v2185, 0.0
    %v2202 = vmax.f32 %v2186, 0.0
    %v2203 = vmax.f32 %v2187, 0.0
    %v2204 = vmax.f32 %v2188, 0.0
    %v2205 = vmax.f32 %v2189, 0.0
    %v2206 = vmax.f32 %v2190, 0.0
    %v2207 = vmax.f32 %v2191, 0.0
    %v2208 = vmax.f32 %v2192, 0.0
    %v2209 = vmax.f32 %v2193, 0.0
    %v2210 = vmax.f32 %v2194, 0.0
    %v2211 = vmax.f32 %v2195, 0.0
    %v2212 = vmax.f32 %v2196, 0.0
    %v2213 = vmax.f32 %v2197, 0.0
    %v2214 = vpack.c.bf16 %v2198, %v2198
    %v2215 = vpack.c.bf16 %v2199, %v2199
    %v2216 = vpack.c.bf16 %v2200, %v2200
    %v2217 = vpack.c.bf16 %v2201, %v2201
    %v2218 = vpack.c.bf16 %v2202, %v2202
    %v2219 = vpack.c.bf16 %v2203, %v2203
    %v2220 = vpack.c.bf16 %v2204, %v2204
    %v2221 = vpack.c.bf16 %v2205, %v2205
    %v2222 = vpack.c.bf16 %v2206, %v2206
    %v2223 = vpack.c.bf16 %v2207, %v2207
    %v2224 = vpack.c.bf16 %v2208, %v2208
    %v2225 = vpack.c.bf16 %v2209, %v2209
    %v2226 = vpack.c.bf16 %v2210, %v2210
    %v2227 = vpack.c.bf16 %v2211, %v2211
    %v2228 = vpack.c.bf16 %v2212, %v2212
    %v2229 = vpack.c.bf16 %v2213, %v2213
    %v2231 = vshrl.u32 %v2214, 16
    %v2233 = vrot.slane %v2231, 7
    %v2234 = vshll.u32 %v2214, 16
    %v2236 = vor.u32 %v2233, %v2234
    %v2237 = vrot.slane %v2233, 4
    %v2239 = vshrl.u32 %v2215, 16
    %v2241 = vrot.slane %v2239, 7
    %v2242 = vshll.u32 %v2215, 16
    %v2244 = vor.u32 %v2241, %v2242
    %v2245 = vrot.slane %v2241, 4
    %v2247 = vshrl.u32 %v2216, 16
    %v2249 = vrot.slane %v2247, 7
    %v2250 = vshll.u32 %v2216, 16
    %v2252 = vor.u32 %v2249, %v2250
    %v2253 = vrot.slane %v2249, 4
    %v2255 = vshrl.u32 %v2217, 16
    %v2257 = vrot.slane %v2255, 7
    %v2258 = vshll.u32 %v2217, 16
    %v2260 = vor.u32 %v2257, %v2258
    %v2261 = vrot.slane %v2257, 4
    %v2263 = vshrl.u32 %v2218, 16
    %v2265 = vrot.slane %v2263, 7
    %v2266 = vshll.u32 %v2218, 16
    %v2268 = vor.u32 %v2265, %v2266
    %v2269 = vrot.slane %v2265, 4
    %v2271 = vshrl.u32 %v2219, 16
    %v2273 = vrot.slane %v2271, 7
    %v2274 = vshll.u32 %v2219, 16
    %v2276 = vor.u32 %v2273, %v2274
    %v2277 = vrot.slane %v2273, 4
    %v2279 = vshrl.u32 %v2220, 16
    %v2281 = vrot.slane %v2279, 7
    %v2282 = vshll.u32 %v2220, 16
    %v2284 = vor.u32 %v2281, %v2282
    %v2285 = vrot.slane %v2281, 4
    %v2287 = vshrl.u32 %v2221, 16
    %v2289 = vrot.slane %v2287, 7
    %v2290 = vshll.u32 %v2221, 16
    %v2292 = vor.u32 %v2289, %v2290
    %v2293 = vrot.slane %v2289, 4
    %v2295 = vshrl.u32 %v2222, 16
    %v2297 = vrot.slane %v2295, 7
    %v2298 = vshll.u32 %v2222, 16
    %v2300 = vor.u32 %v2297, %v2298
    %v2301 = vrot.slane %v2297, 4
    %v2303 = vshrl.u32 %v2223, 16
    %v2305 = vrot.slane %v2303, 7
    %v2306 = vshll.u32 %v2223, 16
    %v2308 = vor.u32 %v2305, %v2306
    %v2309 = vrot.slane %v2305, 4
    %v2311 = vshrl.u32 %v2224, 16
    %v2313 = vrot.slane %v2311, 7
    %v2314 = vshll.u32 %v2224, 16
    %v2316 = vor.u32 %v2313, %v2314
    %v2317 = vrot.slane %v2313, 4
    %v2319 = vshrl.u32 %v2225, 16
    %v2321 = vrot.slane %v2319, 7
    %v2322 = vshll.u32 %v2225, 16
    %v2324 = vor.u32 %v2321, %v2322
    %v2325 = vrot.slane %v2321, 4
    %v2327 = vshrl.u32 %v2226, 16
    %v2329 = vrot.slane %v2327, 7
    %v2330 = vshll.u32 %v2226, 16
    %v2332 = vor.u32 %v2329, %v2330
    %v2333 = vrot.slane %v2329, 4
    %v2335 = vshrl.u32 %v2227, 16
    %v2337 = vrot.slane %v2335, 7
    %v2338 = vshll.u32 %v2227, 16
    %v2340 = vor.u32 %v2337, %v2338
    %v2341 = vrot.slane %v2337, 4
    %v2343 = vshrl.u32 %v2228, 16
    %v2345 = vrot.slane %v2343, 7
    %v2346 = vshll.u32 %v2228, 16
    %v2348 = vor.u32 %v2345, %v2346
    %v2349 = vrot.slane %v2345, 4
    %v2351 = vshrl.u32 %v2229, 16
    %v2353 = vrot.slane %v2351, 7
    %v2354 = vshll.u32 %v2229, 16
    %v2356 = vor.u32 %v2353, %v2354
    %v2357 = vrot.slane %v2353, 4
    %s2390 = scalar_lea.vmem [#allocation2], 8
    %vm2391 = vcmask 1043456
    %vm2392 = vsmask.f32 7938
    %vm2393 = vmand %vm2391, %vm2392
    %v2394 = vld [vmem:[%s2390] sm:$0xf]
    %v2395 = vsel %vm2393, %v2236, %v2394
    %2396 = vst [vmem:[%s2390] sm:$0xf] %v2395
    %vm2397 = vcmask 1040384
    %vm2398 = vsmask.f32 256
    %vm2399 = vmand %vm2397, %vm2398
    %v2400 = vld [vmem:[%s2390 + $0x4] sm:$0x1]
    %v2401 = vsel %vm2399, %v2237, %v2400
    %2402 = vst [vmem:[%s2390 + $0x4] sm:$0x1] %v2401
    %v2403 = vld [vmem:[%s2390 + $0x8] sm:$0xf]
    %v2404 = vsel %vm2393, %v2244, %v2403
    %2405 = vst [vmem:[%s2390 + $0x8] sm:$0xf] %v2404
    %v2406 = vld [vmem:[%s2390 + $0xc] sm:$0x1]
    %v2407 = vsel %vm2399, %v2245, %v2406
    %2408 = vst [vmem:[%s2390 + $0xc] sm:$0x1] %v2407
    %v2409 = vld [vmem:[%s2390 + $0x10] sm:$0xf]
    %v2410 = vsel %vm2393, %v2252, %v2409
    %2411 = vst [vmem:[%s2390 + $0x10] sm:$0xf] %v2410
    %v2412 = vld [vmem:[%s2390 + $0x14] sm:$0x1]
    %v2413 = vsel %vm2399, %v2253, %v2412
    %2414 = vst [vmem:[%s2390 + $0x14] sm:$0x1] %v2413
    %v2415 = vld [vmem:[%s2390 + $0x18] sm:$0xf]
    %v2416 = vsel %vm2393, %v2260, %v2415
    %2417 = vst [vmem:[%s2390 + $0x18] sm:$0xf] %v2416
    %v2418 = vld [vmem:[%s2390 + $0x1c] sm:$0x1]
    %v2419 = vsel %vm2399, %v2261, %v2418
    %2420 = vst [vmem:[%s2390 + $0x1c] sm:$0x1] %v2419
    %v2421 = vld [vmem:[%s2390 + $0x20] sm:$0xf]
    %v2422 = vsel %vm2393, %v2268, %v2421
    %2423 = vst [vmem:[%s2390 + $0x20] sm:$0xf] %v2422
    %v2424 = vld [vmem:[%s2390 + $0x24] sm:$0x1]
    %v2425 = vsel %vm2399, %v2269, %v2424
    %2426 = vst [vmem:[%s2390 + $0x24] sm:$0x1] %v2425
    %v2427 = vld [vmem:[%s2390 + $0x28] sm:$0xf]
    %v2428 = vsel %vm2393, %v2276, %v2427
    %2429 = vst [vmem:[%s2390 + $0x28] sm:$0xf] %v2428
    %v2430 = vld [vmem:[%s2390 + $0x2c] sm:$0x1]
    %v2431 = vsel %vm2399, %v2277, %v2430
    %2432 = vst [vmem:[%s2390 + $0x2c] sm:$0x1] %v2431
    %v2433 = vld [vmem:[%s2390 + $0x30] sm:$0xf]
    %v2434 = vsel %vm2393, %v2284, %v2433
    %2435 = vst [vmem:[%s2390 + $0x30] sm:$0xf] %v2434
    %v2436 = vld [vmem:[%s2390 + $0x34] sm:$0x1]
    %v2437 = vsel %vm2399, %v2285, %v2436
    %2438 = vst [vmem:[%s2390 + $0x34] sm:$0x1] %v2437
    %v2439 = vld [vmem:[%s2390 + $0x38] sm:$0xf]
    %v2440 = vsel %vm2393, %v2292, %v2439
    %2441 = vst [vmem:[%s2390 + $0x38] sm:$0xf] %v2440
    %v2442 = vld [vmem:[%s2390 + $0x3c] sm:$0x1]
    %v2443 = vsel %vm2399, %v2293, %v2442
    %2444 = vst [vmem:[%s2390 + $0x3c] sm:$0x1] %v2443
    %v2445 = vld [vmem:[%s2390 + $0x50] sm:$0xf]
    %v2446 = vsel %vm2393, %v2300, %v2445
    %2447 = vst [vmem:[%s2390 + $0x50] sm:$0xf] %v2446
    %v2448 = vld [vmem:[%s2390 + $0x54] sm:$0x1]
    %v2449 = vsel %vm2399, %v2301, %v2448
    %2450 = vst [vmem:[%s2390 + $0x54] sm:$0x1] %v2449
    %v2451 = vld [vmem:[%s2390 + $0x58] sm:$0xf]
    %v2452 = vsel %vm2393, %v2308, %v2451
    %2453 = vst [vmem:[%s2390 + $0x58] sm:$0xf] %v2452
    %v2454 = vld [vmem:[%s2390 + $0x5c] sm:$0x1]
    %v2455 = vsel %vm2399, %v2309, %v2454
    %2456 = vst [vmem:[%s2390 + $0x5c] sm:$0x1] %v2455
    %v2457 = vld [vmem:[%s2390 + $0x60] sm:$0xf]
    %v2458 = vsel %vm2393, %v2316, %v2457
    %2459 = vst [vmem:[%s2390 + $0x60] sm:$0xf] %v2458
    %v2460 = vld [vmem:[%s2390 + $0x64] sm:$0x1]
    %v2461 = vsel %vm2399, %v2317, %v2460
    %2462 = vst [vmem:[%s2390 + $0x64] sm:$0x1] %v2461
    %v2463 = vld [vmem:[%s2390 + $0x68] sm:$0xf]
    %v2464 = vsel %vm2393, %v2324, %v2463
    %2465 = vst [vmem:[%s2390 + $0x68] sm:$0xf] %v2464
    %v2466 = vld [vmem:[%s2390 + $0x6c] sm:$0x1]
    %v2467 = vsel %vm2399, %v2325, %v2466
    %2468 = vst [vmem:[%s2390 + $0x6c] sm:$0x1] %v2467
    %v2469 = vld [vmem:[%s2390 + $0x70] sm:$0xf]
    %v2470 = vsel %vm2393, %v2332, %v2469
    %2471 = vst [vmem:[%s2390 + $0x70] sm:$0xf] %v2470
    %v2472 = vld [vmem:[%s2390 + $0x74] sm:$0x1]
    %v2473 = vsel %vm2399, %v2333, %v2472
    %2474 = vst [vmem:[%s2390 + $0x74] sm:$0x1] %v2473
    %v2475 = vld [vmem:[%s2390 + $0x78] sm:$0xf]
    %v2476 = vsel %vm2393, %v2340, %v2475
    %2477 = vst [vmem:[%s2390 + $0x78] sm:$0xf] %v2476
    %v2478 = vld [vmem:[%s2390 + $0x7c] sm:$0x1]
    %v2479 = vsel %vm2399, %v2341, %v2478
    %2480 = vst [vmem:[%s2390 + $0x7c] sm:$0x1] %v2479
    %v2481 = vld [vmem:[%s2390 + $0x80] sm:$0xf]
    %v2482 = vsel %vm2393, %v2348, %v2481
    %2483 = vst [vmem:[%s2390 + $0x80] sm:$0xf] %v2482
    %v2484 = vld [vmem:[%s2390 + $0x84] sm:$0x1]
    %v2485 = vsel %vm2399, %v2349, %v2484
    %2486 = vst [vmem:[%s2390 + $0x84] sm:$0x1] %v2485
    %v2487 = vld [vmem:[%s2390 + $0x88] sm:$0xf]
    %v2488 = vsel %vm2393, %v2356, %v2487
    %2489 = vst [vmem:[%s2390 + $0x88] sm:$0xf] %v2488
    %v2490 = vld [vmem:[%s2390 + $0x8c] sm:$0x1]
    %v2491 = vsel %vm2399, %v2357, %v2490
    %2492 = vst [vmem:[%s2390 + $0x8c] sm:$0x1] %v2491
    %v2493 = vld [vmem:[%s917] sm:$0xf]
    %v2494 = vld [vmem:[%s917 + $0x8] sm:$0xf]
    %v2495 = vld [vmem:[%s917 + $0x10] sm:$0xf]
    %v2496 = vld [vmem:[%s917 + $0x18] sm:$0xf]
    %v2497 = vld [vmem:[%s917 + $0x20] sm:$0xf]
    %v2498 = vld [vmem:[%s917 + $0x28] sm:$0xf]
    %v2499 = vld [vmem:[%s917 + $0x30] sm:$0xf]
    %v2500 = vld [vmem:[%s917 + $0x38] sm:$0xf]
    %v2501 = vld [vmem:[%s917 + $0x48] sm:$0xf]
    %v2502 = vld [vmem:[%s917 + $0x50] sm:$0xf]
    %v2503 = vld [vmem:[%s917 + $0x58] sm:$0xf]
    %v2504 = vld [vmem:[%s917 + $0x60] sm:$0xf]
    %v2505 = vld [vmem:[%s917 + $0x68] sm:$0xf]
    %v2506 = vld [vmem:[%s917 + $0x70] sm:$0xf]
    %v2507 = vld [vmem:[%s917 + $0x78] sm:$0xf]
    %v2508 = vld [vmem:[%s917 + $0x80] sm:$0xf]
    %v2509 = vld [vmem:[%s5] sm:$0xf]
    %v2510 = vld [vmem:[%s5 + $0x4] sm:$0xf]
    %v2511 = vld [vmem:[%s5 + $0x8] sm:$0xf]
    %v2512 = vld [vmem:[%s5 + $0xc] sm:$0xf]
    %v2513 = vld [vmem:[%s6] sm:$0x1]
    %v2515 = vperm.slane %v2513, 0
    %v2533 = vunpack.c.l.b16 %v2493
    %v2534 = vunpack.c.l.b16 %v2494
    %v2535 = vunpack.c.l.b16 %v2495
    %v2536 = vunpack.c.l.b16 %v2496
    %v2537 = vunpack.c.l.b16 %v2497
    %v2538 = vunpack.c.l.b16 %v2498
    %v2539 = vunpack.c.l.b16 %v2499
    %v2540 = vunpack.c.l.b16 %v2500
    %v2541 = vunpack.c.l.b16 %v2501
    %v2542 = vunpack.c.l.b16 %v2502
    %v2543 = vunpack.c.l.b16 %v2503
    %v2544 = vunpack.c.l.b16 %v2504
    %v2545 = vunpack.c.l.b16 %v2505
    %v2546 = vunpack.c.l.b16 %v2506
    %v2547 = vunpack.c.l.b16 %v2507
    %v2548 = vunpack.c.l.b16 %v2508
    %v2549 = vpack.c.b16 %v2534, %v2533
    %v2550 = vpack.c.b16 %v2536, %v2535
    %v2551 = vpack.c.b16 %v2538, %v2537
    %v2552 = vpack.c.b16 %v2540, %v2539
    %v2553 = vpack.c.b16 %v2542, %v2541
    %v2554 = vpack.c.b16 %v2544, %v2543
    %v2555 = vpack.c.b16 %v2546, %v2545
    %v2556 = vpack.c.b16 %v2548, %v2547
    %v2561 = vunpack.c.l.b16 %v2509
    %v2562 = vunpack.c.l.b16 %v2510
    %v2563 = vunpack.c.l.b16 %v2511
    %v2564 = vunpack.c.l.b16 %v2512
    %v2565 = vpack.c.b16 %v2562, %v2561
    %v2566 = vpack.c.b16 %v2564, %v2563
    %v2570 = vsel %vm166, %v2549, 0
    %v2573 = vsel %vm166, %v2550, 0
    %v2576 = vsel %vm166, %v2551, 0
    %v2579 = vsel %vm166, %v2552, 0
    %v2582 = vsel %vm166, %v2553, 0
    %v2585 = vsel %vm166, %v2554, 0
    %v2588 = vsel %vm166, %v2555, 0
    %v2591 = vsel %vm166, %v2556, 0
    %2593 = vmatpush.bf16.msra.mxu0 0
    %2594 = vmatpush.bf16.msra.mxu0 0
    %2595 = vmatpush.bf16.msra.mxu0 0
    %2596 = vmatpush.bf16.msra.mxu0 0
    %2597 = vmatpush.bf16.msra.mxu0 0
    %2598 = vmatpush.bf16.msra.mxu0 0
    %2599 = vmatpush.bf16.msra.mxu0 %v2566
    %2600 = vmatpush.bf16.msra.mxu0 %v2565
    %2601 = vmatmul.bf16.gmra.mxu0 %v2570
    %v2602 = vpop.f32.mrf.mxu0
    %v2603 = vadd.f32 %v2515, %v2602
    %v2604 = vpop.f32.mrf.mxu0
    %v2605 = vadd.f32 %v2515, %v2604
    %2606 = vmatmul.bf16.gmra.mxu0 %v2573
    %v2607 = vpop.f32.mrf.mxu0
    %v2608 = vadd.f32 %v2515, %v2607
    %v2609 = vpop.f32.mrf.mxu0
    %v2610 = vadd.f32 %v2515, %v2609
    %2611 = vmatmul.bf16.gmra.mxu0 %v2576
    %v2612 = vpop.f32.mrf.mxu0
    %v2613 = vadd.f32 %v2515, %v2612
    %v2614 = vpop.f32.mrf.mxu0
    %v2615 = vadd.f32 %v2515, %v2614
    %2616 = vmatmul.bf16.gmra.mxu0 %v2579
    %v2617 = vpop.f32.mrf.mxu0
    %v2618 = vadd.f32 %v2515, %v2617
    %v2619 = vpop.f32.mrf.mxu0
    %v2620 = vadd.f32 %v2515, %v2619
    %2621 = vmatmul.bf16.gmra.mxu0 %v2582
    %v2622 = vpop.f32.mrf.mxu0
    %v2623 = vadd.f32 %v2515, %v2622
    %v2624 = vpop.f32.mrf.mxu0
    %v2625 = vadd.f32 %v2515, %v2624
    %2626 = vmatmul.bf16.gmra.mxu0 %v2585
    %v2627 = vpop.f32.mrf.mxu0
    %v2628 = vadd.f32 %v2515, %v2627
    %v2629 = vpop.f32.mrf.mxu0
    %v2630 = vadd.f32 %v2515, %v2629
    %2631 = vmatmul.bf16.gmra.mxu0 %v2588
    %v2632 = vpop.f32.mrf.mxu0
    %v2633 = vadd.f32 %v2515, %v2632
    %v2634 = vpop.f32.mrf.mxu0
    %v2635 = vadd.f32 %v2515, %v2634
    %2636 = vmatmul.bf16.gmra.mxu0 %v2591
    %v2637 = vpop.f32.mrf.mxu0
    %v2638 = vadd.f32 %v2515, %v2637
    %v2639 = vpop.f32.mrf.mxu0
    %v2640 = vadd.f32 %v2515, %v2639
    %2641 = vdwg.mxu0
    %v2642 = vld [vmem:[#allocation2] sm:$0xf]
    %v2643 = vld [vmem:[#allocation2 + $0x8] sm:$0xf]
    %v2644 = vld [vmem:[#allocation2 + $0x10] sm:$0xf]
    %v2645 = vld [vmem:[#allocation2 + $0x18] sm:$0xf]
    %v2646 = vld [vmem:[#allocation2 + $0x20] sm:$0xf]
    %v2647 = vld [vmem:[#allocation2 + $0x28] sm:$0xf]
    %v2648 = vld [vmem:[#allocation2 + $0x30] sm:$0xf]
    %v2649 = vld [vmem:[#allocation2 + $0x38] sm:$0xf]
    %v2650 = vld [vmem:[#allocation2 + $0x50] sm:$0xf]
    %v2651 = vld [vmem:[#allocation2 + $0x58] sm:$0xf]
    %v2652 = vld [vmem:[#allocation2 + $0x60] sm:$0xf]
    %v2653 = vld [vmem:[#allocation2 + $0x68] sm:$0xf]
    %v2654 = vld [vmem:[#allocation2 + $0x70] sm:$0xf]
    %v2655 = vld [vmem:[#allocation2 + $0x78] sm:$0xf]
    %v2656 = vld [vmem:[#allocation2 + $0x80] sm:$0xf]
    %v2657 = vld [vmem:[#allocation2 + $0x88] sm:$0xf]
    %v2658 = vld [vmem:[%s3] sm:$0xf]
    %v2659 = vld [vmem:[%s3 + $0x4] sm:$0xf]
    %v2660 = vld [vmem:[%s3 + $0x8] sm:$0xf]
    %v2661 = vld [vmem:[%s3 + $0xc] sm:$0xf]
    %v2662 = vld [vmem:[%s3 + $0x10] sm:$0xf]
    %v2663 = vld [vmem:[%s3 + $0x14] sm:$0xf]
    %v2664 = vld [vmem:[%s3 + $0x18] sm:$0xf]
    %v2665 = vld [vmem:[%s3 + $0x1c] sm:$0xf]
    %v2666 = vld [vmem:[%s3 + $0x20] sm:$0xf]
    %v2667 = vld [vmem:[%s3 + $0x24] sm:$0xf]
    %v2668 = vld [vmem:[%s3 + $0x28] sm:$0xf]
    %v2669 = vld [vmem:[%s3 + $0x2c] sm:$0xf]
    %v2670 = vld [vmem:[%s3 + $0x30] sm:$0xf]
    %v2671 = vld [vmem:[%s3 + $0x34] sm:$0xf]
    %v2672 = vld [vmem:[%s3 + $0x38] sm:$0xf]
    %v2673 = vld [vmem:[%s3 + $0x3c] sm:$0xf]
    %v2690 = vunpack.c.l.b16 %v2642
    %v2691 = vunpack.c.l.b16 %v2643
    %v2692 = vunpack.c.l.b16 %v2644
    %v2693 = vunpack.c.l.b16 %v2645
    %v2694 = vunpack.c.l.b16 %v2646
    %v2695 = vunpack.c.l.b16 %v2647
    %v2696 = vunpack.c.l.b16 %v2648
    %v2697 = vunpack.c.l.b16 %v2649
    %v2698 = vunpack.c.l.b16 %v2650
    %v2699 = vunpack.c.l.b16 %v2651
    %v2700 = vunpack.c.l.b16 %v2652
    %v2701 = vunpack.c.l.b16 %v2653
    %v2702 = vunpack.c.l.b16 %v2654
    %v2703 = vunpack.c.l.b16 %v2655
    %v2704 = vunpack.c.l.b16 %v2656
    %v2705 = vunpack.c.l.b16 %v2657
    %v2706 = vpack.c.b16 %v2691, %v2690
    %v2707 = vpack.c.b16 %v2693, %v2692
    %v2708 = vpack.c.b16 %v2695, %v2694
    %v2709 = vpack.c.b16 %v2697, %v2696
    %v2710 = vpack.c.b16 %v2699, %v2698
    %v2711 = vpack.c.b16 %v2701, %v2700
    %v2712 = vpack.c.b16 %v2703, %v2702
    %v2713 = vpack.c.b16 %v2705, %v2704
    %v2738 = vunpack.c.l.b16 %v2658
    %v2739 = vunpack.c.l.b16 %v2659
    %v2740 = vunpack.c.l.b16 %v2660
    %v2741 = vunpack.c.l.b16 %v2661
    %v2742 = vunpack.c.l.b16 %v2662
    %v2743 = vunpack.c.l.b16 %v2663
    %v2744 = vunpack.c.l.b16 %v2664
    %v2745 = vunpack.c.l.b16 %v2665
    %v2746 = vunpack.c.l.b16 %v2666
    %v2747 = vunpack.c.l.b16 %v2667
    %v2748 = vunpack.c.l.b16 %v2668
    %v2749 = vunpack.c.l.b16 %v2669
    %v2750 = vunpack.c.l.b16 %v2670
    %v2751 = vunpack.c.l.b16 %v2671
    %v2752 = vunpack.c.l.b16 %v2672
    %v2753 = vunpack.c.l.b16 %v2673
    %v2754 = vpack.c.b16 %v2739, %v2738
    %v2755 = vpack.c.b16 %v2741, %v2740
    %v2756 = vpack.c.b16 %v2743, %v2742
    %v2757 = vpack.c.b16 %v2745, %v2744
    %v2758 = vpack.c.b16 %v2747, %v2746
    %v2759 = vpack.c.b16 %v2749, %v2748
    %v2760 = vpack.c.b16 %v2751, %v2750
    %v2761 = vpack.c.b16 %v2753, %v2752
    %2770 = vmatpush.bf16.msra.mxu0 %v2761
    %2771 = vmatpush.bf16.msra.mxu0 %v2760
    %2772 = vmatpush.bf16.msra.mxu0 %v2759
    %2773 = vmatpush.bf16.msra.mxu0 %v2758
    %2774 = vmatpush.bf16.msra.mxu0 %v2757
    %2775 = vmatpush.bf16.msra.mxu0 %v2756
    %2776 = vmatpush.bf16.msra.mxu0 %v2755
    %2777 = vmatpush.bf16.msra.mxu0 %v2754
    %2778 = vmatmul.bf16.gmra.mxu0 %v2706
    %v2779 = vpop.f32.mrf.mxu0
    %v2780 = vadd.f32 0.0, %v2779
    %v2781 = vpop.f32.mrf.mxu0
    %v2782 = vadd.f32 0.0, %v2781
    %2783 = vmatmul.bf16.gmra.mxu0 %v2707
    %v2784 = vpop.f32.mrf.mxu0
    %v2785 = vadd.f32 0.0, %v2784
    %v2786 = vpop.f32.mrf.mxu0
    %v2787 = vadd.f32 0.0, %v2786
    %2788 = vmatmul.bf16.gmra.mxu0 %v2708
    %v2789 = vpop.f32.mrf.mxu0
    %v2790 = vadd.f32 0.0, %v2789
    %v2791 = vpop.f32.mrf.mxu0
    %v2792 = vadd.f32 0.0, %v2791
    %2793 = vmatmul.bf16.gmra.mxu0 %v2709
    %v2794 = vpop.f32.mrf.mxu0
    %v2795 = vadd.f32 0.0, %v2794
    %v2796 = vpop.f32.mrf.mxu0
    %v2797 = vadd.f32 0.0, %v2796
    %2798 = vmatmul.bf16.gmra.mxu0 %v2710
    %v2799 = vpop.f32.mrf.mxu0
    %v2800 = vadd.f32 0.0, %v2799
    %v2801 = vpop.f32.mrf.mxu0
    %v2802 = vadd.f32 0.0, %v2801
    %2803 = vmatmul.bf16.gmra.mxu0 %v2711
    %v2804 = vpop.f32.mrf.mxu0
    %v2805 = vadd.f32 0.0, %v2804
    %v2806 = vpop.f32.mrf.mxu0
    %v2807 = vadd.f32 0.0, %v2806
    %2808 = vmatmul.bf16.gmra.mxu0 %v2712
    %v2809 = vpop.f32.mrf.mxu0
    %v2810 = vadd.f32 0.0, %v2809
    %v2811 = vpop.f32.mrf.mxu0
    %v2812 = vadd.f32 0.0, %v2811
    %2813 = vmatmul.bf16.gmra.mxu0 %v2713
    %v2814 = vpop.f32.mrf.mxu0
    %v2815 = vadd.f32 0.0, %v2814
    %v2816 = vpop.f32.mrf.mxu0
    %v2817 = vadd.f32 0.0, %v2816
    %2818 = vdwg.mxu0
    %v2819 = vadd.f32 %v2603, %v2780
    %v2820 = vadd.f32 %v2605, %v2782
    %v2821 = vadd.f32 %v2608, %v2785
    %v2822 = vadd.f32 %v2610, %v2787
    %v2823 = vadd.f32 %v2613, %v2790
    %v2824 = vadd.f32 %v2615, %v2792
    %v2825 = vadd.f32 %v2618, %v2795
    %v2826 = vadd.f32 %v2620, %v2797
    %v2827 = vadd.f32 %v2623, %v2800
    %v2828 = vadd.f32 %v2625, %v2802
    %v2829 = vadd.f32 %v2628, %v2805
    %v2830 = vadd.f32 %v2630, %v2807
    %v2831 = vadd.f32 %v2633, %v2810
    %v2832 = vadd.f32 %v2635, %v2812
    %v2833 = vadd.f32 %v2638, %v2815
    %v2834 = vadd.f32 %v2640, %v2817
    %v2835 = vld [vmem:[#allocation2] sm:$0xf]
    %v2836 = vld [vmem:[#allocation2 + $0x4] sm:$0x1]
    %v2837 = vld [vmem:[#allocation2 + $0x8] sm:$0xf]
    %v2838 = vld [vmem:[#allocation2 + $0xc] sm:$0x1]
    %v2839 = vld [vmem:[#allocation2 + $0x10] sm:$0xf]
    %v2840 = vld [vmem:[#allocation2 + $0x14] sm:$0x1]
    %v2841 = vld [vmem:[#allocation2 + $0x18] sm:$0xf]
    %v2842 = vld [vmem:[#allocation2 + $0x1c] sm:$0x1]
    %v2843 = vld [vmem:[#allocation2 + $0x20] sm:$0xf]
    %v2844 = vld [vmem:[#allocation2 + $0x24] sm:$0x1]
    %v2845 = vld [vmem:[#allocation2 + $0x28] sm:$0xf]
    %v2846 = vld [vmem:[#allocation2 + $0x2c] sm:$0x1]
    %v2847 = vld [vmem:[#allocation2 + $0x30] sm:$0xf]
    %v2848 = vld [vmem:[#allocation2 + $0x34] sm:$0x1]
    %v2849 = vld [vmem:[#allocation2 + $0x38] sm:$0xf]
    %v2850 = vld [vmem:[#allocation2 + $0x3c] sm:$0x1]
    %v2851 = vld [vmem:[#allocation2 + $0x50] sm:$0xf]
    %v2852 = vld [vmem:[#allocation2 + $0x54] sm:$0x1]
    %v2853 = vld [vmem:[#allocation2 + $0x58] sm:$0xf]
    %v2854 = vld [vmem:[#allocation2 + $0x5c] sm:$0x1]
    %v2855 = vld [vmem:[#allocation2 + $0x60] sm:$0xf]
    %v2856 = vld [vmem:[#allocation2 + $0x64] sm:$0x1]
    %v2857 = vld [vmem:[#allocation2 + $0x68] sm:$0xf]
    %v2858 = vld [vmem:[#allocation2 + $0x6c] sm:$0x1]
    %v2859 = vld [vmem:[#allocation2 + $0x70] sm:$0xf]
    %v2860 = vld [vmem:[#allocation2 + $0x74] sm:$0x1]
    %v2861 = vld [vmem:[#allocation2 + $0x78] sm:$0xf]
    %v2862 = vld [vmem:[#allocation2 + $0x7c] sm:$0x1]
    %v2863 = vld [vmem:[#allocation2 + $0x80] sm:$0xf]
    %v2864 = vld [vmem:[#allocation2 + $0x84] sm:$0x1]
    %v2865 = vld [vmem:[#allocation2 + $0x88] sm:$0xf]
    %v2866 = vld [vmem:[#allocation2 + $0x8c] sm:$0x1]
    %v2868 = vshrl.u32 %v2835, 16
    %v2870 = vrot.slane %v2868, 4
    %v2871 = vshll.u32 %v2835, 16
    %v2873 = vrot.slane %v2871, 5
    %v2874 = vor.u32 %v2870, %v2873
    %v2875 = vrot.slane %v2874, 4
    %v2877 = vshll.u32 %v2836, 16
    %v2879 = vrot.slane %v2877, 5
    %v2880 = vsel %vm399, %v2875, %v2879
    %v2882 = vshrl.u32 %v2837, 16
    %v2884 = vrot.slane %v2882, 4
    %v2885 = vshll.u32 %v2837, 16
    %v2887 = vrot.slane %v2885, 5
    %v2888 = vor.u32 %v2884, %v2887
    %v2889 = vrot.slane %v2888, 4
    %v2891 = vshll.u32 %v2838, 16
    %v2893 = vrot.slane %v2891, 5
    %v2894 = vsel %vm399, %v2889, %v2893
    %v2896 = vshrl.u32 %v2839, 16
    %v2898 = vrot.slane %v2896, 4
    %v2899 = vshll.u32 %v2839, 16
    %v2901 = vrot.slane %v2899, 5
    %v2902 = vor.u32 %v2898, %v2901
    %v2903 = vrot.slane %v2902, 4
    %v2905 = vshll.u32 %v2840, 16
    %v2907 = vrot.slane %v2905, 5
    %v2908 = vsel %vm399, %v2903, %v2907
    %v2910 = vshrl.u32 %v2841, 16
    %v2912 = vrot.slane %v2910, 4
    %v2913 = vshll.u32 %v2841, 16
    %v2915 = vrot.slane %v2913, 5
    %v2916 = vor.u32 %v2912, %v2915
    %v2917 = vrot.slane %v2916, 4
    %v2919 = vshll.u32 %v2842, 16
    %v2921 = vrot.slane %v2919, 5
    %v2922 = vsel %vm399, %v2917, %v2921
    %v2924 = vshrl.u32 %v2843, 16
    %v2926 = vrot.slane %v2924, 4
    %v2927 = vshll.u32 %v2843, 16
    %v2929 = vrot.slane %v2927, 5
    %v2930 = vor.u32 %v2926, %v2929
    %v2931 = vrot.slane %v2930, 4
    %v2933 = vshll.u32 %v2844, 16
    %v2935 = vrot.slane %v2933, 5
    %v2936 = vsel %vm399, %v2931, %v2935
    %v2938 = vshrl.u32 %v2845, 16
    %v2940 = vrot.slane %v2938, 4
    %v2941 = vshll.u32 %v2845, 16
    %v2943 = vrot.slane %v2941, 5
    %v2944 = vor.u32 %v2940, %v2943
    %v2945 = vrot.slane %v2944, 4
    %v2947 = vshll.u32 %v2846, 16
    %v2949 = vrot.slane %v2947, 5
    %v2950 = vsel %vm399, %v2945, %v2949
    %v2952 = vshrl.u32 %v2847, 16
    %v2954 = vrot.slane %v2952, 4
    %v2955 = vshll.u32 %v2847, 16
    %v2957 = vrot.slane %v2955, 5
    %v2958 = vor.u32 %v2954, %v2957
    %v2959 = vrot.slane %v2958, 4
    %v2961 = vshll.u32 %v2848, 16
    %v2963 = vrot.slane %v2961, 5
    %v2964 = vsel %vm399, %v2959, %v2963
    %v2966 = vshrl.u32 %v2849, 16
    %v2968 = vrot.slane %v2966, 4
    %v2969 = vshll.u32 %v2849, 16
    %v2971 = vrot.slane %v2969, 5
    %v2972 = vor.u32 %v2968, %v2971
    %v2973 = vrot.slane %v2972, 4
    %v2975 = vshll.u32 %v2850, 16
    %v2977 = vrot.slane %v2975, 5
    %v2978 = vsel %vm399, %v2973, %v2977
    %v2980 = vshrl.u32 %v2851, 16
    %v2982 = vrot.slane %v2980, 4
    %v2983 = vshll.u32 %v2851, 16
    %v2985 = vrot.slane %v2983, 5
    %v2986 = vor.u32 %v2982, %v2985
    %v2987 = vrot.slane %v2986, 4
    %v2989 = vshll.u32 %v2852, 16
    %v2991 = vrot.slane %v2989, 5
    %v2992 = vsel %vm399, %v2987, %v2991
    %v2994 = vshrl.u32 %v2853, 16
    %v2996 = vrot.slane %v2994, 4
    %v2997 = vshll.u32 %v2853, 16
    %v2999 = vrot.slane %v2997, 5
    %v3000 = vor.u32 %v2996, %v2999
    %v3001 = vrot.slane %v3000, 4
    %v3003 = vshll.u32 %v2854, 16
    %v3005 = vrot.slane %v3003, 5
    %v3006 = vsel %vm399, %v3001, %v3005
    %v3008 = vshrl.u32 %v2855, 16
    %v3010 = vrot.slane %v3008, 4
    %v3011 = vshll.u32 %v2855, 16
    %v3013 = vrot.slane %v3011, 5
    %v3014 = vor.u32 %v3010, %v3013
    %v3015 = vrot.slane %v3014, 4
    %v3017 = vshll.u32 %v2856, 16
    %v3019 = vrot.slane %v3017, 5
    %v3020 = vsel %vm399, %v3015, %v3019
    %v3022 = vshrl.u32 %v2857, 16
    %v3024 = vrot.slane %v3022, 4
    %v3025 = vshll.u32 %v2857, 16
    %v3027 = vrot.slane %v3025, 5
    %v3028 = vor.u32 %v3024, %v3027
    %v3029 = vrot.slane %v3028, 4
    %v3031 = vshll.u32 %v2858, 16
    %v3033 = vrot.slane %v3031, 5
    %v3034 = vsel %vm399, %v3029, %v3033
    %v3036 = vshrl.u32 %v2859, 16
    %v3038 = vrot.slane %v3036, 4
    %v3039 = vshll.u32 %v2859, 16
    %v3041 = vrot.slane %v3039, 5
    %v3042 = vor.u32 %v3038, %v3041
    %v3043 = vrot.slane %v3042, 4
    %v3045 = vshll.u32 %v2860, 16
    %v3047 = vrot.slane %v3045, 5
    %v3048 = vsel %vm399, %v3043, %v3047
    %v3050 = vshrl.u32 %v2861, 16
    %v3052 = vrot.slane %v3050, 4
    %v3053 = vshll.u32 %v2861, 16
    %v3055 = vrot.slane %v3053, 5
    %v3056 = vor.u32 %v3052, %v3055
    %v3057 = vrot.slane %v3056, 4
    %v3059 = vshll.u32 %v2862, 16
    %v3061 = vrot.slane %v3059, 5
    %v3062 = vsel %vm399, %v3057, %v3061
    %v3064 = vshrl.u32 %v2863, 16
    %v3066 = vrot.slane %v3064, 4
    %v3067 = vshll.u32 %v2863, 16
    %v3069 = vrot.slane %v3067, 5
    %v3070 = vor.u32 %v3066, %v3069
    %v3071 = vrot.slane %v3070, 4
    %v3073 = vshll.u32 %v2864, 16
    %v3075 = vrot.slane %v3073, 5
    %v3076 = vsel %vm399, %v3071, %v3075
    %v3078 = vshrl.u32 %v2865, 16
    %v3080 = vrot.slane %v3078, 4
    %v3081 = vshll.u32 %v2865, 16
    %v3083 = vrot.slane %v3081, 5
    %v3084 = vor.u32 %v3080, %v3083
    %v3085 = vrot.slane %v3084, 4
    %v3087 = vshll.u32 %v2866, 16
    %v3089 = vrot.slane %v3087, 5
    %v3090 = vsel %vm399, %v3085, %v3089
    %s3091 = scalar_lea.vmem %s3, 64
    %v3092 = vld [vmem:[%s3091] sm:$0xf]
    %v3093 = vld [vmem:[%s3091 + $0x4] sm:$0xf]
    %v3094 = vld [vmem:[%s3091 + $0x8] sm:$0xf]
    %v3095 = vld [vmem:[%s3091 + $0xc] sm:$0xf]
    %v3096 = vld [vmem:[%s3091 + $0x10] sm:$0xf]
    %v3097 = vld [vmem:[%s3091 + $0x14] sm:$0xf]
    %v3098 = vld [vmem:[%s3091 + $0x18] sm:$0xf]
    %v3099 = vld [vmem:[%s3091 + $0x1c] sm:$0xf]
    %v3100 = vld [vmem:[%s3091 + $0x20] sm:$0xf]
    %v3101 = vld [vmem:[%s3091 + $0x24] sm:$0xf]
    %v3102 = vld [vmem:[%s3091 + $0x28] sm:$0xf]
    %v3103 = vld [vmem:[%s3091 + $0x2c] sm:$0xf]
    %v3104 = vld [vmem:[%s3091 + $0x30] sm:$0xf]
    %v3105 = vld [vmem:[%s3091 + $0x34] sm:$0xf]
    %v3106 = vld [vmem:[%s3091 + $0x38] sm:$0xf]
    %v3107 = vld [vmem:[%s3091 + $0x3c] sm:$0xf]
    %v3108 = vunpack.c.l.b16 %v2880
    %v3109 = vunpack.c.l.b16 %v2894
    %v3110 = vunpack.c.l.b16 %v2908
    %v3111 = vunpack.c.l.b16 %v2922
    %v3112 = vunpack.c.l.b16 %v2936
    %v3113 = vunpack.c.l.b16 %v2950
    %v3114 = vunpack.c.l.b16 %v2964
    %v3115 = vunpack.c.l.b16 %v2978
    %v3116 = vunpack.c.l.b16 %v2992
    %v3117 = vunpack.c.l.b16 %v3006
    %v3118 = vunpack.c.l.b16 %v3020
    %v3119 = vunpack.c.l.b16 %v3034
    %v3120 = vunpack.c.l.b16 %v3048
    %v3121 = vunpack.c.l.b16 %v3062
    %v3122 = vunpack.c.l.b16 %v3076
    %v3123 = vunpack.c.l.b16 %v3090
    %v3124 = vpack.c.b16 %v3109, %v3108
    %v3125 = vpack.c.b16 %v3111, %v3110
    %v3126 = vpack.c.b16 %v3113, %v3112
    %v3127 = vpack.c.b16 %v3115, %v3114
    %v3128 = vpack.c.b16 %v3117, %v3116
    %v3129 = vpack.c.b16 %v3119, %v3118
    %v3130 = vpack.c.b16 %v3121, %v3120
    %v3131 = vpack.c.b16 %v3123, %v3122
    %v3156 = vunpack.c.l.b16 %v3092
    %v3157 = vunpack.c.l.b16 %v3093
    %v3158 = vunpack.c.l.b16 %v3094
    %v3159 = vunpack.c.l.b16 %v3095
    %v3160 = vunpack.c.l.b16 %v3096
    %v3161 = vunpack.c.l.b16 %v3097
    %v3162 = vunpack.c.l.b16 %v3098
    %v3163 = vunpack.c.l.b16 %v3099
    %v3164 = vunpack.c.l.b16 %v3100
    %v3165 = vunpack.c.l.b16 %v3101
    %v3166 = vunpack.c.l.b16 %v3102
    %v3167 = vunpack.c.l.b16 %v3103
    %v3168 = vunpack.c.l.b16 %v3104
    %v3169 = vunpack.c.l.b16 %v3105
    %v3170 = vunpack.c.l.b16 %v3106
    %v3171 = vunpack.c.l.b16 %v3107
    %v3172 = vpack.c.b16 %v3157, %v3156
    %v3173 = vpack.c.b16 %v3159, %v3158
    %v3174 = vpack.c.b16 %v3161, %v3160
    %v3175 = vpack.c.b16 %v3163, %v3162
    %v3176 = vpack.c.b16 %v3165, %v3164
    %v3177 = vpack.c.b16 %v3167, %v3166
    %v3178 = vpack.c.b16 %v3169, %v3168
    %v3179 = vpack.c.b16 %v3171, %v3170
    %3188 = vmatpush.bf16.msra.mxu0 %v3179
    %3189 = vmatpush.bf16.msra.mxu0 %v3178
    %3190 = vmatpush.bf16.msra.mxu0 %v3177
    %3191 = vmatpush.bf16.msra.mxu0 %v3176
    %3192 = vmatpush.bf16.msra.mxu0 %v3175
    %3193 = vmatpush.bf16.msra.mxu0 %v3174
    %3194 = vmatpush.bf16.msra.mxu0 %v3173
    %3195 = vmatpush.bf16.msra.mxu0 %v3172
    %3196 = vmatmul.bf16.gmra.mxu0 %v3124
    %v3197 = vpop.f32.mrf.mxu0
    %v3198 = vadd.f32 0.0, %v3197
    %v3199 = vpop.f32.mrf.mxu0
    %v3200 = vadd.f32 0.0, %v3199
    %3201 = vmatmul.bf16.gmra.mxu0 %v3125
    %v3202 = vpop.f32.mrf.mxu0
    %v3203 = vadd.f32 0.0, %v3202
    %v3204 = vpop.f32.mrf.mxu0
    %v3205 = vadd.f32 0.0, %v3204
    %3206 = vmatmul.bf16.gmra.mxu0 %v3126
    %v3207 = vpop.f32.mrf.mxu0
    %v3208 = vadd.f32 0.0, %v3207
    %v3209 = vpop.f32.mrf.mxu0
    %v3210 = vadd.f32 0.0, %v3209
    %3211 = vmatmul.bf16.gmra.mxu0 %v3127
    %v3212 = vpop.f32.mrf.mxu0
    %v3213 = vadd.f32 0.0, %v3212
    %v3214 = vpop.f32.mrf.mxu0
    %v3215 = vadd.f32 0.0, %v3214
    %3216 = vmatmul.bf16.gmra.mxu0 %v3128
    %v3217 = vpop.f32.mrf.mxu0
    %v3218 = vadd.f32 0.0, %v3217
    %v3219 = vpop.f32.mrf.mxu0
    %v3220 = vadd.f32 0.0, %v3219
    %3221 = vmatmul.bf16.gmra.mxu0 %v3129
    %v3222 = vpop.f32.mrf.mxu0
    %v3223 = vadd.f32 0.0, %v3222
    %v3224 = vpop.f32.mrf.mxu0
    %v3225 = vadd.f32 0.0, %v3224
    %3226 = vmatmul.bf16.gmra.mxu0 %v3130
    %v3227 = vpop.f32.mrf.mxu0
    %v3228 = vadd.f32 0.0, %v3227
    %v3229 = vpop.f32.mrf.mxu0
    %v3230 = vadd.f32 0.0, %v3229
    %3231 = vmatmul.bf16.gmra.mxu0 %v3131
    %v3232 = vpop.f32.mrf.mxu0
    %v3233 = vadd.f32 0.0, %v3232
    %v3234 = vpop.f32.mrf.mxu0
    %v3235 = vadd.f32 0.0, %v3234
    %3236 = vdwg.mxu0
    %v3237 = vadd.f32 %v2819, %v3198
    %v3238 = vadd.f32 %v2820, %v3200
    %v3239 = vadd.f32 %v2821, %v3203
    %v3240 = vadd.f32 %v2822, %v3205
    %v3241 = vadd.f32 %v2823, %v3208
    %v3242 = vadd.f32 %v2824, %v3210
    %v3243 = vadd.f32 %v2825, %v3213
    %v3244 = vadd.f32 %v2826, %v3215
    %v3245 = vadd.f32 %v2827, %v3218
    %v3246 = vadd.f32 %v2828, %v3220
    %v3247 = vadd.f32 %v2829, %v3223
    %v3248 = vadd.f32 %v2830, %v3225
    %v3249 = vadd.f32 %v2831, %v3228
    %v3250 = vadd.f32 %v2832, %v3230
    %v3251 = vadd.f32 %v2833, %v3233
    %v3252 = vadd.f32 %v2834, %v3235
    %v3253 = vld [vmem:[#allocation2] sm:$0xe]
    %v3254 = vld [vmem:[#allocation2 + $0x8] sm:$0xe]
    %v3255 = vld [vmem:[#allocation2 + $0x10] sm:$0xe]
    %v3256 = vld [vmem:[#allocation2 + $0x18] sm:$0xe]
    %v3257 = vld [vmem:[#allocation2 + $0x20] sm:$0xe]
    %v3258 = vld [vmem:[#allocation2 + $0x28] sm:$0xe]
    %v3259 = vld [vmem:[#allocation2 + $0x30] sm:$0xe]
    %v3260 = vld [vmem:[#allocation2 + $0x38] sm:$0xe]
    %v3261 = vld [vmem:[#allocation2 + $0x50] sm:$0xe]
    %v3262 = vld [vmem:[#allocation2 + $0x58] sm:$0xe]
    %v3263 = vld [vmem:[#allocation2 + $0x60] sm:$0xe]
    %v3264 = vld [vmem:[#allocation2 + $0x68] sm:$0xe]
    %v3265 = vld [vmem:[#allocation2 + $0x70] sm:$0xe]
    %v3266 = vld [vmem:[#allocation2 + $0x78] sm:$0xe]
    %v3267 = vld [vmem:[#allocation2 + $0x80] sm:$0xe]
    %v3268 = vld [vmem:[#allocation2 + $0x88] sm:$0xe]
    %vm3301 = vcmask 1042432
    %vm3302 = vcmask 1046532
    %vm3303 = vmor %vm3301, %vm3302
    %v3304 = vrot.slane %v3253, 5
    %v3305 = vrot.slane %v3304, 4
    %v3306 = vrot.slane %v2836, 5
    %v3307 = vsel %vm3303, %v3305, %v3306
    %v3308 = vrot.slane %v3254, 5
    %v3309 = vrot.slane %v3308, 4
    %v3310 = vrot.slane %v2838, 5
    %v3311 = vsel %vm3303, %v3309, %v3310
    %v3312 = vrot.slane %v3255, 5
    %v3313 = vrot.slane %v3312, 4
    %v3314 = vrot.slane %v2840, 5
    %v3315 = vsel %vm3303, %v3313, %v3314
    %v3316 = vrot.slane %v3256, 5
    %v3317 = vrot.slane %v3316, 4
    %v3318 = vrot.slane %v2842, 5
    %v3319 = vsel %vm3303, %v3317, %v3318
    %v3320 = vrot.slane %v3257, 5
    %v3321 = vrot.slane %v3320, 4
    %v3322 = vrot.slane %v2844, 5
    %v3323 = vsel %vm3303, %v3321, %v3322
    %v3324 = vrot.slane %v3258, 5
    %v3325 = vrot.slane %v3324, 4
    %v3326 = vrot.slane %v2846, 5
    %v3327 = vsel %vm3303, %v3325, %v3326
    %v3328 = vrot.slane %v3259, 5
    %v3329 = vrot.slane %v3328, 4
    %v3330 = vrot.slane %v2848, 5
    %v3331 = vsel %vm3303, %v3329, %v3330
    %v3332 = vrot.slane %v3260, 5
    %v3333 = vrot.slane %v3332, 4
    %v3334 = vrot.slane %v2850, 5
    %v3335 = vsel %vm3303, %v3333, %v3334
    %v3336 = vrot.slane %v3261, 5
    %v3337 = vrot.slane %v3336, 4
    %v3338 = vrot.slane %v2852, 5
    %v3339 = vsel %vm3303, %v3337, %v3338
    %v3340 = vrot.slane %v3262, 5
    %v3341 = vrot.slane %v3340, 4
    %v3342 = vrot.slane %v2854, 5
    %v3343 = vsel %vm3303, %v3341, %v3342
    %v3344 = vrot.slane %v3263, 5
    %v3345 = vrot.slane %v3344, 4
    %v3346 = vrot.slane %v2856, 5
    %v3347 = vsel %vm3303, %v3345, %v3346
    %v3348 = vrot.slane %v3264, 5
    %v3349 = vrot.slane %v3348, 4
    %v3350 = vrot.slane %v2858, 5
    %v3351 = vsel %vm3303, %v3349, %v3350
    %v3352 = vrot.slane %v3265, 5
    %v3353 = vrot.slane %v3352, 4
    %v3354 = vrot.slane %v2860, 5
    %v3355 = vsel %vm3303, %v3353, %v3354
    %v3356 = vrot.slane %v3266, 5
    %v3357 = vrot.slane %v3356, 4
    %v3358 = vrot.slane %v2862, 5
    %v3359 = vsel %vm3303, %v3357, %v3358
    %v3360 = vrot.slane %v3267, 5
    %v3361 = vrot.slane %v3360, 4
    %v3362 = vrot.slane %v2864, 5
    %v3363 = vsel %vm3303, %v3361, %v3362
    %v3364 = vrot.slane %v3268, 5
    %v3365 = vrot.slane %v3364, 4
    %v3366 = vrot.slane %v2866, 5
    %v3367 = vsel %vm3303, %v3365, %v3366
    %s3368 = scalar_lea.vmem %s3, 128
    %v3369 = vld [vmem:[%s3368] sm:$0xf]
    %v3370 = vld [vmem:[%s3368 + $0x4] sm:$0xf]
    %v3371 = vld [vmem:[%s3368 + $0x8] sm:$0xf]
    %v3372 = vld [vmem:[%s3368 + $0xc] sm:$0xf]
    %v3373 = vld [vmem:[%s3368 + $0x10] sm:$0xf]
    %v3374 = vld [vmem:[%s3368 + $0x14] sm:$0xf]
    %v3375 = vld [vmem:[%s3368 + $0x18] sm:$0xf]
    %v3376 = vld [vmem:[%s3368 + $0x1c] sm:$0xf]
    %v3377 = vld [vmem:[%s3368 + $0x20] sm:$0xf]
    %v3378 = vld [vmem:[%s3368 + $0x24] sm:$0xf]
    %v3379 = vld [vmem:[%s3368 + $0x28] sm:$0xf]
    %v3380 = vld [vmem:[%s3368 + $0x2c] sm:$0xf]
    %v3381 = vld [vmem:[%s3368 + $0x30] sm:$0xf]
    %v3382 = vld [vmem:[%s3368 + $0x34] sm:$0xf]
    %v3383 = vld [vmem:[%s3368 + $0x38] sm:$0xf]
    %v3384 = vld [vmem:[%s3368 + $0x3c] sm:$0xf]
    %v3385 = vunpack.c.l.b16 %v3307
    %v3386 = vunpack.c.l.b16 %v3311
    %v3387 = vunpack.c.l.b16 %v3315
    %v3388 = vunpack.c.l.b16 %v3319
    %v3389 = vunpack.c.l.b16 %v3323
    %v3390 = vunpack.c.l.b16 %v3327
    %v3391 = vunpack.c.l.b16 %v3331
    %v3392 = vunpack.c.l.b16 %v3335
    %v3393 = vunpack.c.l.b16 %v3339
    %v3394 = vunpack.c.l.b16 %v3343
    %v3395 = vunpack.c.l.b16 %v3347
    %v3396 = vunpack.c.l.b16 %v3351
    %v3397 = vunpack.c.l.b16 %v3355
    %v3398 = vunpack.c.l.b16 %v3359
    %v3399 = vunpack.c.l.b16 %v3363
    %v3400 = vunpack.c.l.b16 %v3367
    %v3401 = vpack.c.b16 %v3386, %v3385
    %v3402 = vpack.c.b16 %v3388, %v3387
    %v3403 = vpack.c.b16 %v3390, %v3389
    %v3404 = vpack.c.b16 %v3392, %v3391
    %v3405 = vpack.c.b16 %v3394, %v3393
    %v3406 = vpack.c.b16 %v3396, %v3395
    %v3407 = vpack.c.b16 %v3398, %v3397
    %v3408 = vpack.c.b16 %v3400, %v3399
    %v3433 = vunpack.c.l.b16 %v3369
    %v3434 = vunpack.c.l.b16 %v3370
    %v3435 = vunpack.c.l.b16 %v3371
    %v3436 = vunpack.c.l.b16 %v3372
    %v3437 = vunpack.c.l.b16 %v3373
    %v3438 = vunpack.c.l.b16 %v3374
    %v3439 = vunpack.c.l.b16 %v3375
    %v3440 = vunpack.c.l.b16 %v3376
    %v3441 = vunpack.c.l.b16 %v3377
    %v3442 = vunpack.c.l.b16 %v3378
    %v3443 = vunpack.c.l.b16 %v3379
    %v3444 = vunpack.c.l.b16 %v3380
    %v3445 = vunpack.c.l.b16 %v3381
    %v3446 = vunpack.c.l.b16 %v3382
    %v3447 = vunpack.c.l.b16 %v3383
    %v3448 = vunpack.c.l.b16 %v3384
    %v3449 = vpack.c.b16 %v3434, %v3433
    %v3450 = vpack.c.b16 %v3436, %v3435
    %v3451 = vpack.c.b16 %v3438, %v3437
    %v3452 = vpack.c.b16 %v3440, %v3439
    %v3453 = vpack.c.b16 %v3442, %v3441
    %v3454 = vpack.c.b16 %v3444, %v3443
    %v3455 = vpack.c.b16 %v3446, %v3445
    %v3456 = vpack.c.b16 %v3448, %v3447
    %3465 = vmatpush.bf16.msra.mxu0 %v3456
    %3466 = vmatpush.bf16.msra.mxu0 %v3455
    %3467 = vmatpush.bf16.msra.mxu0 %v3454
    %3468 = vmatpush.bf16.msra.mxu0 %v3453
    %3469 = vmatpush.bf16.msra.mxu0 %v3452
    %3470 = vmatpush.bf16.msra.mxu0 %v3451
    %3471 = vmatpush.bf16.msra.mxu0 %v3450
    %3472 = vmatpush.bf16.msra.mxu0 %v3449
    %3473 = vmatmul.bf16.gmra.mxu0 %v3401
    %v3474 = vpop.f32.mrf.mxu0
    %v3475 = vadd.f32 0.0, %v3474
    %v3476 = vpop.f32.mrf.mxu0
    %v3477 = vadd.f32 0.0, %v3476
    %3478 = vmatmul.bf16.gmra.mxu0 %v3402
    %v3479 = vpop.f32.mrf.mxu0
    %v3480 = vadd.f32 0.0, %v3479
    %v3481 = vpop.f32.mrf.mxu0
    %v3482 = vadd.f32 0.0, %v3481
    %3483 = vmatmul.bf16.gmra.mxu0 %v3403
    %v3484 = vpop.f32.mrf.mxu0
    %v3485 = vadd.f32 0.0, %v3484
    %v3486 = vpop.f32.mrf.mxu0
    %v3487 = vadd.f32 0.0, %v3486
    %3488 = vmatmul.bf16.gmra.mxu0 %v3404
    %v3489 = vpop.f32.mrf.mxu0
    %v3490 = vadd.f32 0.0, %v3489
    %v3491 = vpop.f32.mrf.mxu0
    %v3492 = vadd.f32 0.0, %v3491
    %3493 = vmatmul.bf16.gmra.mxu0 %v3405
    %v3494 = vpop.f32.mrf.mxu0
    %v3495 = vadd.f32 0.0, %v3494
    %v3496 = vpop.f32.mrf.mxu0
    %v3497 = vadd.f32 0.0, %v3496
    %3498 = vmatmul.bf16.gmra.mxu0 %v3406
    %v3499 = vpop.f32.mrf.mxu0
    %v3500 = vadd.f32 0.0, %v3499
    %v3501 = vpop.f32.mrf.mxu0
    %v3502 = vadd.f32 0.0, %v3501
    %3503 = vmatmul.bf16.gmra.mxu0 %v3407
    %v3504 = vpop.f32.mrf.mxu0
    %v3505 = vadd.f32 0.0, %v3504
    %v3506 = vpop.f32.mrf.mxu0
    %v3507 = vadd.f32 0.0, %v3506
    %3508 = vmatmul.bf16.gmra.mxu0 %v3408
    %v3509 = vpop.f32.mrf.mxu0
    %v3510 = vadd.f32 0.0, %v3509
    %v3511 = vpop.f32.mrf.mxu0
    %v3512 = vadd.f32 0.0, %v3511
    %3513 = vdwg.mxu0
    %v3514 = vadd.f32 %v3237, %v3475
    %v3515 = vadd.f32 %v3238, %v3477
    %v3516 = vadd.f32 %v3239, %v3480
    %v3517 = vadd.f32 %v3240, %v3482
    %v3518 = vadd.f32 %v3241, %v3485
    %v3519 = vadd.f32 %v3242, %v3487
    %v3520 = vadd.f32 %v3243, %v3490
    %v3521 = vadd.f32 %v3244, %v3492
    %v3522 = vadd.f32 %v3245, %v3495
    %v3523 = vadd.f32 %v3246, %v3497
    %v3524 = vadd.f32 %v3247, %v3500
    %v3525 = vadd.f32 %v3248, %v3502
    %v3526 = vadd.f32 %v3249, %v3505
    %v3527 = vadd.f32 %v3250, %v3507
    %v3528 = vadd.f32 %v3251, %v3510
    %v3529 = vadd.f32 %v3252, %v3512
    %v3530 = vld [vmem:[%s2390] sm:$0xf]
    %v3531 = vld [vmem:[%s2390 + $0x8] sm:$0xf]
    %v3532 = vld [vmem:[%s2390 + $0x10] sm:$0xf]
    %v3533 = vld [vmem:[%s2390 + $0x18] sm:$0xf]
    %v3534 = vld [vmem:[%s2390 + $0x20] sm:$0xf]
    %v3535 = vld [vmem:[%s2390 + $0x28] sm:$0xf]
    %v3536 = vld [vmem:[%s2390 + $0x30] sm:$0xf]
    %v3537 = vld [vmem:[%s2390 + $0x38] sm:$0xf]
    %v3538 = vld [vmem:[%s2390 + $0x50] sm:$0xf]
    %v3539 = vld [vmem:[%s2390 + $0x58] sm:$0xf]
    %v3540 = vld [vmem:[%s2390 + $0x60] sm:$0xf]
    %v3541 = vld [vmem:[%s2390 + $0x68] sm:$0xf]
    %v3542 = vld [vmem:[%s2390 + $0x70] sm:$0xf]
    %v3543 = vld [vmem:[%s2390 + $0x78] sm:$0xf]
    %v3544 = vld [vmem:[%s2390 + $0x80] sm:$0xf]
    %v3545 = vld [vmem:[%s2390 + $0x88] sm:$0xf]
    %s3546 = scalar_lea.vmem %s3, 192
    %v3547 = vld [vmem:[%s3546] sm:$0xf]
    %v3548 = vld [vmem:[%s3546 + $0x4] sm:$0xf]
    %v3549 = vld [vmem:[%s3546 + $0x8] sm:$0xf]
    %v3550 = vld [vmem:[%s3546 + $0xc] sm:$0xf]
    %v3551 = vld [vmem:[%s3546 + $0x10] sm:$0xf]
    %v3552 = vld [vmem:[%s3546 + $0x14] sm:$0xf]
    %v3553 = vld [vmem:[%s3546 + $0x18] sm:$0xf]
    %v3554 = vld [vmem:[%s3546 + $0x1c] sm:$0xf]
    %v3555 = vld [vmem:[%s3546 + $0x20] sm:$0xf]
    %v3556 = vld [vmem:[%s3546 + $0x24] sm:$0xf]
    %v3557 = vld [vmem:[%s3546 + $0x28] sm:$0xf]
    %v3558 = vld [vmem:[%s3546 + $0x2c] sm:$0xf]
    %v3559 = vld [vmem:[%s3546 + $0x30] sm:$0xf]
    %v3560 = vld [vmem:[%s3546 + $0x34] sm:$0xf]
    %v3561 = vld [vmem:[%s3546 + $0x38] sm:$0xf]
    %v3562 = vld [vmem:[%s3546 + $0x3c] sm:$0xf]
    %v3579 = vunpack.c.l.b16 %v3530
    %v3580 = vunpack.c.l.b16 %v3531
    %v3581 = vunpack.c.l.b16 %v3532
    %v3582 = vunpack.c.l.b16 %v3533
    %v3583 = vunpack.c.l.b16 %v3534
    %v3584 = vunpack.c.l.b16 %v3535
    %v3585 = vunpack.c.l.b16 %v3536
    %v3586 = vunpack.c.l.b16 %v3537
    %v3587 = vunpack.c.l.b16 %v3538
    %v3588 = vunpack.c.l.b16 %v3539
    %v3589 = vunpack.c.l.b16 %v3540
    %v3590 = vunpack.c.l.b16 %v3541
    %v3591 = vunpack.c.l.b16 %v3542
    %v3592 = vunpack.c.l.b16 %v3543
    %v3593 = vunpack.c.l.b16 %v3544
    %v3594 = vunpack.c.l.b16 %v3545
    %v3595 = vpack.c.b16 %v3580, %v3579
    %v3596 = vpack.c.b16 %v3582, %v3581
    %v3597 = vpack.c.b16 %v3584, %v3583
    %v3598 = vpack.c.b16 %v3586, %v3585
    %v3599 = vpack.c.b16 %v3588, %v3587
    %v3600 = vpack.c.b16 %v3590, %v3589
    %v3601 = vpack.c.b16 %v3592, %v3591
    %v3602 = vpack.c.b16 %v3594, %v3593
    %v3627 = vunpack.c.l.b16 %v3547
    %v3628 = vunpack.c.l.b16 %v3548
    %v3629 = vunpack.c.l.b16 %v3549
    %v3630 = vunpack.c.l.b16 %v3550
    %v3631 = vunpack.c.l.b16 %v3551
    %v3632 = vunpack.c.l.b16 %v3552
    %v3633 = vunpack.c.l.b16 %v3553
    %v3634 = vunpack.c.l.b16 %v3554
    %v3635 = vunpack.c.l.b16 %v3555
    %v3636 = vunpack.c.l.b16 %v3556
    %v3637 = vunpack.c.l.b16 %v3557
    %v3638 = vunpack.c.l.b16 %v3558
    %v3639 = vunpack.c.l.b16 %v3559
    %v3640 = vunpack.c.l.b16 %v3560
    %v3641 = vunpack.c.l.b16 %v3561
    %v3642 = vunpack.c.l.b16 %v3562
    %v3643 = vpack.c.b16 %v3628, %v3627
    %v3644 = vpack.c.b16 %v3630, %v3629
    %v3645 = vpack.c.b16 %v3632, %v3631
    %v3646 = vpack.c.b16 %v3634, %v3633
    %v3647 = vpack.c.b16 %v3636, %v3635
    %v3648 = vpack.c.b16 %v3638, %v3637
    %v3649 = vpack.c.b16 %v3640, %v3639
    %v3650 = vpack.c.b16 %v3642, %v3641
    %3659 = vmatpush.bf16.msra.mxu0 %v3650
    %3660 = vmatpush.bf16.msra.mxu0 %v3649
    %3661 = vmatpush.bf16.msra.mxu0 %v3648
    %3662 = vmatpush.bf16.msra.mxu0 %v3647
    %3663 = vmatpush.bf16.msra.mxu0 %v3646
    %3664 = vmatpush.bf16.msra.mxu0 %v3645
    %3665 = vmatpush.bf16.msra.mxu0 %v3644
    %3666 = vmatpush.bf16.msra.mxu0 %v3643
    %3667 = vmatmul.bf16.gmra.mxu0 %v3595
    %v3668 = vpop.f32.mrf.mxu0
    %v3669 = vadd.f32 0.0, %v3668
    %v3670 = vpop.f32.mrf.mxu0
    %v3671 = vadd.f32 0.0, %v3670
    %3672 = vmatmul.bf16.gmra.mxu0 %v3596
    %v3673 = vpop.f32.mrf.mxu0
    %v3674 = vadd.f32 0.0, %v3673
    %v3675 = vpop.f32.mrf.mxu0
    %v3676 = vadd.f32 0.0, %v3675
    %3677 = vmatmul.bf16.gmra.mxu0 %v3597
    %v3678 = vpop.f32.mrf.mxu0
    %v3679 = vadd.f32 0.0, %v3678
    %v3680 = vpop.f32.mrf.mxu0
    %v3681 = vadd.f32 0.0, %v3680
    %3682 = vmatmul.bf16.gmra.mxu0 %v3598
    %v3683 = vpop.f32.mrf.mxu0
    %v3684 = vadd.f32 0.0, %v3683
    %v3685 = vpop.f32.mrf.mxu0
    %v3686 = vadd.f32 0.0, %v3685
    %3687 = vmatmul.bf16.gmra.mxu0 %v3599
    %v3688 = vpop.f32.mrf.mxu0
    %v3689 = vadd.f32 0.0, %v3688
    %v3690 = vpop.f32.mrf.mxu0
    %v3691 = vadd.f32 0.0, %v3690
    %3692 = vmatmul.bf16.gmra.mxu0 %v3600
    %v3693 = vpop.f32.mrf.mxu0
    %v3694 = vadd.f32 0.0, %v3693
    %v3695 = vpop.f32.mrf.mxu0
    %v3696 = vadd.f32 0.0, %v3695
    %3697 = vmatmul.bf16.gmra.mxu0 %v3601
    %v3698 = vpop.f32.mrf.mxu0
    %v3699 = vadd.f32 0.0, %v3698
    %v3700 = vpop.f32.mrf.mxu0
    %v3701 = vadd.f32 0.0, %v3700
    %3702 = vmatmul.bf16.gmra.mxu0 %v3602
    %v3703 = vpop.f32.mrf.mxu0
    %v3704 = vadd.f32 0.0, %v3703
    %v3705 = vpop.f32.mrf.mxu0
    %v3706 = vadd.f32 0.0, %v3705
    %3707 = vdwg.mxu0
    %v3708 = vadd.f32 %v3514, %v3669
    %v3709 = vadd.f32 %v3515, %v3671
    %v3710 = vadd.f32 %v3516, %v3674
    %v3711 = vadd.f32 %v3517, %v3676
    %v3712 = vadd.f32 %v3518, %v3679
    %v3713 = vadd.f32 %v3519, %v3681
    %v3714 = vadd.f32 %v3520, %v3684
    %v3715 = vadd.f32 %v3521, %v3686
    %v3716 = vadd.f32 %v3522, %v3689
    %v3717 = vadd.f32 %v3523, %v3691
    %v3718 = vadd.f32 %v3524, %v3694
    %v3719 = vadd.f32 %v3525, %v3696
    %v3720 = vadd.f32 %v3526, %v3699
    %v3721 = vadd.f32 %v3527, %v3701
    %v3722 = vadd.f32 %v3528, %v3704
    %v3723 = vadd.f32 %v3529, %v3706
    %v3724 = vld [vmem:[%s2390] sm:$0xf]
    %v3725 = vld [vmem:[%s2390 + $0x4] sm:$0x1]
    %v3726 = vld [vmem:[%s2390 + $0x8] sm:$0xf]
    %v3727 = vld [vmem:[%s2390 + $0xc] sm:$0x1]
    %v3728 = vld [vmem:[%s2390 + $0x10] sm:$0xf]
    %v3729 = vld [vmem:[%s2390 + $0x14] sm:$0x1]
    %v3730 = vld [vmem:[%s2390 + $0x18] sm:$0xf]
    %v3731 = vld [vmem:[%s2390 + $0x1c] sm:$0x1]
    %v3732 = vld [vmem:[%s2390 + $0x20] sm:$0xf]
    %v3733 = vld [vmem:[%s2390 + $0x24] sm:$0x1]
    %v3734 = vld [vmem:[%s2390 + $0x28] sm:$0xf]
    %v3735 = vld [vmem:[%s2390 + $0x2c] sm:$0x1]
    %v3736 = vld [vmem:[%s2390 + $0x30] sm:$0xf]
    %v3737 = vld [vmem:[%s2390 + $0x34] sm:$0x1]
    %v3738 = vld [vmem:[%s2390 + $0x38] sm:$0xf]
    %v3739 = vld [vmem:[%s2390 + $0x3c] sm:$0x1]
    %v3740 = vld [vmem:[%s2390 + $0x50] sm:$0xf]
    %v3741 = vld [vmem:[%s2390 + $0x54] sm:$0x1]
    %v3742 = vld [vmem:[%s2390 + $0x58] sm:$0xf]
    %v3743 = vld [vmem:[%s2390 + $0x5c] sm:$0x1]
    %v3744 = vld [vmem:[%s2390 + $0x60] sm:$0xf]
    %v3745 = vld [vmem:[%s2390 + $0x64] sm:$0x1]
    %v3746 = vld [vmem:[%s2390 + $0x68] sm:$0xf]
    %v3747 = vld [vmem:[%s2390 + $0x6c] sm:$0x1]
    %v3748 = vld [vmem:[%s2390 + $0x70] sm:$0xf]
    %v3749 = vld [vmem:[%s2390 + $0x74] sm:$0x1]
    %v3750 = vld [vmem:[%s2390 + $0x78] sm:$0xf]
    %v3751 = vld [vmem:[%s2390 + $0x7c] sm:$0x1]
    %v3752 = vld [vmem:[%s2390 + $0x80] sm:$0xf]
    %v3753 = vld [vmem:[%s2390 + $0x84] sm:$0x1]
    %v3754 = vld [vmem:[%s2390 + $0x88] sm:$0xf]
    %v3755 = vld [vmem:[%s2390 + $0x8c] sm:$0x1]
    %v3757 = vshrl.u32 %v3724, 16
    %v3759 = vrot.slane %v3757, 4
    %v3760 = vshll.u32 %v3724, 16
    %v3762 = vrot.slane %v3760, 5
    %v3763 = vor.u32 %v3759, %v3762
    %v3764 = vrot.slane %v3763, 4
    %v3766 = vshll.u32 %v3725, 16
    %v3768 = vrot.slane %v3766, 5
    %v3769 = vsel %vm399, %v3764, %v3768
    %v3771 = vshrl.u32 %v3726, 16
    %v3773 = vrot.slane %v3771, 4
    %v3774 = vshll.u32 %v3726, 16
    %v3776 = vrot.slane %v3774, 5
    %v3777 = vor.u32 %v3773, %v3776
    %v3778 = vrot.slane %v3777, 4
    %v3780 = vshll.u32 %v3727, 16
    %v3782 = vrot.slane %v3780, 5
    %v3783 = vsel %vm399, %v3778, %v3782
    %v3785 = vshrl.u32 %v3728, 16
    %v3787 = vrot.slane %v3785, 4
    %v3788 = vshll.u32 %v3728, 16
    %v3790 = vrot.slane %v3788, 5
    %v3791 = vor.u32 %v3787, %v3790
    %v3792 = vrot.slane %v3791, 4
    %v3794 = vshll.u32 %v3729, 16
    %v3796 = vrot.slane %v3794, 5
    %v3797 = vsel %vm399, %v3792, %v3796
    %v3799 = vshrl.u32 %v3730, 16
    %v3801 = vrot.slane %v3799, 4
    %v3802 = vshll.u32 %v3730, 16
    %v3804 = vrot.slane %v3802, 5
    %v3805 = vor.u32 %v3801, %v3804
    %v3806 = vrot.slane %v3805, 4
    %v3808 = vshll.u32 %v3731, 16
    %v3810 = vrot.slane %v3808, 5
    %v3811 = vsel %vm399, %v3806, %v3810
    %v3813 = vshrl.u32 %v3732, 16
    %v3815 = vrot.slane %v3813, 4
    %v3816 = vshll.u32 %v3732, 16
    %v3818 = vrot.slane %v3816, 5
    %v3819 = vor.u32 %v3815, %v3818
    %v3820 = vrot.slane %v3819, 4
    %v3822 = vshll.u32 %v3733, 16
    %v3824 = vrot.slane %v3822, 5
    %v3825 = vsel %vm399, %v3820, %v3824
    %v3827 = vshrl.u32 %v3734, 16
    %v3829 = vrot.slane %v3827, 4
    %v3830 = vshll.u32 %v3734, 16
    %v3832 = vrot.slane %v3830, 5
    %v3833 = vor.u32 %v3829, %v3832
    %v3834 = vrot.slane %v3833, 4
    %v3836 = vshll.u32 %v3735, 16
    %v3838 = vrot.slane %v3836, 5
    %v3839 = vsel %vm399, %v3834, %v3838
    %v3841 = vshrl.u32 %v3736, 16
    %v3843 = vrot.slane %v3841, 4
    %v3844 = vshll.u32 %v3736, 16
    %v3846 = vrot.slane %v3844, 5
    %v3847 = vor.u32 %v3843, %v3846
    %v3848 = vrot.slane %v3847, 4
    %v3850 = vshll.u32 %v3737, 16
    %v3852 = vrot.slane %v3850, 5
    %v3853 = vsel %vm399, %v3848, %v3852
    %v3855 = vshrl.u32 %v3738, 16
    %v3857 = vrot.slane %v3855, 4
    %v3858 = vshll.u32 %v3738, 16
    %v3860 = vrot.slane %v3858, 5
    %v3861 = vor.u32 %v3857, %v3860
    %v3862 = vrot.slane %v3861, 4
    %v3864 = vshll.u32 %v3739, 16
    %v3866 = vrot.slane %v3864, 5
    %v3867 = vsel %vm399, %v3862, %v3866
    %v3869 = vshrl.u32 %v3740, 16
    %v3871 = vrot.slane %v3869, 4
    %v3872 = vshll.u32 %v3740, 16
    %v3874 = vrot.slane %v3872, 5
    %v3875 = vor.u32 %v3871, %v3874
    %v3876 = vrot.slane %v3875, 4
    %v3878 = vshll.u32 %v3741, 16
    %v3880 = vrot.slane %v3878, 5
    %v3881 = vsel %vm399, %v3876, %v3880
    %v3883 = vshrl.u32 %v3742, 16
    %v3885 = vrot.slane %v3883, 4
    %v3886 = vshll.u32 %v3742, 16
    %v3888 = vrot.slane %v3886, 5
    %v3889 = vor.u32 %v3885, %v3888
    %v3890 = vrot.slane %v3889, 4
    %v3892 = vshll.u32 %v3743, 16
    %v3894 = vrot.slane %v3892, 5
    %v3895 = vsel %vm399, %v3890, %v3894
    %v3897 = vshrl.u32 %v3744, 16
    %v3899 = vrot.slane %v3897, 4
    %v3900 = vshll.u32 %v3744, 16
    %v3902 = vrot.slane %v3900, 5
    %v3903 = vor.u32 %v3899, %v3902
    %v3904 = vrot.slane %v3903, 4
    %v3906 = vshll.u32 %v3745, 16
    %v3908 = vrot.slane %v3906, 5
    %v3909 = vsel %vm399, %v3904, %v3908
    %v3911 = vshrl.u32 %v3746, 16
    %v3913 = vrot.slane %v3911, 4
    %v3914 = vshll.u32 %v3746, 16
    %v3916 = vrot.slane %v3914, 5
    %v3917 = vor.u32 %v3913, %v3916
    %v3918 = vrot.slane %v3917, 4
    %v3920 = vshll.u32 %v3747, 16
    %v3922 = vrot.slane %v3920, 5
    %v3923 = vsel %vm399, %v3918, %v3922
    %v3925 = vshrl.u32 %v3748, 16
    %v3927 = vrot.slane %v3925, 4
    %v3928 = vshll.u32 %v3748, 16
    %v3930 = vrot.slane %v3928, 5
    %v3931 = vor.u32 %v3927, %v3930
    %v3932 = vrot.slane %v3931, 4
    %v3934 = vshll.u32 %v3749, 16
    %v3936 = vrot.slane %v3934, 5
    %v3937 = vsel %vm399, %v3932, %v3936
    %v3939 = vshrl.u32 %v3750, 16
    %v3941 = vrot.slane %v3939, 4
    %v3942 = vshll.u32 %v3750, 16
    %v3944 = vrot.slane %v3942, 5
    %v3945 = vor.u32 %v3941, %v3944
    %v3946 = vrot.slane %v3945, 4
    %v3948 = vshll.u32 %v3751, 16
    %v3950 = vrot.slane %v3948, 5
    %v3951 = vsel %vm399, %v3946, %v3950
    %v3953 = vshrl.u32 %v3752, 16
    %v3955 = vrot.slane %v3953, 4
    %v3956 = vshll.u32 %v3752, 16
    %v3958 = vrot.slane %v3956, 5
    %v3959 = vor.u32 %v3955, %v3958
    %v3960 = vrot.slane %v3959, 4
    %v3962 = vshll.u32 %v3753, 16
    %v3964 = vrot.slane %v3962, 5
    %v3965 = vsel %vm399, %v3960, %v3964
    %v3967 = vshrl.u32 %v3754, 16
    %v3969 = vrot.slane %v3967, 4
    %v3970 = vshll.u32 %v3754, 16
    %v3972 = vrot.slane %v3970, 5
    %v3973 = vor.u32 %v3969, %v3972
    %v3974 = vrot.slane %v3973, 4
    %v3976 = vshll.u32 %v3755, 16
    %v3978 = vrot.slane %v3976, 5
    %v3979 = vsel %vm399, %v3974, %v3978
    %s3980 = scalar_lea.vmem %s3, 256
    %v3981 = vld [vmem:[%s3980] sm:$0xf]
    %v3982 = vld [vmem:[%s3980 + $0x4] sm:$0xf]
    %v3983 = vld [vmem:[%s3980 + $0x8] sm:$0xf]
    %v3984 = vld [vmem:[%s3980 + $0xc] sm:$0xf]
    %v3985 = vld [vmem:[%s3980 + $0x10] sm:$0xf]
    %v3986 = vld [vmem:[%s3980 + $0x14] sm:$0xf]
    %v3987 = vld [vmem:[%s3980 + $0x18] sm:$0xf]
    %v3988 = vld [vmem:[%s3980 + $0x1c] sm:$0xf]
    %v3989 = vld [vmem:[%s3980 + $0x20] sm:$0xf]
    %v3990 = vld [vmem:[%s3980 + $0x24] sm:$0xf]
    %v3991 = vld [vmem:[%s3980 + $0x28] sm:$0xf]
    %v3992 = vld [vmem:[%s3980 + $0x2c] sm:$0xf]
    %v3993 = vld [vmem:[%s3980 + $0x30] sm:$0xf]
    %v3994 = vld [vmem:[%s3980 + $0x34] sm:$0xf]
    %v3995 = vld [vmem:[%s3980 + $0x38] sm:$0xf]
    %v3996 = vld [vmem:[%s3980 + $0x3c] sm:$0xf]
    %v3997 = vunpack.c.l.b16 %v3769
    %v3998 = vunpack.c.l.b16 %v3783
    %v3999 = vunpack.c.l.b16 %v3797
    %v4000 = vunpack.c.l.b16 %v3811
    %v4001 = vunpack.c.l.b16 %v3825
    %v4002 = vunpack.c.l.b16 %v3839
    %v4003 = vunpack.c.l.b16 %v3853
    %v4004 = vunpack.c.l.b16 %v3867
    %v4005 = vunpack.c.l.b16 %v3881
    %v4006 = vunpack.c.l.b16 %v3895
    %v4007 = vunpack.c.l.b16 %v3909
    %v4008 = vunpack.c.l.b16 %v3923
    %v4009 = vunpack.c.l.b16 %v3937
    %v4010 = vunpack.c.l.b16 %v3951
    %v4011 = vunpack.c.l.b16 %v3965
    %v4012 = vunpack.c.l.b16 %v3979
    %v4013 = vpack.c.b16 %v3998, %v3997
    %v4014 = vpack.c.b16 %v4000, %v3999
    %v4015 = vpack.c.b16 %v4002, %v4001
    %v4016 = vpack.c.b16 %v4004, %v4003
    %v4017 = vpack.c.b16 %v4006, %v4005
    %v4018 = vpack.c.b16 %v4008, %v4007
    %v4019 = vpack.c.b16 %v4010, %v4009
    %v4020 = vpack.c.b16 %v4012, %v4011
    %v4045 = vunpack.c.l.b16 %v3981
    %v4046 = vunpack.c.l.b16 %v3982
    %v4047 = vunpack.c.l.b16 %v3983
    %v4048 = vunpack.c.l.b16 %v3984
    %v4049 = vunpack.c.l.b16 %v3985
    %v4050 = vunpack.c.l.b16 %v3986
    %v4051 = vunpack.c.l.b16 %v3987
    %v4052 = vunpack.c.l.b16 %v3988
    %v4053 = vunpack.c.l.b16 %v3989
    %v4054 = vunpack.c.l.b16 %v3990
    %v4055 = vunpack.c.l.b16 %v3991
    %v4056 = vunpack.c.l.b16 %v3992
    %v4057 = vunpack.c.l.b16 %v3993
    %v4058 = vunpack.c.l.b16 %v3994
    %v4059 = vunpack.c.l.b16 %v3995
    %v4060 = vunpack.c.l.b16 %v3996
    %v4061 = vpack.c.b16 %v4046, %v4045
    %v4062 = vpack.c.b16 %v4048, %v4047
    %v4063 = vpack.c.b16 %v4050, %v4049
    %v4064 = vpack.c.b16 %v4052, %v4051
    %v4065 = vpack.c.b16 %v4054, %v4053
    %v4066 = vpack.c.b16 %v4056, %v4055
    %v4067 = vpack.c.b16 %v4058, %v4057
    %v4068 = vpack.c.b16 %v4060, %v4059
    %4077 = vmatpush.bf16.msra.mxu0 %v4068
    %4078 = vmatpush.bf16.msra.mxu0 %v4067
    %4079 = vmatpush.bf16.msra.mxu0 %v4066
    %4080 = vmatpush.bf16.msra.mxu0 %v4065
    %4081 = vmatpush.bf16.msra.mxu0 %v4064
    %4082 = vmatpush.bf16.msra.mxu0 %v4063
    %4083 = vmatpush.bf16.msra.mxu0 %v4062
    %4084 = vmatpush.bf16.msra.mxu0 %v4061
    %4085 = vmatmul.bf16.gmra.mxu0 %v4013
    %v4086 = vpop.f32.mrf.mxu0
    %v4087 = vadd.f32 0.0, %v4086
    %v4088 = vpop.f32.mrf.mxu0
    %v4089 = vadd.f32 0.0, %v4088
    %4090 = vmatmul.bf16.gmra.mxu0 %v4014
    %v4091 = vpop.f32.mrf.mxu0
    %v4092 = vadd.f32 0.0, %v4091
    %v4093 = vpop.f32.mrf.mxu0
    %v4094 = vadd.f32 0.0, %v4093
    %4095 = vmatmul.bf16.gmra.mxu0 %v4015
    %v4096 = vpop.f32.mrf.mxu0
    %v4097 = vadd.f32 0.0, %v4096
    %v4098 = vpop.f32.mrf.mxu0
    %v4099 = vadd.f32 0.0, %v4098
    %4100 = vmatmul.bf16.gmra.mxu0 %v4016
    %v4101 = vpop.f32.mrf.mxu0
    %v4102 = vadd.f32 0.0, %v4101
    %v4103 = vpop.f32.mrf.mxu0
    %v4104 = vadd.f32 0.0, %v4103
    %4105 = vmatmul.bf16.gmra.mxu0 %v4017
    %v4106 = vpop.f32.mrf.mxu0
    %v4107 = vadd.f32 0.0, %v4106
    %v4108 = vpop.f32.mrf.mxu0
    %v4109 = vadd.f32 0.0, %v4108
    %4110 = vmatmul.bf16.gmra.mxu0 %v4018
    %v4111 = vpop.f32.mrf.mxu0
    %v4112 = vadd.f32 0.0, %v4111
    %v4113 = vpop.f32.mrf.mxu0
    %v4114 = vadd.f32 0.0, %v4113
    %4115 = vmatmul.bf16.gmra.mxu0 %v4019
    %v4116 = vpop.f32.mrf.mxu0
    %v4117 = vadd.f32 0.0, %v4116
    %v4118 = vpop.f32.mrf.mxu0
    %v4119 = vadd.f32 0.0, %v4118
    %4120 = vmatmul.bf16.gmra.mxu0 %v4020
    %v4121 = vpop.f32.mrf.mxu0
    %v4122 = vadd.f32 0.0, %v4121
    %v4123 = vpop.f32.mrf.mxu0
    %v4124 = vadd.f32 0.0, %v4123
    %4125 = vdwg.mxu0
    %v4126 = vadd.f32 %v3708, %v4087
    %v4127 = vadd.f32 %v3709, %v4089
    %v4128 = vadd.f32 %v3710, %v4092
    %v4129 = vadd.f32 %v3711, %v4094
    %v4130 = vadd.f32 %v3712, %v4097
    %v4131 = vadd.f32 %v3713, %v4099
    %v4132 = vadd.f32 %v3714, %v4102
    %v4133 = vadd.f32 %v3715, %v4104
    %v4134 = vadd.f32 %v3716, %v4107
    %v4135 = vadd.f32 %v3717, %v4109
    %v4136 = vadd.f32 %v3718, %v4112
    %v4137 = vadd.f32 %v3719, %v4114
    %v4138 = vadd.f32 %v3720, %v4117
    %v4139 = vadd.f32 %v3721, %v4119
    %v4140 = vadd.f32 %v3722, %v4122
    %v4141 = vadd.f32 %v3723, %v4124
    %v4142 = vld [vmem:[%s2390] sm:$0xe]
    %v4143 = vld [vmem:[%s2390 + $0x8] sm:$0xe]
    %v4144 = vld [vmem:[%s2390 + $0x10] sm:$0xe]
    %v4145 = vld [vmem:[%s2390 + $0x18] sm:$0xe]
    %v4146 = vld [vmem:[%s2390 + $0x20] sm:$0xe]
    %v4147 = vld [vmem:[%s2390 + $0x28] sm:$0xe]
    %v4148 = vld [vmem:[%s2390 + $0x30] sm:$0xe]
    %v4149 = vld [vmem:[%s2390 + $0x38] sm:$0xe]
    %v4150 = vld [vmem:[%s2390 + $0x50] sm:$0xe]
    %v4151 = vld [vmem:[%s2390 + $0x58] sm:$0xe]
    %v4152 = vld [vmem:[%s2390 + $0x60] sm:$0xe]
    %v4153 = vld [vmem:[%s2390 + $0x68] sm:$0xe]
    %v4154 = vld [vmem:[%s2390 + $0x70] sm:$0xe]
    %v4155 = vld [vmem:[%s2390 + $0x78] sm:$0xe]
    %v4156 = vld [vmem:[%s2390 + $0x80] sm:$0xe]
    %v4157 = vld [vmem:[%s2390 + $0x88] sm:$0xe]
    %v4190 = vrot.slane %v4142, 5
    %v4191 = vrot.slane %v4190, 4
    %v4192 = vrot.slane %v3725, 5
    %v4193 = vsel %vm3303, %v4191, %v4192
    %v4194 = vrot.slane %v4143, 5
    %v4195 = vrot.slane %v4194, 4
    %v4196 = vrot.slane %v3727, 5
    %v4197 = vsel %vm3303, %v4195, %v4196
    %v4198 = vrot.slane %v4144, 5
    %v4199 = vrot.slane %v4198, 4
    %v4200 = vrot.slane %v3729, 5
    %v4201 = vsel %vm3303, %v4199, %v4200
    %v4202 = vrot.slane %v4145, 5
    %v4203 = vrot.slane %v4202, 4
    %v4204 = vrot.slane %v3731, 5
    %v4205 = vsel %vm3303, %v4203, %v4204
    %v4206 = vrot.slane %v4146, 5
    %v4207 = vrot.slane %v4206, 4
    %v4208 = vrot.slane %v3733, 5
    %v4209 = vsel %vm3303, %v4207, %v4208
    %v4210 = vrot.slane %v4147, 5
    %v4211 = vrot.slane %v4210, 4
    %v4212 = vrot.slane %v3735, 5
    %v4213 = vsel %vm3303, %v4211, %v4212
    %v4214 = vrot.slane %v4148, 5
    %v4215 = vrot.slane %v4214, 4
    %v4216 = vrot.slane %v3737, 5
    %v4217 = vsel %vm3303, %v4215, %v4216
    %v4218 = vrot.slane %v4149, 5
    %v4219 = vrot.slane %v4218, 4
    %v4220 = vrot.slane %v3739, 5
    %v4221 = vsel %vm3303, %v4219, %v4220
    %v4222 = vrot.slane %v4150, 5
    %v4223 = vrot.slane %v4222, 4
    %v4224 = vrot.slane %v3741, 5
    %v4225 = vsel %vm3303, %v4223, %v4224
    %v4226 = vrot.slane %v4151, 5
    %v4227 = vrot.slane %v4226, 4
    %v4228 = vrot.slane %v3743, 5
    %v4229 = vsel %vm3303, %v4227, %v4228
    %v4230 = vrot.slane %v4152, 5
    %v4231 = vrot.slane %v4230, 4
    %v4232 = vrot.slane %v3745, 5
    %v4233 = vsel %vm3303, %v4231, %v4232
    %v4234 = vrot.slane %v4153, 5
    %v4235 = vrot.slane %v4234, 4
    %v4236 = vrot.slane %v3747, 5
    %v4237 = vsel %vm3303, %v4235, %v4236
    %v4238 = vrot.slane %v4154, 5
    %v4239 = vrot.slane %v4238, 4
    %v4240 = vrot.slane %v3749, 5
    %v4241 = vsel %vm3303, %v4239, %v4240
    %v4242 = vrot.slane %v4155, 5
    %v4243 = vrot.slane %v4242, 4
    %v4244 = vrot.slane %v3751, 5
    %v4245 = vsel %vm3303, %v4243, %v4244
    %v4246 = vrot.slane %v4156, 5
    %v4247 = vrot.slane %v4246, 4
    %v4248 = vrot.slane %v3753, 5
    %v4249 = vsel %vm3303, %v4247, %v4248
    %v4250 = vrot.slane %v4157, 5
    %v4251 = vrot.slane %v4250, 4
    %v4252 = vrot.slane %v3755, 5
    %v4253 = vsel %vm3303, %v4251, %v4252
    %s4254 = scalar_lea.vmem %s3, 320
    %v4255 = vld [vmem:[%s4254] sm:$0xf]
    %v4256 = vld [vmem:[%s4254 + $0x4] sm:$0xf]
    %v4257 = vld [vmem:[%s4254 + $0x8] sm:$0xf]
    %v4258 = vld [vmem:[%s4254 + $0xc] sm:$0xf]
    %v4259 = vld [vmem:[%s4254 + $0x10] sm:$0xf]
    %v4260 = vld [vmem:[%s4254 + $0x14] sm:$0xf]
    %v4261 = vld [vmem:[%s4254 + $0x18] sm:$0xf]
    %v4262 = vld [vmem:[%s4254 + $0x1c] sm:$0xf]
    %v4263 = vld [vmem:[%s4254 + $0x20] sm:$0xf]
    %v4264 = vld [vmem:[%s4254 + $0x24] sm:$0xf]
    %v4265 = vld [vmem:[%s4254 + $0x28] sm:$0xf]
    %v4266 = vld [vmem:[%s4254 + $0x2c] sm:$0xf]
    %v4267 = vld [vmem:[%s4254 + $0x30] sm:$0xf]
    %v4268 = vld [vmem:[%s4254 + $0x34] sm:$0xf]
    %v4269 = vld [vmem:[%s4254 + $0x38] sm:$0xf]
    %v4270 = vld [vmem:[%s4254 + $0x3c] sm:$0xf]
    %v4271 = vunpack.c.l.b16 %v4193
    %v4272 = vunpack.c.l.b16 %v4197
    %v4273 = vunpack.c.l.b16 %v4201
    %v4274 = vunpack.c.l.b16 %v4205
    %v4275 = vunpack.c.l.b16 %v4209
    %v4276 = vunpack.c.l.b16 %v4213
    %v4277 = vunpack.c.l.b16 %v4217
    %v4278 = vunpack.c.l.b16 %v4221
    %v4279 = vunpack.c.l.b16 %v4225
    %v4280 = vunpack.c.l.b16 %v4229
    %v4281 = vunpack.c.l.b16 %v4233
    %v4282 = vunpack.c.l.b16 %v4237
    %v4283 = vunpack.c.l.b16 %v4241
    %v4284 = vunpack.c.l.b16 %v4245
    %v4285 = vunpack.c.l.b16 %v4249
    %v4286 = vunpack.c.l.b16 %v4253
    %v4287 = vpack.c.b16 %v4272, %v4271
    %v4288 = vpack.c.b16 %v4274, %v4273
    %v4289 = vpack.c.b16 %v4276, %v4275
    %v4290 = vpack.c.b16 %v4278, %v4277
    %v4291 = vpack.c.b16 %v4280, %v4279
    %v4292 = vpack.c.b16 %v4282, %v4281
    %v4293 = vpack.c.b16 %v4284, %v4283
    %v4294 = vpack.c.b16 %v4286, %v4285
    %v4319 = vunpack.c.l.b16 %v4255
    %v4320 = vunpack.c.l.b16 %v4256
    %v4321 = vunpack.c.l.b16 %v4257
    %v4322 = vunpack.c.l.b16 %v4258
    %v4323 = vunpack.c.l.b16 %v4259
    %v4324 = vunpack.c.l.b16 %v4260
    %v4325 = vunpack.c.l.b16 %v4261
    %v4326 = vunpack.c.l.b16 %v4262
    %v4327 = vunpack.c.l.b16 %v4263
    %v4328 = vunpack.c.l.b16 %v4264
    %v4329 = vunpack.c.l.b16 %v4265
    %v4330 = vunpack.c.l.b16 %v4266
    %v4331 = vunpack.c.l.b16 %v4267
    %v4332 = vunpack.c.l.b16 %v4268
    %v4333 = vunpack.c.l.b16 %v4269
    %v4334 = vunpack.c.l.b16 %v4270
    %v4335 = vpack.c.b16 %v4320, %v4319
    %v4336 = vpack.c.b16 %v4322, %v4321
    %v4337 = vpack.c.b16 %v4324, %v4323
    %v4338 = vpack.c.b16 %v4326, %v4325
    %v4339 = vpack.c.b16 %v4328, %v4327
    %v4340 = vpack.c.b16 %v4330, %v4329
    %v4341 = vpack.c.b16 %v4332, %v4331
    %v4342 = vpack.c.b16 %v4334, %v4333
    %4351 = vmatpush.bf16.msra.mxu0 %v4342
    %4352 = vmatpush.bf16.msra.mxu0 %v4341
    %4353 = vmatpush.bf16.msra.mxu0 %v4340
    %4354 = vmatpush.bf16.msra.mxu0 %v4339
    %4355 = vmatpush.bf16.msra.mxu0 %v4338
    %4356 = vmatpush.bf16.msra.mxu0 %v4337
    %4357 = vmatpush.bf16.msra.mxu0 %v4336
    %4358 = vmatpush.bf16.msra.mxu0 %v4335
    %4359 = vmatmul.bf16.gmra.mxu0 %v4287
    %v4360 = vpop.f32.mrf.mxu0
    %v4361 = vadd.f32 0.0, %v4360
    %v4362 = vpop.f32.mrf.mxu0
    %v4363 = vadd.f32 0.0, %v4362
    %4364 = vmatmul.bf16.gmra.mxu0 %v4288
    %v4365 = vpop.f32.mrf.mxu0
    %v4366 = vadd.f32 0.0, %v4365
    %v4367 = vpop.f32.mrf.mxu0
    %v4368 = vadd.f32 0.0, %v4367
    %4369 = vmatmul.bf16.gmra.mxu0 %v4289
    %v4370 = vpop.f32.mrf.mxu0
    %v4371 = vadd.f32 0.0, %v4370
    %v4372 = vpop.f32.mrf.mxu0
    %v4373 = vadd.f32 0.0, %v4372
    %4374 = vmatmul.bf16.gmra.mxu0 %v4290
    %v4375 = vpop.f32.mrf.mxu0
    %v4376 = vadd.f32 0.0, %v4375
    %v4377 = vpop.f32.mrf.mxu0
    %v4378 = vadd.f32 0.0, %v4377
    %4379 = vmatmul.bf16.gmra.mxu0 %v4291
    %v4380 = vpop.f32.mrf.mxu0
    %v4381 = vadd.f32 0.0, %v4380
    %v4382 = vpop.f32.mrf.mxu0
    %v4383 = vadd.f32 0.0, %v4382
    %4384 = vmatmul.bf16.gmra.mxu0 %v4292
    %v4385 = vpop.f32.mrf.mxu0
    %v4386 = vadd.f32 0.0, %v4385
    %v4387 = vpop.f32.mrf.mxu0
    %v4388 = vadd.f32 0.0, %v4387
    %4389 = vmatmul.bf16.gmra.mxu0 %v4293
    %v4390 = vpop.f32.mrf.mxu0
    %v4391 = vadd.f32 0.0, %v4390
    %v4392 = vpop.f32.mrf.mxu0
    %v4393 = vadd.f32 0.0, %v4392
    %4394 = vmatmul.bf16.gmra.mxu0 %v4294
    %v4395 = vpop.f32.mrf.mxu0
    %v4396 = vadd.f32 0.0, %v4395
    %v4397 = vpop.f32.mrf.mxu0
    %v4398 = vadd.f32 0.0, %v4397
    %4399 = vdwg.mxu0
    %v4400 = vadd.f32 %v4126, %v4361
    %v4401 = vadd.f32 %v4127, %v4363
    %v4402 = vadd.f32 %v4128, %v4366
    %v4403 = vadd.f32 %v4129, %v4368
    %v4404 = vadd.f32 %v4130, %v4371
    %v4405 = vadd.f32 %v4131, %v4373
    %v4406 = vadd.f32 %v4132, %v4376
    %v4407 = vadd.f32 %v4133, %v4378
    %v4408 = vadd.f32 %v4134, %v4381
    %v4409 = vadd.f32 %v4135, %v4383
    %v4410 = vadd.f32 %v4136, %v4386
    %v4411 = vadd.f32 %v4137, %v4388
    %v4412 = vadd.f32 %v4138, %v4391
    %v4413 = vadd.f32 %v4139, %v4393
    %v4414 = vadd.f32 %v4140, %v4396
    %v4415 = vadd.f32 %v4141, %v4398
    %s4416 = scalar_lea.vmem [#allocation2], 16
    %v4417 = vld [vmem:[%s4416] sm:$0xf]
    %v4418 = vld [vmem:[%s4416 + $0x8] sm:$0xf]
    %v4419 = vld [vmem:[%s4416 + $0x10] sm:$0xf]
    %v4420 = vld [vmem:[%s4416 + $0x18] sm:$0xf]
    %v4421 = vld [vmem:[%s4416 + $0x20] sm:$0xf]
    %v4422 = vld [vmem:[%s4416 + $0x28] sm:$0xf]
    %v4423 = vld [vmem:[%s4416 + $0x30] sm:$0xf]
    %v4424 = vld [vmem:[%s4416 + $0x38] sm:$0xf]
    %v4425 = vld [vmem:[%s4416 + $0x50] sm:$0xf]
    %v4426 = vld [vmem:[%s4416 + $0x58] sm:$0xf]
    %v4427 = vld [vmem:[%s4416 + $0x60] sm:$0xf]
    %v4428 = vld [vmem:[%s4416 + $0x68] sm:$0xf]
    %v4429 = vld [vmem:[%s4416 + $0x70] sm:$0xf]
    %v4430 = vld [vmem:[%s4416 + $0x78] sm:$0xf]
    %v4431 = vld [vmem:[%s4416 + $0x80] sm:$0xf]
    %v4432 = vld [vmem:[%s4416 + $0x88] sm:$0xf]
    %s4433 = scalar_lea.vmem %s3, 384
    %v4434 = vld [vmem:[%s4433] sm:$0xf]
    %v4435 = vld [vmem:[%s4433 + $0x4] sm:$0xf]
    %v4436 = vld [vmem:[%s4433 + $0x8] sm:$0xf]
    %v4437 = vld [vmem:[%s4433 + $0xc] sm:$0xf]
    %v4438 = vld [vmem:[%s4433 + $0x10] sm:$0xf]
    %v4439 = vld [vmem:[%s4433 + $0x14] sm:$0xf]
    %v4440 = vld [vmem:[%s4433 + $0x18] sm:$0xf]
    %v4441 = vld [vmem:[%s4433 + $0x1c] sm:$0xf]
    %v4442 = vld [vmem:[%s4433 + $0x20] sm:$0xf]
    %v4443 = vld [vmem:[%s4433 + $0x24] sm:$0xf]
    %v4444 = vld [vmem:[%s4433 + $0x28] sm:$0xf]
    %v4445 = vld [vmem:[%s4433 + $0x2c] sm:$0xf]
    %v4446 = vld [vmem:[%s4433 + $0x30] sm:$0xf]
    %v4447 = vld [vmem:[%s4433 + $0x34] sm:$0xf]
    %v4448 = vld [vmem:[%s4433 + $0x38] sm:$0xf]
    %v4449 = vld [vmem:[%s4433 + $0x3c] sm:$0xf]
    %v4466 = vunpack.c.l.b16 %v4417
    %v4467 = vunpack.c.l.b16 %v4418
    %v4468 = vunpack.c.l.b16 %v4419
    %v4469 = vunpack.c.l.b16 %v4420
    %v4470 = vunpack.c.l.b16 %v4421
    %v4471 = vunpack.c.l.b16 %v4422
    %v4472 = vunpack.c.l.b16 %v4423
    %v4473 = vunpack.c.l.b16 %v4424
    %v4474 = vunpack.c.l.b16 %v4425
    %v4475 = vunpack.c.l.b16 %v4426
    %v4476 = vunpack.c.l.b16 %v4427
    %v4477 = vunpack.c.l.b16 %v4428
    %v4478 = vunpack.c.l.b16 %v4429
    %v4479 = vunpack.c.l.b16 %v4430
    %v4480 = vunpack.c.l.b16 %v4431
    %v4481 = vunpack.c.l.b16 %v4432
    %v4482 = vpack.c.b16 %v4467, %v4466
    %v4483 = vpack.c.b16 %v4469, %v4468
    %v4484 = vpack.c.b16 %v4471, %v4470
    %v4485 = vpack.c.b16 %v4473, %v4472
    %v4486 = vpack.c.b16 %v4475, %v4474
    %v4487 = vpack.c.b16 %v4477, %v4476
    %v4488 = vpack.c.b16 %v4479, %v4478
    %v4489 = vpack.c.b16 %v4481, %v4480
    %v4514 = vunpack.c.l.b16 %v4434
    %v4515 = vunpack.c.l.b16 %v4435
    %v4516 = vunpack.c.l.b16 %v4436
    %v4517 = vunpack.c.l.b16 %v4437
    %v4518 = vunpack.c.l.b16 %v4438
    %v4519 = vunpack.c.l.b16 %v4439
    %v4520 = vunpack.c.l.b16 %v4440
    %v4521 = vunpack.c.l.b16 %v4441
    %v4522 = vunpack.c.l.b16 %v4442
    %v4523 = vunpack.c.l.b16 %v4443
    %v4524 = vunpack.c.l.b16 %v4444
    %v4525 = vunpack.c.l.b16 %v4445
    %v4526 = vunpack.c.l.b16 %v4446
    %v4527 = vunpack.c.l.b16 %v4447
    %v4528 = vunpack.c.l.b16 %v4448
    %v4529 = vunpack.c.l.b16 %v4449
    %v4530 = vpack.c.b16 %v4515, %v4514
    %v4531 = vpack.c.b16 %v4517, %v4516
    %v4532 = vpack.c.b16 %v4519, %v4518
    %v4533 = vpack.c.b16 %v4521, %v4520
    %v4534 = vpack.c.b16 %v4523, %v4522
    %v4535 = vpack.c.b16 %v4525, %v4524
    %v4536 = vpack.c.b16 %v4527, %v4526
    %v4537 = vpack.c.b16 %v4529, %v4528
    %4546 = vmatpush.bf16.msra.mxu0 %v4537
    %4547 = vmatpush.bf16.msra.mxu0 %v4536
    %4548 = vmatpush.bf16.msra.mxu0 %v4535
    %4549 = vmatpush.bf16.msra.mxu0 %v4534
    %4550 = vmatpush.bf16.msra.mxu0 %v4533
    %4551 = vmatpush.bf16.msra.mxu0 %v4532
    %4552 = vmatpush.bf16.msra.mxu0 %v4531
    %4553 = vmatpush.bf16.msra.mxu0 %v4530
    %4554 = vmatmul.bf16.gmra.mxu0 %v4482
    %v4555 = vpop.f32.mrf.mxu0
    %v4556 = vadd.f32 0.0, %v4555
    %v4557 = vpop.f32.mrf.mxu0
    %v4558 = vadd.f32 0.0, %v4557
    %4559 = vmatmul.bf16.gmra.mxu0 %v4483
    %v4560 = vpop.f32.mrf.mxu0
    %v4561 = vadd.f32 0.0, %v4560
    %v4562 = vpop.f32.mrf.mxu0
    %v4563 = vadd.f32 0.0, %v4562
    %4564 = vmatmul.bf16.gmra.mxu0 %v4484
    %v4565 = vpop.f32.mrf.mxu0
    %v4566 = vadd.f32 0.0, %v4565
    %v4567 = vpop.f32.mrf.mxu0
    %v4568 = vadd.f32 0.0, %v4567
    %4569 = vmatmul.bf16.gmra.mxu0 %v4485
    %v4570 = vpop.f32.mrf.mxu0
    %v4571 = vadd.f32 0.0, %v4570
    %v4572 = vpop.f32.mrf.mxu0
    %v4573 = vadd.f32 0.0, %v4572
    %4574 = vmatmul.bf16.gmra.mxu0 %v4486
    %v4575 = vpop.f32.mrf.mxu0
    %v4576 = vadd.f32 0.0, %v4575
    %v4577 = vpop.f32.mrf.mxu0
    %v4578 = vadd.f32 0.0, %v4577
    %4579 = vmatmul.bf16.gmra.mxu0 %v4487
    %v4580 = vpop.f32.mrf.mxu0
    %v4581 = vadd.f32 0.0, %v4580
    %v4582 = vpop.f32.mrf.mxu0
    %v4583 = vadd.f32 0.0, %v4582
    %4584 = vmatmul.bf16.gmra.mxu0 %v4488
    %v4585 = vpop.f32.mrf.mxu0
    %v4586 = vadd.f32 0.0, %v4585
    %v4587 = vpop.f32.mrf.mxu0
    %v4588 = vadd.f32 0.0, %v4587
    %4589 = vmatmul.bf16.gmra.mxu0 %v4489
    %v4590 = vpop.f32.mrf.mxu0
    %v4591 = vadd.f32 0.0, %v4590
    %v4592 = vpop.f32.mrf.mxu0
    %v4593 = vadd.f32 0.0, %v4592
    %4594 = vdwg.mxu0
    %v4595 = vadd.f32 %v4400, %v4556
    %v4596 = vadd.f32 %v4401, %v4558
    %v4597 = vadd.f32 %v4402, %v4561
    %v4598 = vadd.f32 %v4403, %v4563
    %v4599 = vadd.f32 %v4404, %v4566
    %v4600 = vadd.f32 %v4405, %v4568
    %v4601 = vadd.f32 %v4406, %v4571
    %v4602 = vadd.f32 %v4407, %v4573
    %v4603 = vadd.f32 %v4408, %v4576
    %v4604 = vadd.f32 %v4409, %v4578
    %v4605 = vadd.f32 %v4410, %v4581
    %v4606 = vadd.f32 %v4411, %v4583
    %v4607 = vadd.f32 %v4412, %v4586
    %v4608 = vadd.f32 %v4413, %v4588
    %v4609 = vadd.f32 %v4414, %v4591
    %v4610 = vadd.f32 %v4415, %v4593
    %v4611 = vld [vmem:[%s4416] sm:$0xf]
    %v4612 = vld [vmem:[%s4416 + $0x4] sm:$0x1]
    %v4613 = vld [vmem:[%s4416 + $0x8] sm:$0xf]
    %v4614 = vld [vmem:[%s4416 + $0xc] sm:$0x1]
    %v4615 = vld [vmem:[%s4416 + $0x10] sm:$0xf]
    %v4616 = vld [vmem:[%s4416 + $0x14] sm:$0x1]
    %v4617 = vld [vmem:[%s4416 + $0x18] sm:$0xf]
    %v4618 = vld [vmem:[%s4416 + $0x1c] sm:$0x1]
    %v4619 = vld [vmem:[%s4416 + $0x20] sm:$0xf]
    %v4620 = vld [vmem:[%s4416 + $0x24] sm:$0x1]
    %v4621 = vld [vmem:[%s4416 + $0x28] sm:$0xf]
    %v4622 = vld [vmem:[%s4416 + $0x2c] sm:$0x1]
    %v4623 = vld [vmem:[%s4416 + $0x30] sm:$0xf]
    %v4624 = vld [vmem:[%s4416 + $0x34] sm:$0x1]
    %v4625 = vld [vmem:[%s4416 + $0x38] sm:$0xf]
    %v4626 = vld [vmem:[%s4416 + $0x3c] sm:$0x1]
    %v4627 = vld [vmem:[%s4416 + $0x50] sm:$0xf]
    %v4628 = vld [vmem:[%s4416 + $0x54] sm:$0x1]
    %v4629 = vld [vmem:[%s4416 + $0x58] sm:$0xf]
    %v4630 = vld [vmem:[%s4416 + $0x5c] sm:$0x1]
    %v4631 = vld [vmem:[%s4416 + $0x60] sm:$0xf]
    %v4632 = vld [vmem:[%s4416 + $0x64] sm:$0x1]
    %v4633 = vld [vmem:[%s4416 + $0x68] sm:$0xf]
    %v4634 = vld [vmem:[%s4416 + $0x6c] sm:$0x1]
    %v4635 = vld [vmem:[%s4416 + $0x70] sm:$0xf]
    %v4636 = vld [vmem:[%s4416 + $0x74] sm:$0x1]
    %v4637 = vld [vmem:[%s4416 + $0x78] sm:$0xf]
    %v4638 = vld [vmem:[%s4416 + $0x7c] sm:$0x1]
    %v4639 = vld [vmem:[%s4416 + $0x80] sm:$0xf]
    %v4640 = vld [vmem:[%s4416 + $0x84] sm:$0x1]
    %v4641 = vld [vmem:[%s4416 + $0x88] sm:$0xf]
    %v4642 = vld [vmem:[%s4416 + $0x8c] sm:$0x1]
    %v4644 = vshrl.u32 %v4611, 16
    %v4646 = vrot.slane %v4644, 4
    %v4647 = vshll.u32 %v4611, 16
    %v4649 = vrot.slane %v4647, 5
    %v4650 = vor.u32 %v4646, %v4649
    %v4651 = vrot.slane %v4650, 4
    %v4653 = vshll.u32 %v4612, 16
    %v4655 = vrot.slane %v4653, 5
    %v4656 = vsel %vm399, %v4651, %v4655
    %v4658 = vshrl.u32 %v4613, 16
    %v4660 = vrot.slane %v4658, 4
    %v4661 = vshll.u32 %v4613, 16
    %v4663 = vrot.slane %v4661, 5
    %v4664 = vor.u32 %v4660, %v4663
    %v4665 = vrot.slane %v4664, 4
    %v4667 = vshll.u32 %v4614, 16
    %v4669 = vrot.slane %v4667, 5
    %v4670 = vsel %vm399, %v4665, %v4669
    %v4672 = vshrl.u32 %v4615, 16
    %v4674 = vrot.slane %v4672, 4
    %v4675 = vshll.u32 %v4615, 16
    %v4677 = vrot.slane %v4675, 5
    %v4678 = vor.u32 %v4674, %v4677
    %v4679 = vrot.slane %v4678, 4
    %v4681 = vshll.u32 %v4616, 16
    %v4683 = vrot.slane %v4681, 5
    %v4684 = vsel %vm399, %v4679, %v4683
    %v4686 = vshrl.u32 %v4617, 16
    %v4688 = vrot.slane %v4686, 4
    %v4689 = vshll.u32 %v4617, 16
    %v4691 = vrot.slane %v4689, 5
    %v4692 = vor.u32 %v4688, %v4691
    %v4693 = vrot.slane %v4692, 4
    %v4695 = vshll.u32 %v4618, 16
    %v4697 = vrot.slane %v4695, 5
    %v4698 = vsel %vm399, %v4693, %v4697
    %v4700 = vshrl.u32 %v4619, 16
    %v4702 = vrot.slane %v4700, 4
    %v4703 = vshll.u32 %v4619, 16
    %v4705 = vrot.slane %v4703, 5
    %v4706 = vor.u32 %v4702, %v4705
    %v4707 = vrot.slane %v4706, 4
    %v4709 = vshll.u32 %v4620, 16
    %v4711 = vrot.slane %v4709, 5
    %v4712 = vsel %vm399, %v4707, %v4711
    %v4714 = vshrl.u32 %v4621, 16
    %v4716 = vrot.slane %v4714, 4
    %v4717 = vshll.u32 %v4621, 16
    %v4719 = vrot.slane %v4717, 5
    %v4720 = vor.u32 %v4716, %v4719
    %v4721 = vrot.slane %v4720, 4
    %v4723 = vshll.u32 %v4622, 16
    %v4725 = vrot.slane %v4723, 5
    %v4726 = vsel %vm399, %v4721, %v4725
    %v4728 = vshrl.u32 %v4623, 16
    %v4730 = vrot.slane %v4728, 4
    %v4731 = vshll.u32 %v4623, 16
    %v4733 = vrot.slane %v4731, 5
    %v4734 = vor.u32 %v4730, %v4733
    %v4735 = vrot.slane %v4734, 4
    %v4737 = vshll.u32 %v4624, 16
    %v4739 = vrot.slane %v4737, 5
    %v4740 = vsel %vm399, %v4735, %v4739
    %v4742 = vshrl.u32 %v4625, 16
    %v4744 = vrot.slane %v4742, 4
    %v4745 = vshll.u32 %v4625, 16
    %v4747 = vrot.slane %v4745, 5
    %v4748 = vor.u32 %v4744, %v4747
    %v4749 = vrot.slane %v4748, 4
    %v4751 = vshll.u32 %v4626, 16
    %v4753 = vrot.slane %v4751, 5
    %v4754 = vsel %vm399, %v4749, %v4753
    %v4756 = vshrl.u32 %v4627, 16
    %v4758 = vrot.slane %v4756, 4
    %v4759 = vshll.u32 %v4627, 16
    %v4761 = vrot.slane %v4759, 5
    %v4762 = vor.u32 %v4758, %v4761
    %v4763 = vrot.slane %v4762, 4
    %v4765 = vshll.u32 %v4628, 16
    %v4767 = vrot.slane %v4765, 5
    %v4768 = vsel %vm399, %v4763, %v4767
    %v4770 = vshrl.u32 %v4629, 16
    %v4772 = vrot.slane %v4770, 4
    %v4773 = vshll.u32 %v4629, 16
    %v4775 = vrot.slane %v4773, 5
    %v4776 = vor.u32 %v4772, %v4775
    %v4777 = vrot.slane %v4776, 4
    %v4779 = vshll.u32 %v4630, 16
    %v4781 = vrot.slane %v4779, 5
    %v4782 = vsel %vm399, %v4777, %v4781
    %v4784 = vshrl.u32 %v4631, 16
    %v4786 = vrot.slane %v4784, 4
    %v4787 = vshll.u32 %v4631, 16
    %v4789 = vrot.slane %v4787, 5
    %v4790 = vor.u32 %v4786, %v4789
    %v4791 = vrot.slane %v4790, 4
    %v4793 = vshll.u32 %v4632, 16
    %v4795 = vrot.slane %v4793, 5
    %v4796 = vsel %vm399, %v4791, %v4795
    %v4798 = vshrl.u32 %v4633, 16
    %v4800 = vrot.slane %v4798, 4
    %v4801 = vshll.u32 %v4633, 16
    %v4803 = vrot.slane %v4801, 5
    %v4804 = vor.u32 %v4800, %v4803
    %v4805 = vrot.slane %v4804, 4
    %v4807 = vshll.u32 %v4634, 16
    %v4809 = vrot.slane %v4807, 5
    %v4810 = vsel %vm399, %v4805, %v4809
    %v4812 = vshrl.u32 %v4635, 16
    %v4814 = vrot.slane %v4812, 4
    %v4815 = vshll.u32 %v4635, 16
    %v4817 = vrot.slane %v4815, 5
    %v4818 = vor.u32 %v4814, %v4817
    %v4819 = vrot.slane %v4818, 4
    %v4821 = vshll.u32 %v4636, 16
    %v4823 = vrot.slane %v4821, 5
    %v4824 = vsel %vm399, %v4819, %v4823
    %v4826 = vshrl.u32 %v4637, 16
    %v4828 = vrot.slane %v4826, 4
    %v4829 = vshll.u32 %v4637, 16
    %v4831 = vrot.slane %v4829, 5
    %v4832 = vor.u32 %v4828, %v4831
    %v4833 = vrot.slane %v4832, 4
    %v4835 = vshll.u32 %v4638, 16
    %v4837 = vrot.slane %v4835, 5
    %v4838 = vsel %vm399, %v4833, %v4837
    %v4840 = vshrl.u32 %v4639, 16
    %v4842 = vrot.slane %v4840, 4
    %v4843 = vshll.u32 %v4639, 16
    %v4845 = vrot.slane %v4843, 5
    %v4846 = vor.u32 %v4842, %v4845
    %v4847 = vrot.slane %v4846, 4
    %v4849 = vshll.u32 %v4640, 16
    %v4851 = vrot.slane %v4849, 5
    %v4852 = vsel %vm399, %v4847, %v4851
    %v4854 = vshrl.u32 %v4641, 16
    %v4856 = vrot.slane %v4854, 4
    %v4857 = vshll.u32 %v4641, 16
    %v4859 = vrot.slane %v4857, 5
    %v4860 = vor.u32 %v4856, %v4859
    %v4861 = vrot.slane %v4860, 4
    %v4863 = vshll.u32 %v4642, 16
    %v4865 = vrot.slane %v4863, 5
    %v4866 = vsel %vm399, %v4861, %v4865
    %s4867 = scalar_lea.vmem %s3, 448
    %v4868 = vld [vmem:[%s4867] sm:$0xf]
    %v4869 = vld [vmem:[%s4867 + $0x4] sm:$0xf]
    %v4870 = vld [vmem:[%s4867 + $0x8] sm:$0xf]
    %v4871 = vld [vmem:[%s4867 + $0xc] sm:$0xf]
    %v4872 = vld [vmem:[%s4867 + $0x10] sm:$0xf]
    %v4873 = vld [vmem:[%s4867 + $0x14] sm:$0xf]
    %v4874 = vld [vmem:[%s4867 + $0x18] sm:$0xf]
    %v4875 = vld [vmem:[%s4867 + $0x1c] sm:$0xf]
    %v4876 = vld [vmem:[%s4867 + $0x20] sm:$0xf]
    %v4877 = vld [vmem:[%s4867 + $0x24] sm:$0xf]
    %v4878 = vld [vmem:[%s4867 + $0x28] sm:$0xf]
    %v4879 = vld [vmem:[%s4867 + $0x2c] sm:$0xf]
    %v4880 = vld [vmem:[%s4867 + $0x30] sm:$0xf]
    %v4881 = vld [vmem:[%s4867 + $0x34] sm:$0xf]
    %v4882 = vld [vmem:[%s4867 + $0x38] sm:$0xf]
    %v4883 = vld [vmem:[%s4867 + $0x3c] sm:$0xf]
    %v4884 = vunpack.c.l.b16 %v4656
    %v4885 = vunpack.c.l.b16 %v4670
    %v4886 = vunpack.c.l.b16 %v4684
    %v4887 = vunpack.c.l.b16 %v4698
    %v4888 = vunpack.c.l.b16 %v4712
    %v4889 = vunpack.c.l.b16 %v4726
    %v4890 = vunpack.c.l.b16 %v4740
    %v4891 = vunpack.c.l.b16 %v4754
    %v4892 = vunpack.c.l.b16 %v4768
    %v4893 = vunpack.c.l.b16 %v4782
    %v4894 = vunpack.c.l.b16 %v4796
    %v4895 = vunpack.c.l.b16 %v4810
    %v4896 = vunpack.c.l.b16 %v4824
    %v4897 = vunpack.c.l.b16 %v4838
    %v4898 = vunpack.c.l.b16 %v4852
    %v4899 = vunpack.c.l.b16 %v4866
    %v4900 = vpack.c.b16 %v4885, %v4884
    %v4901 = vpack.c.b16 %v4887, %v4886
    %v4902 = vpack.c.b16 %v4889, %v4888
    %v4903 = vpack.c.b16 %v4891, %v4890
    %v4904 = vpack.c.b16 %v4893, %v4892
    %v4905 = vpack.c.b16 %v4895, %v4894
    %v4906 = vpack.c.b16 %v4897, %v4896
    %v4907 = vpack.c.b16 %v4899, %v4898
    %v4932 = vunpack.c.l.b16 %v4868
    %v4933 = vunpack.c.l.b16 %v4869
    %v4934 = vunpack.c.l.b16 %v4870
    %v4935 = vunpack.c.l.b16 %v4871
    %v4936 = vunpack.c.l.b16 %v4872
    %v4937 = vunpack.c.l.b16 %v4873
    %v4938 = vunpack.c.l.b16 %v4874
    %v4939 = vunpack.c.l.b16 %v4875
    %v4940 = vunpack.c.l.b16 %v4876
    %v4941 = vunpack.c.l.b16 %v4877
    %v4942 = vunpack.c.l.b16 %v4878
    %v4943 = vunpack.c.l.b16 %v4879
    %v4944 = vunpack.c.l.b16 %v4880
    %v4945 = vunpack.c.l.b16 %v4881
    %v4946 = vunpack.c.l.b16 %v4882
    %v4947 = vunpack.c.l.b16 %v4883
    %v4948 = vpack.c.b16 %v4933, %v4932
    %v4949 = vpack.c.b16 %v4935, %v4934
    %v4950 = vpack.c.b16 %v4937, %v4936
    %v4951 = vpack.c.b16 %v4939, %v4938
    %v4952 = vpack.c.b16 %v4941, %v4940
    %v4953 = vpack.c.b16 %v4943, %v4942
    %v4954 = vpack.c.b16 %v4945, %v4944
    %v4955 = vpack.c.b16 %v4947, %v4946
    %4964 = vmatpush.bf16.msra.mxu0 %v4955
    %4965 = vmatpush.bf16.msra.mxu0 %v4954
    %4966 = vmatpush.bf16.msra.mxu0 %v4953
    %4967 = vmatpush.bf16.msra.mxu0 %v4952
    %4968 = vmatpush.bf16.msra.mxu0 %v4951
    %4969 = vmatpush.bf16.msra.mxu0 %v4950
    %4970 = vmatpush.bf16.msra.mxu0 %v4949
    %4971 = vmatpush.bf16.msra.mxu0 %v4948
    %4972 = vmatmul.bf16.gmra.mxu0 %v4900
    %v4973 = vpop.f32.mrf.mxu0
    %v4974 = vadd.f32 0.0, %v4973
    %v4975 = vpop.f32.mrf.mxu0
    %v4976 = vadd.f32 0.0, %v4975
    %4977 = vmatmul.bf16.gmra.mxu0 %v4901
    %v4978 = vpop.f32.mrf.mxu0
    %v4979 = vadd.f32 0.0, %v4978
    %v4980 = vpop.f32.mrf.mxu0
    %v4981 = vadd.f32 0.0, %v4980
    %4982 = vmatmul.bf16.gmra.mxu0 %v4902
    %v4983 = vpop.f32.mrf.mxu0
    %v4984 = vadd.f32 0.0, %v4983
    %v4985 = vpop.f32.mrf.mxu0
    %v4986 = vadd.f32 0.0, %v4985
    %4987 = vmatmul.bf16.gmra.mxu0 %v4903
    %v4988 = vpop.f32.mrf.mxu0
    %v4989 = vadd.f32 0.0, %v4988
    %v4990 = vpop.f32.mrf.mxu0
    %v4991 = vadd.f32 0.0, %v4990
    %4992 = vmatmul.bf16.gmra.mxu0 %v4904
    %v4993 = vpop.f32.mrf.mxu0
    %v4994 = vadd.f32 0.0, %v4993
    %v4995 = vpop.f32.mrf.mxu0
    %v4996 = vadd.f32 0.0, %v4995
    %4997 = vmatmul.bf16.gmra.mxu0 %v4905
    %v4998 = vpop.f32.mrf.mxu0
    %v4999 = vadd.f32 0.0, %v4998
    %v5000 = vpop.f32.mrf.mxu0
    %v5001 = vadd.f32 0.0, %v5000
    %5002 = vmatmul.bf16.gmra.mxu0 %v4906
    %v5003 = vpop.f32.mrf.mxu0
    %v5004 = vadd.f32 0.0, %v5003
    %v5005 = vpop.f32.mrf.mxu0
    %v5006 = vadd.f32 0.0, %v5005
    %5007 = vmatmul.bf16.gmra.mxu0 %v4907
    %v5008 = vpop.f32.mrf.mxu0
    %v5009 = vadd.f32 0.0, %v5008
    %v5010 = vpop.f32.mrf.mxu0
    %v5011 = vadd.f32 0.0, %v5010
    %5012 = vdwg.mxu0
    %v5013 = vadd.f32 %v4595, %v4974
    %v5014 = vadd.f32 %v4596, %v4976
    %v5015 = vadd.f32 %v4597, %v4979
    %v5016 = vadd.f32 %v4598, %v4981
    %v5017 = vadd.f32 %v4599, %v4984
    %v5018 = vadd.f32 %v4600, %v4986
    %v5019 = vadd.f32 %v4601, %v4989
    %v5020 = vadd.f32 %v4602, %v4991
    %v5021 = vadd.f32 %v4603, %v4994
    %v5022 = vadd.f32 %v4604, %v4996
    %v5023 = vadd.f32 %v4605, %v4999
    %v5024 = vadd.f32 %v4606, %v5001
    %v5025 = vadd.f32 %v4607, %v5004
    %v5026 = vadd.f32 %v4608, %v5006
    %v5027 = vadd.f32 %v4609, %v5009
    %v5028 = vadd.f32 %v4610, %v5011
    %v5029 = vld [vmem:[%s4416] sm:$0xe]
    %v5030 = vld [vmem:[%s4416 + $0x8] sm:$0xe]
    %v5031 = vld [vmem:[%s4416 + $0x10] sm:$0xe]
    %v5032 = vld [vmem:[%s4416 + $0x18] sm:$0xe]
    %v5033 = vld [vmem:[%s4416 + $0x20] sm:$0xe]
    %v5034 = vld [vmem:[%s4416 + $0x28] sm:$0xe]
    %v5035 = vld [vmem:[%s4416 + $0x30] sm:$0xe]
    %v5036 = vld [vmem:[%s4416 + $0x38] sm:$0xe]
    %v5037 = vld [vmem:[%s4416 + $0x50] sm:$0xe]
    %v5038 = vld [vmem:[%s4416 + $0x58] sm:$0xe]
    %v5039 = vld [vmem:[%s4416 + $0x60] sm:$0xe]
    %v5040 = vld [vmem:[%s4416 + $0x68] sm:$0xe]
    %v5041 = vld [vmem:[%s4416 + $0x70] sm:$0xe]
    %v5042 = vld [vmem:[%s4416 + $0x78] sm:$0xe]
    %v5043 = vld [vmem:[%s4416 + $0x80] sm:$0xe]
    %v5044 = vld [vmem:[%s4416 + $0x88] sm:$0xe]
    %v5077 = vrot.slane %v5029, 5
    %v5078 = vrot.slane %v5077, 4
    %v5079 = vrot.slane %v4612, 5
    %v5080 = vsel %vm3303, %v5078, %v5079
    %v5081 = vrot.slane %v5030, 5
    %v5082 = vrot.slane %v5081, 4
    %v5083 = vrot.slane %v4614, 5
    %v5084 = vsel %vm3303, %v5082, %v5083
    %v5085 = vrot.slane %v5031, 5
    %v5086 = vrot.slane %v5085, 4
    %v5087 = vrot.slane %v4616, 5
    %v5088 = vsel %vm3303, %v5086, %v5087
    %v5089 = vrot.slane %v5032, 5
    %v5090 = vrot.slane %v5089, 4
    %v5091 = vrot.slane %v4618, 5
    %v5092 = vsel %vm3303, %v5090, %v5091
    %v5093 = vrot.slane %v5033, 5
    %v5094 = vrot.slane %v5093, 4
    %v5095 = vrot.slane %v4620, 5
    %v5096 = vsel %vm3303, %v5094, %v5095
    %v5097 = vrot.slane %v5034, 5
    %v5098 = vrot.slane %v5097, 4
    %v5099 = vrot.slane %v4622, 5
    %v5100 = vsel %vm3303, %v5098, %v5099
    %v5101 = vrot.slane %v5035, 5
    %v5102 = vrot.slane %v5101, 4
    %v5103 = vrot.slane %v4624, 5
    %v5104 = vsel %vm3303, %v5102, %v5103
    %v5105 = vrot.slane %v5036, 5
    %v5106 = vrot.slane %v5105, 4
    %v5107 = vrot.slane %v4626, 5
    %v5108 = vsel %vm3303, %v5106, %v5107
    %v5109 = vrot.slane %v5037, 5
    %v5110 = vrot.slane %v5109, 4
    %v5111 = vrot.slane %v4628, 5
    %v5112 = vsel %vm3303, %v5110, %v5111
    %v5113 = vrot.slane %v5038, 5
    %v5114 = vrot.slane %v5113, 4
    %v5115 = vrot.slane %v4630, 5
    %v5116 = vsel %vm3303, %v5114, %v5115
    %v5117 = vrot.slane %v5039, 5
    %v5118 = vrot.slane %v5117, 4
    %v5119 = vrot.slane %v4632, 5
    %v5120 = vsel %vm3303, %v5118, %v5119
    %v5121 = vrot.slane %v5040, 5
    %v5122 = vrot.slane %v5121, 4
    %v5123 = vrot.slane %v4634, 5
    %v5124 = vsel %vm3303, %v5122, %v5123
    %v5125 = vrot.slane %v5041, 5
    %v5126 = vrot.slane %v5125, 4
    %v5127 = vrot.slane %v4636, 5
    %v5128 = vsel %vm3303, %v5126, %v5127
    %v5129 = vrot.slane %v5042, 5
    %v5130 = vrot.slane %v5129, 4
    %v5131 = vrot.slane %v4638, 5
    %v5132 = vsel %vm3303, %v5130, %v5131
    %v5133 = vrot.slane %v5043, 5
    %v5134 = vrot.slane %v5133, 4
    %v5135 = vrot.slane %v4640, 5
    %v5136 = vsel %vm3303, %v5134, %v5135
    %v5137 = vrot.slane %v5044, 5
    %v5138 = vrot.slane %v5137, 4
    %v5139 = vrot.slane %v4642, 5
    %v5140 = vsel %vm3303, %v5138, %v5139
    %s5141 = scalar_lea.vmem %s3, 512
    %v5142 = vld [vmem:[%s5141] sm:$0xf]
    %v5143 = vld [vmem:[%s5141 + $0x4] sm:$0xf]
    %v5144 = vld [vmem:[%s5141 + $0x8] sm:$0xf]
    %v5145 = vld [vmem:[%s5141 + $0xc] sm:$0xf]
    %v5146 = vld [vmem:[%s5141 + $0x10] sm:$0xf]
    %v5147 = vld [vmem:[%s5141 + $0x14] sm:$0xf]
    %v5148 = vld [vmem:[%s5141 + $0x18] sm:$0xf]
    %v5149 = vld [vmem:[%s5141 + $0x1c] sm:$0xf]
    %v5150 = vld [vmem:[%s5141 + $0x20] sm:$0xf]
    %v5151 = vld [vmem:[%s5141 + $0x24] sm:$0xf]
    %v5152 = vld [vmem:[%s5141 + $0x28] sm:$0xf]
    %v5153 = vld [vmem:[%s5141 + $0x2c] sm:$0xf]
    %v5154 = vld [vmem:[%s5141 + $0x30] sm:$0xf]
    %v5155 = vld [vmem:[%s5141 + $0x34] sm:$0xf]
    %v5156 = vld [vmem:[%s5141 + $0x38] sm:$0xf]
    %v5157 = vld [vmem:[%s5141 + $0x3c] sm:$0xf]
    %v5158 = vunpack.c.l.b16 %v5080
    %v5159 = vunpack.c.l.b16 %v5084
    %v5160 = vunpack.c.l.b16 %v5088
    %v5161 = vunpack.c.l.b16 %v5092
    %v5162 = vunpack.c.l.b16 %v5096
    %v5163 = vunpack.c.l.b16 %v5100
    %v5164 = vunpack.c.l.b16 %v5104
    %v5165 = vunpack.c.l.b16 %v5108
    %v5166 = vunpack.c.l.b16 %v5112
    %v5167 = vunpack.c.l.b16 %v5116
    %v5168 = vunpack.c.l.b16 %v5120
    %v5169 = vunpack.c.l.b16 %v5124
    %v5170 = vunpack.c.l.b16 %v5128
    %v5171 = vunpack.c.l.b16 %v5132
    %v5172 = vunpack.c.l.b16 %v5136
    %v5173 = vunpack.c.l.b16 %v5140
    %v5174 = vpack.c.b16 %v5159, %v5158
    %v5175 = vpack.c.b16 %v5161, %v5160
    %v5176 = vpack.c.b16 %v5163, %v5162
    %v5177 = vpack.c.b16 %v5165, %v5164
    %v5178 = vpack.c.b16 %v5167, %v5166
    %v5179 = vpack.c.b16 %v5169, %v5168
    %v5180 = vpack.c.b16 %v5171, %v5170
    %v5181 = vpack.c.b16 %v5173, %v5172
    %v5206 = vunpack.c.l.b16 %v5142
    %v5207 = vunpack.c.l.b16 %v5143
    %v5208 = vunpack.c.l.b16 %v5144
    %v5209 = vunpack.c.l.b16 %v5145
    %v5210 = vunpack.c.l.b16 %v5146
    %v5211 = vunpack.c.l.b16 %v5147
    %v5212 = vunpack.c.l.b16 %v5148
    %v5213 = vunpack.c.l.b16 %v5149
    %v5214 = vunpack.c.l.b16 %v5150
    %v5215 = vunpack.c.l.b16 %v5151
    %v5216 = vunpack.c.l.b16 %v5152
    %v5217 = vunpack.c.l.b16 %v5153
    %v5218 = vunpack.c.l.b16 %v5154
    %v5219 = vunpack.c.l.b16 %v5155
    %v5220 = vunpack.c.l.b16 %v5156
    %v5221 = vunpack.c.l.b16 %v5157
    %v5222 = vpack.c.b16 %v5207, %v5206
    %v5223 = vpack.c.b16 %v5209, %v5208
    %v5224 = vpack.c.b16 %v5211, %v5210
    %v5225 = vpack.c.b16 %v5213, %v5212
    %v5226 = vpack.c.b16 %v5215, %v5214
    %v5227 = vpack.c.b16 %v5217, %v5216
    %v5228 = vpack.c.b16 %v5219, %v5218
    %v5229 = vpack.c.b16 %v5221, %v5220
    %5238 = vmatpush.bf16.msra.mxu0 %v5229
    %5239 = vmatpush.bf16.msra.mxu0 %v5228
    %5240 = vmatpush.bf16.msra.mxu0 %v5227
    %5241 = vmatpush.bf16.msra.mxu0 %v5226
    %5242 = vmatpush.bf16.msra.mxu0 %v5225
    %5243 = vmatpush.bf16.msra.mxu0 %v5224
    %5244 = vmatpush.bf16.msra.mxu0 %v5223
    %5245 = vmatpush.bf16.msra.mxu0 %v5222
    %5246 = vmatmul.bf16.gmra.mxu0 %v5174
    %v5247 = vpop.f32.mrf.mxu0
    %v5248 = vadd.f32 0.0, %v5247
    %v5249 = vpop.f32.mrf.mxu0
    %v5250 = vadd.f32 0.0, %v5249
    %5251 = vmatmul.bf16.gmra.mxu0 %v5175
    %v5252 = vpop.f32.mrf.mxu0
    %v5253 = vadd.f32 0.0, %v5252
    %v5254 = vpop.f32.mrf.mxu0
    %v5255 = vadd.f32 0.0, %v5254
    %5256 = vmatmul.bf16.gmra.mxu0 %v5176
    %v5257 = vpop.f32.mrf.mxu0
    %v5258 = vadd.f32 0.0, %v5257
    %v5259 = vpop.f32.mrf.mxu0
    %v5260 = vadd.f32 0.0, %v5259
    %5261 = vmatmul.bf16.gmra.mxu0 %v5177
    %v5262 = vpop.f32.mrf.mxu0
    %v5263 = vadd.f32 0.0, %v5262
    %v5264 = vpop.f32.mrf.mxu0
    %v5265 = vadd.f32 0.0, %v5264
    %5266 = vmatmul.bf16.gmra.mxu0 %v5178
    %v5267 = vpop.f32.mrf.mxu0
    %v5268 = vadd.f32 0.0, %v5267
    %v5269 = vpop.f32.mrf.mxu0
    %v5270 = vadd.f32 0.0, %v5269
    %5271 = vmatmul.bf16.gmra.mxu0 %v5179
    %v5272 = vpop.f32.mrf.mxu0
    %v5273 = vadd.f32 0.0, %v5272
    %v5274 = vpop.f32.mrf.mxu0
    %v5275 = vadd.f32 0.0, %v5274
    %5276 = vmatmul.bf16.gmra.mxu0 %v5180
    %v5277 = vpop.f32.mrf.mxu0
    %v5278 = vadd.f32 0.0, %v5277
    %v5279 = vpop.f32.mrf.mxu0
    %v5280 = vadd.f32 0.0, %v5279
    %5281 = vmatmul.bf16.gmra.mxu0 %v5181
    %v5282 = vpop.f32.mrf.mxu0
    %v5283 = vadd.f32 0.0, %v5282
    %v5284 = vpop.f32.mrf.mxu0
    %v5285 = vadd.f32 0.0, %v5284
    %5286 = vdwg.mxu0
    %v5287 = vadd.f32 %v5013, %v5248
    %v5288 = vadd.f32 %v5014, %v5250
    %v5289 = vadd.f32 %v5015, %v5253
    %v5290 = vadd.f32 %v5016, %v5255
    %v5291 = vadd.f32 %v5017, %v5258
    %v5292 = vadd.f32 %v5018, %v5260
    %v5293 = vadd.f32 %v5019, %v5263
    %v5294 = vadd.f32 %v5020, %v5265
    %v5295 = vadd.f32 %v5021, %v5268
    %v5296 = vadd.f32 %v5022, %v5270
    %v5297 = vadd.f32 %v5023, %v5273
    %v5298 = vadd.f32 %v5024, %v5275
    %v5299 = vadd.f32 %v5025, %v5278
    %v5300 = vadd.f32 %v5026, %v5280
    %v5301 = vadd.f32 %v5027, %v5283
    %v5302 = vadd.f32 %v5028, %v5285
    %v5303 = vld [vmem:[%s4] sm:$0x1]
    %v5305 = vperm.slane %v5303, 0
    %v5307 = vadd.f32 %v5287, %v5305
    %v5308 = vadd.f32 %v5288, %v5305
    %v5309 = vadd.f32 %v5289, %v5305
    %v5310 = vadd.f32 %v5290, %v5305
    %v5311 = vadd.f32 %v5291, %v5305
    %v5312 = vadd.f32 %v5292, %v5305
    %v5313 = vadd.f32 %v5293, %v5305
    %v5314 = vadd.f32 %v5294, %v5305
    %v5315 = vadd.f32 %v5295, %v5305
    %v5316 = vadd.f32 %v5296, %v5305
    %v5317 = vadd.f32 %v5297, %v5305
    %v5318 = vadd.f32 %v5298, %v5305
    %v5319 = vadd.f32 %v5299, %v5305
    %v5320 = vadd.f32 %v5300, %v5305
    %v5321 = vadd.f32 %v5301, %v5305
    %v5322 = vadd.f32 %v5302, %v5305
    %v5323 = vmax.f32 %v5307, 0.0
    %v5324 = vmax.f32 %v5308, 0.0
    %v5325 = vmax.f32 %v5309, 0.0
    %v5326 = vmax.f32 %v5310, 0.0
    %v5327 = vmax.f32 %v5311, 0.0
    %v5328 = vmax.f32 %v5312, 0.0
    %v5329 = vmax.f32 %v5313, 0.0
    %v5330 = vmax.f32 %v5314, 0.0
    %v5331 = vmax.f32 %v5315, 0.0
    %v5332 = vmax.f32 %v5316, 0.0
    %v5333 = vmax.f32 %v5317, 0.0
    %v5334 = vmax.f32 %v5318, 0.0
    %v5335 = vmax.f32 %v5319, 0.0
    %v5336 = vmax.f32 %v5320, 0.0
    %v5337 = vmax.f32 %v5321, 0.0
    %v5338 = vmax.f32 %v5322, 0.0
    %v5339 = vpack.c.bf16 %v5323, %v5323
    %v5340 = vpack.c.bf16 %v5324, %v5324
    %v5341 = vpack.c.bf16 %v5325, %v5325
    %v5342 = vpack.c.bf16 %v5326, %v5326
    %v5343 = vpack.c.bf16 %v5327, %v5327
    %v5344 = vpack.c.bf16 %v5328, %v5328
    %v5345 = vpack.c.bf16 %v5329, %v5329
    %v5346 = vpack.c.bf16 %v5330, %v5330
    %v5347 = vpack.c.bf16 %v5331, %v5331
    %v5348 = vpack.c.bf16 %v5332, %v5332
    %v5349 = vpack.c.bf16 %v5333, %v5333
    %v5350 = vpack.c.bf16 %v5334, %v5334
    %v5351 = vpack.c.bf16 %v5335, %v5335
    %v5352 = vpack.c.bf16 %v5336, %v5336
    %v5353 = vpack.c.bf16 %v5337, %v5337
    %v5354 = vpack.c.bf16 %v5338, %v5338
    %5355 = vst [vmem:[#allocation3] sm:$0xf] %v5339
    %5356 = vst [vmem:[#allocation3 + $0x4] sm:$0xf] %v5340
    %5357 = vst [vmem:[#allocation3 + $0x8] sm:$0xf] %v5341
    %5358 = vst [vmem:[#allocation3 + $0xc] sm:$0xf] %v5342
    %5359 = vst [vmem:[#allocation3 + $0x10] sm:$0xf] %v5343
    %5360 = vst [vmem:[#allocation3 + $0x14] sm:$0xf] %v5344
    %5361 = vst [vmem:[#allocation3 + $0x18] sm:$0xf] %v5345
    %5362 = vst [vmem:[#allocation3 + $0x1c] sm:$0xf] %v5346
    %5363 = vst [vmem:[#allocation3 + $0x20] sm:$0xf] %v5347
    %5364 = vst [vmem:[#allocation3 + $0x24] sm:$0xf] %v5348
    %5365 = vst [vmem:[#allocation3 + $0x28] sm:$0xf] %v5349
    %5366 = vst [vmem:[#allocation3 + $0x2c] sm:$0xf] %v5350
    %5367 = vst [vmem:[#allocation3 + $0x30] sm:$0xf] %v5351
    %5368 = vst [vmem:[#allocation3 + $0x34] sm:$0xf] %v5352
    %5369 = vst [vmem:[#allocation3 + $0x38] sm:$0xf] %v5353
    %5370 = vst [vmem:[#allocation3 + $0x3c] sm:$0xf] %v5354
    // Predicated region
    $region34: #{tpu_custom_call.1} parent=1 // pred_check
      _
    $region35: #{tpu_custom_call.1} parent=1 // pred_check_branch
      %5372 = sbr.rel (0) target = $region37
    $region36: #{tpu_custom_call.1} parent=1 // pred_region
      %5374 = vsyncadd [#allocation4], 0
      %s5375 = sshll.u32 [#allocation3], 4
      %s5376 = int_to_ptr.vmem [resolvable:$true] %s5375
      %s5377 = sshll.u32 %s7, 4
      %s5378 = int_to_ptr.hbm [resolvable:$true] %s5377
      %5383 = dma.vmem_to_hbm [thread:$0]  %s5376, 1024, %s5378, [#allocation4], 64, 64, 4
    $region37: #{tpu_custom_call.1} parent=1 // pred_fallthru
      _
    // Predicated region
    $region38: #{tpu_custom_call.1} parent=1 // pred_check
      _
    $region39: #{tpu_custom_call.1} parent=1 // pred_check_branch
      %5385 = sbr.rel (0) target = $region41
    $region40: #{tpu_custom_call.1} parent=1 // pred_region
      %5387 = dma.done [#allocation4], 1024
    $region41: #{tpu_custom_call.1} parent=1 // pred_fallthru
      _
    %5388 = vsyncpa [#allocation4], 1

</llo_original>
